<compile_context>
chip_gen: v6e
topology: v6e:2x2x1
jax: 0.10.0
libtpu: 0.0.40
codegen_flags: <defaults>
</compile_context>

<pallas_src>
import functools
import math

import jax
import jax.numpy as jnp
from jax.experimental import pallas as pl
from jax.experimental.pallas import tpu as pltpu


# ---------------------------------------------------------------------------
# Per-generation VMEM budget (leave headroom for compiler-internal scratch).
# ---------------------------------------------------------------------------
@functools.lru_cache(maxsize=None)
def _vmem_limit_bytes():
    cap = 64 * 1024 * 1024
    try:
        info = pltpu.get_tpu_info()
        cap = int(getattr(info, "vmem_capacity_bytes", cap))
    except Exception:
        pass
    # ~5/8 of physical: ~40 MiB on v7x (64 MiB), ~80 MiB on v5e/v6e (128 MiB)
    return max(int(cap * 5 // 8), 32 * 1024 * 1024)


def _tile_and_pad(n, target):
    """Return (tile, padded_n): full-extent block if n <= target (always legal),
    otherwise an aligned `target`-sized tile with n padded up to a multiple."""
    if n <= target:
        return n, n
    return target, ((n + target - 1) // target) * target


# ---------------------------------------------------------------------------
# K-tiled matmul kernel (used for the fused QKV projection and the out-proj).
# bf16 operands into the MXU, f32 accumulation in a VMEM scratch.
# ---------------------------------------------------------------------------
def _matmul_kernel(a_ref, b_ref, o_ref, acc_ref):
    @pl.when(pl.program_id(2) == 0)
    def _init():
        acc_ref[...] = jnp.zeros_like(acc_ref)

    acc_ref[...] += jnp.dot(a_ref[...], b_ref[...],
                            preferred_element_type=jnp.float32)

    @pl.when(pl.program_id(2) == pl.num_programs(2) - 1)
    def _store():
        o_ref[...] = acc_ref[...].astype(o_ref.dtype)


def _matmul(a, b, *, out_dtype=None, tm_target=512, tn_target=512,
            tk_target=512):
    M, K = a.shape
    K2, N = b.shape
    assert K == K2
    out_dtype = out_dtype if out_dtype is not None else a.dtype

    tm, Mp = _tile_and_pad(M, tm_target)
    tn, Np = _tile_and_pad(N, tn_target)
    tk, Kp = _tile_and_pad(K, tk_target)
    if (Mp, Kp) != (M, K):
        a = jnp.pad(a, ((0, Mp - M), (0, Kp - K)))
    if (Kp, Np) != (K, N):
        b = jnp.pad(b, ((0, Kp - K), (0, Np - N)))

    out = pl.pallas_call(
        _matmul_kernel,
        out_shape=jax.ShapeDtypeStruct((Mp, Np), out_dtype),
        grid=(Mp // tm, Np // tn, Kp // tk),
        in_specs=[
            pl.BlockSpec((tm, tk), lambda i, j, k: (i, k)),
            pl.BlockSpec((tk, tn), lambda i, j, k: (k, j)),
        ],
        out_specs=pl.BlockSpec((tm, tn), lambda i, j, k: (i, j)),
        scratch_shapes=[pltpu.VMEM((tm, tn), jnp.float32)],
        compiler_params=pltpu.CompilerParams(
            dimension_semantics=("parallel", "parallel", "arbitrary"),
            vmem_limit_bytes=_vmem_limit_bytes(),
        ),
    )(a, b)
    if (Mp, Np) != (M, N):
        out = out[:M, :N]
    return out


# ---------------------------------------------------------------------------
# Causal flash-attention kernel.
#   grid = (B, q_blocks, kv_blocks), block_q == block_kv == block.
#   q/k/v are read straight out of the packed (B, T, 3, H, Dh) qkv tensor.
#   kv blocks strictly in the causal future are skipped (no compute) and,
#   thanks to the clamped index maps, issue no new K/V DMA either.
# ---------------------------------------------------------------------------
def _attn_kernel(q_ref, k_ref, v_ref, o_ref, m_sc, l_sc, acc_sc, *, n_heads):
    # q_ref/k_ref/v_ref: (block, H, Dh)   o_ref: (block, H*Dh)
    # m_sc/l_sc: (H, block, 1) f32        acc_sc: (H, block, Dh) f32
    qi = pl.program_id(1)
    ki = pl.program_id(2)
    block = q_ref.shape[0]
    dh = q_ref.shape[2]

    @pl.when(ki == 0)
    def _init():
        m_sc[...] = jnp.full_like(m_sc, -jnp.inf)
        l_sc[...] = jnp.zeros_like(l_sc)
        acc_sc[...] = jnp.zeros_like(acc_sc)

    def _process(masked):
        # Static unroll over heads -> plain 2-D MXU matmuls per head.
        for h in range(n_heads):
            q = q_ref[:, h, :]                       # (block, Dh)
            k = k_ref[:, h, :]                       # (block, Dh)
            v = v_ref[:, h, :]                       # (block, Dh)
            # q @ k^T; scale is already folded into Wq, f32 accumulation.
            s = jax.lax.dot_general(
                q, k, (((1,), (1,)), ((), ())),
                preferred_element_type=jnp.float32)  # (block, block)
            if masked:
                # diagonal block only: local causal mask (row/col offsets equal)
                row = jax.lax.broadcasted_iota(jnp.int32, (block, block), 0)
                col = jax.lax.broadcasted_iota(jnp.int32, (block, block), 1)
                s = jnp.where(col <= row, s, -jnp.inf)
            m_prev = m_sc[h]                         # (block, 1)
            m_new = jnp.maximum(m_prev, s.max(axis=-1, keepdims=True))
            alpha = jnp.exp(m_prev - m_new)
            p = jnp.exp(s - m_new)
            l_sc[h] = alpha * l_sc[h] + p.sum(axis=-1, keepdims=True)
            acc_sc[h] = alpha * acc_sc[h] + jnp.dot(
                p.astype(v.dtype), v, preferred_element_type=jnp.float32)
            m_sc[h] = m_new

    # Strictly-past kv blocks: fully unmasked fast path (no mask VPU work).
    @pl.when(ki < qi)
    def _interior():
        _process(masked=False)

    # Diagonal block: apply the causal mask, then normalize and write out.
    # Blocks with ki > qi are fully masked: no compute, no new DMA (clamped
    # index map keeps the diagonal K/V block resident).
    @pl.when(ki == qi)
    def _diag_and_finalize():
        _process(masked=True)
        inv_l = pl.reciprocal(l_sc[...], approx=True)   # (H, block, 1)
        o_norm = acc_sc[...] * inv_l                    # (H, block, Dh)
        for h in range(n_heads):
            o_ref[:, h * dh:(h + 1) * dh] = o_norm[h].astype(o_ref.dtype)


def _causal_attention(qkv, *, n_heads, block_target=256):
    """qkv: (B, T, 3, H, Dh) packed [q|k|v]; returns (B, T, H*Dh)."""
    B, T, _, H, Dh = qkv.shape
    D = H * Dh
    block, T_pad = _tile_and_pad(T, block_target)
    if T_pad != T:
        # zero padding: padded keys fall in the causal future of every real
        # query row, so the causal mask removes them automatically.
        qkv = jnp.pad(qkv, ((0, 0), (0, T_pad - T), (0, 0), (0, 0), (0, 0)))
    n_blk = T_pad // block

    q_spec = pl.BlockSpec((None, block, None, H, Dh),
                          lambda b, qi, ki: (b, qi, 0, 0, 0))
    # Clamp the kv block index so fully-future (masked) blocks map to the
    # already-resident diagonal block -> Pallas issues no new copy for them.
    k_spec = pl.BlockSpec((None, block, None, H, Dh),
                          lambda b, qi, ki: (b, jnp.minimum(ki, qi), 1, 0, 0))
    v_spec = pl.BlockSpec((None, block, None, H, Dh),
                          lambda b, qi, ki: (b, jnp.minimum(ki, qi), 2, 0, 0))
    # Lane-dense output: full D = H*Dh along the last (lane) dim.
    o_spec = pl.BlockSpec((None, block, D), lambda b, qi, ki: (b, qi, 0))

    out = pl.pallas_call(
        functools.partial(_attn_kernel, n_heads=H),
        out_shape=jax.ShapeDtypeStruct((B, T_pad, D), qkv.dtype),
        grid=(B, n_blk, n_blk),
        in_specs=[q_spec, k_spec, v_spec],
        out_specs=o_spec,
        scratch_shapes=[
            pltpu.VMEM((H, block, 1), jnp.float32),    # running max
            pltpu.VMEM((H, block, 1), jnp.float32),    # running denominator
            pltpu.VMEM((H, block, Dh), jnp.float32),   # output accumulator
        ],
        compiler_params=pltpu.CompilerParams(
            dimension_semantics=("parallel", "parallel", "arbitrary"),
            vmem_limit_bytes=_vmem_limit_bytes(),
        ),
    )(qkv, qkv, qkv)
    if T_pad != T:
        out = out[:, :T]
    return out


def self_attention_pallas(x, w_in, w_out, n_heads, compute_dtype=jnp.bfloat16):
    """y = out_proj(causal_MHA(x, x, x));  bias=False, dropout p=0.0 (identity).

    x:     (B, T, d_model)
    w_in:  (d_model, 3*d_model)  == torch in_proj_weight.T (packed [Wq|Wk|Wv])
    w_out: (d_model, d_model)    == torch out_proj.weight.T
    """
    B, T, D = x.shape
    H = n_heads
    assert D % H == 0, "d_model must be divisible by n_heads"
    Dh = D // H

    # Fold the 1/sqrt(Dh) attention scale into the Wq columns (one-off,
    # weight-sized) so the attention kernel does no per-score scaling.
    scale = 1.0 / math.sqrt(Dh)
    col_scale = jnp.concatenate(
        [jnp.full((D,), scale, w_in.dtype), jnp.ones((2 * D,), w_in.dtype)])
    w_in_c = (w_in * col_scale[None, :]).astype(compute_dtype)
    w_out_c = w_out.astype(compute_dtype)
    x_c = x.astype(compute_dtype)

    # 1) fused QKV in-projection (bias-free); bf16 MXU operands, f32 accumulate
    qkv = _matmul(x_c.reshape(B * T, D), w_in_c, out_dtype=compute_dtype)

    # 2+3) causal flash attention; head split/merge lives in the BlockSpecs
    #      (the reshapes below are free layout views, no HBM transpose pass).
    qkv = qkv.reshape(B, T, 3, H, Dh)
    o = _causal_attention(qkv, n_heads=H)              # (B, T, D)

    # 4) output projection (bias-free); result back in the input dtype
    y = _matmul(o.reshape(B * T, D), w_out_c, out_dtype=x.dtype)

    # residual dropout p=0.0 -> identity
    # TODO(synk): dropout with p>0 would need pltpu.prng_* inside the kernels.
    return y.reshape(B, T, D)


def self_attention_reference(x, w_in, w_out, n_heads):
    """Pure-JAX f32 reference matching torch nn.MultiheadAttention(bias=False, causal)."""
    B, T, D = x.shape
    H = n_heads
    Dh = D // H
    hp = jax.lax.Precision.HIGHEST
    qkv = jnp.einsum("btd,de->bte", x, w_in, precision=hp)
    q, k, v = jnp.split(qkv, 3, axis=-1)
    split = lambda t: t.reshape(B, T, H, Dh).transpose(0, 2, 1, 3)
    q, k, v = split(q), split(k), split(v)
    s = jnp.einsum("bhqd,bhkd->bhqk", q, k, precision=hp) / math.sqrt(Dh)
    mask = jnp.tril(jnp.ones((T, T), dtype=bool))
    s = jnp.where(mask[None, None], s, -jnp.inf)
    p = jax.nn.softmax(s, axis=-1)
    o = jnp.einsum("bhqk,bhkd->bhqd", p, v, precision=hp)
    o = o.transpose(0, 2, 1, 3).reshape(B, T, D)
    return jnp.einsum("btd,de->bte", o, w_out, precision=hp)


if __name__ == "__main__":
    B, T, d_model, n_heads = 2, 8, 32, 4

    key = jax.random.PRNGKey(0)
    kx, kin, kout = jax.random.split(key, 3)

    x = jax.random.normal(kx, (B, T, d_model), dtype=jnp.float32)
    bound = 1.0 / math.sqrt(d_model)
    w_in = jax.random.uniform(kin, (d_model, 3 * d_model), dtype=jnp.float32,
                              minval=-bound, maxval=bound)
    w_out = jax.random.uniform(kout, (d_model, d_model), dtype=jnp.float32,
                               minval=-bound, maxval=bound)

    fwd = jax.jit(functools.partial(self_attention_pallas, n_heads=n_heads))
    out = fwd(x, w_in, w_out)
    out = jax.block_until_ready(out)

    ref = self_attention_reference(x, w_in, w_out, n_heads)
    assert out.shape == (B, T, d_model)
    err = float(jnp.max(jnp.abs(out.astype(jnp.float32) - ref)))
    # bf16 MXU operands (f32 accumulation) -> tolerance covers bf16 rounding.
    assert err < 5e-2, f"mismatch vs reference, max abs err={err}"

    print("KERNEL_OK")
</pallas_src>

<mosaic_0001>
module attributes {stable_mosaic.version = 11 : i64} {
  func.func @_matmul_kernel(%arg0: i32, %arg1: i32, %arg2: i32, %arg3: memref<16x32xbf16, #tpu.memory_space<vmem>>, %arg4: memref<32x96xbf16, #tpu.memory_space<vmem>>, %arg5: memref<16x96xbf16, #tpu.memory_space<vmem>>, %arg6: memref<16x96xf32, #tpu.memory_space<vmem>>) attributes {dimension_semantics = [#tpu.dimension_semantics<parallel>, #tpu.dimension_semantics<parallel>, #tpu.dimension_semantics<arbitrary>], iteration_bounds = array<i64: 1, 1, 1>, scalar_prefetch = 0 : i64, scratch_operands = 1 : i64, tpu.core_type = #tpu.core_type<tc>, window_params = [{transform_indices = @transform_0, window_bounds = array<i64: 16, 32>}, {transform_indices = @transform_1, window_bounds = array<i64: 32, 96>}, {transform_indices = @transform_2, window_bounds = array<i64: 16, 96>}]} {
    %c0_i32 = arith.constant 0 : i32
    %0 = arith.cmpi eq, %arg2, %c0_i32 : i32
    %1 = arith.extui %0 : i1 to i32
    %c0_i32_0 = arith.constant 0 : i32
    %2 = arith.cmpi ne, %1, %c0_i32_0 : i32
    scf.if %2 {
      %cst_10 = arith.constant 0.000000e+00 : f32
      %12 = vector.broadcast %cst_10 : f32 to vector<16x96xf32>
      %c0_11 = arith.constant 0 : index
      %c0_12 = arith.constant 0 : index
      %13 = vector.load %arg6[%c0_11, %c0_12] : memref<16x96xf32, #tpu.memory_space<vmem>>, vector<16x96xf32>
      tpu.vector_store %arg6[%c0_11, %c0_12], %12 {strides = array<i32>} : memref<16x96xf32, #tpu.memory_space<vmem>>, vector<16x96xf32>,
    } else {
    }
    %c0 = arith.constant 0 : index
    %c0_1 = arith.constant 0 : index
    %3 = vector.load %arg6[%c0, %c0_1] : memref<16x96xf32, #tpu.memory_space<vmem>>, vector<16x96xf32>
    %c0_2 = arith.constant 0 : index
    %c0_3 = arith.constant 0 : index
    %4 = vector.load %arg3[%c0_2, %c0_3] : memref<16x32xbf16, #tpu.memory_space<vmem>>, vector<16x32xbf16>
    %c0_4 = arith.constant 0 : index
    %c0_5 = arith.constant 0 : index
    %5 = vector.load %arg4[%c0_4, %c0_5] : memref<32x96xbf16, #tpu.memory_space<vmem>>, vector<32x96xbf16>
    %cst = arith.constant dense<0.000000e+00> : vector<16x96xf32>
    %6 = tpu.matmul %4, %5, %cst {dimension_numbers = #tpu.dot_dimension_numbers<[1], [0], [0], [1], [0, 0, 1, 1], [], []>} : vector<16x32xbf16>, vector<32x96xbf16>, vector<16x96xf32> -> vector<16x96xf32>
    %7 = arith.addf %3, %6 : vector<16x96xf32>
    %c0_6 = arith.constant 0 : index
    %c0_7 = arith.constant 0 : index
    %8 = vector.load %arg6[%c0_6, %c0_7] : memref<16x96xf32, #tpu.memory_space<vmem>>, vector<16x96xf32>
    tpu.vector_store %arg6[%c0_6, %c0_7], %7 {strides = array<i32>} : memref<16x96xf32, #tpu.memory_space<vmem>>, vector<16x96xf32>,
    %c0_i32_8 = arith.constant 0 : i32
    %9 = arith.cmpi eq, %arg2, %c0_i32_8 : i32
    %10 = arith.extui %9 : i1 to i32
    %c0_i32_9 = arith.constant 0 : i32
    %11 = arith.cmpi ne, %10, %c0_i32_9 : i32
    scf.if %11 {
      %c0_10 = arith.constant 0 : index
      %c0_11 = arith.constant 0 : index
      %12 = vector.load %arg6[%c0_10, %c0_11] : memref<16x96xf32, #tpu.memory_space<vmem>>, vector<16x96xf32>
      %13 = arith.truncf %12 : vector<16x96xf32> to vector<16x96xbf16>
      %c0_12 = arith.constant 0 : index
      %c0_13 = arith.constant 0 : index
      %14 = vector.load %arg5[%c0_12, %c0_13] : memref<16x96xbf16, #tpu.memory_space<vmem>>, vector<16x96xbf16>
      tpu.vector_store %arg5[%c0_12, %c0_13], %13 {strides = array<i32>} : memref<16x96xbf16, #tpu.memory_space<vmem>>, vector<16x96xbf16>,
    } else {
    }
    return
  }
  func.func @transform_0(%arg0: i32, %arg1: i32, %arg2: i32) -> (i32, i32) {
    %c0_i32 = arith.constant 0 : i32
    return %arg0, %arg2 : i32, i32
  }
  func.func @transform_1(%arg0: i32, %arg1: i32, %arg2: i32) -> (i32, i32) {
    %c0_i32 = arith.constant 0 : i32
    return %arg2, %arg1 : i32, i32
  }
  func.func @transform_2(%arg0: i32, %arg1: i32, %arg2: i32) -> (i32, i32) {
    %c0_i32 = arith.constant 0 : i32
    return %arg0, %arg1 : i32, i32
  }
}

module attributes {stable_mosaic.version = 11 : i64} {
  func.func @_matmul_kernel(%arg0: i32, %arg1: i32, %arg2: i32, %arg3: memref<16x32xbf16, #tpu.memory_space<vmem>>, %arg4: memref<32x32xbf16, #tpu.memory_space<vmem>>, %arg5: memref<16x32xf32, #tpu.memory_space<vmem>>, %arg6: memref<16x32xf32, #tpu.memory_space<vmem>>) attributes {dimension_semantics = [#tpu.dimension_semantics<parallel>, #tpu.dimension_semantics<parallel>, #tpu.dimension_semantics<arbitrary>], iteration_bounds = array<i64: 1, 1, 1>, scalar_prefetch = 0 : i64, scratch_operands = 1 : i64, tpu.core_type = #tpu.core_type<tc>, window_params = [{transform_indices = @transform_0, window_bounds = array<i64: 16, 32>}, {transform_indices = @transform_1, window_bounds = array<i64: 32, 32>}, {transform_indices = @transform_2, window_bounds = array<i64: 16, 32>}]} {
    %c0_i32 = arith.constant 0 : i32
    %0 = arith.cmpi eq, %arg2, %c0_i32 : i32
    %1 = arith.extui %0 : i1 to i32
    %c0_i32_0 = arith.constant 0 : i32
    %2 = arith.cmpi ne, %1, %c0_i32_0 : i32
    scf.if %2 {
      %cst_10 = arith.constant 0.000000e+00 : f32
      %12 = vector.broadcast %cst_10 : f32 to vector<16x32xf32>
      %c0_11 = arith.constant 0 : index
      %c0_12 = arith.constant 0 : index
      %13 = vector.load %arg6[%c0_11, %c0_12] : memref<16x32xf32, #tpu.memory_space<vmem>>, vector<16x32xf32>
      tpu.vector_store %arg6[%c0_11, %c0_12], %12 {strides = array<i32>} : memref<16x32xf32, #tpu.memory_space<vmem>>, vector<16x32xf32>,
    } else {
    }
    %c0 = arith.constant 0 : index
    %c0_1 = arith.constant 0 : index
    %3 = vector.load %arg6[%c0, %c0_1] : memref<16x32xf32, #tpu.memory_space<vmem>>, vector<16x32xf32>
    %c0_2 = arith.constant 0 : index
    %c0_3 = arith.constant 0 : index
    %4 = vector.load %arg3[%c0_2, %c0_3] : memref<16x32xbf16, #tpu.memory_space<vmem>>, vector<16x32xbf16>
    %c0_4 = arith.constant 0 : index
    %c0_5 = arith.constant 0 : index
    %5 = vector.load %arg4[%c0_4, %c0_5] : memref<32x32xbf16, #tpu.memory_space<vmem>>, vector<32x32xbf16>
    %cst = arith.constant dense<0.000000e+00> : vector<16x32xf32>
    %6 = tpu.matmul %4, %5, %cst {dimension_numbers = #tpu.dot_dimension_numbers<[1], [0], [0], [1], [0, 0, 1, 1], [], []>} : vector<16x32xbf16>, vector<32x32xbf16>, vector<16x32xf32> -> vector<16x32xf32>
    %7 = arith.addf %3, %6 : vector<16x32xf32>
    %c0_6 = arith.constant 0 : index
    %c0_7 = arith.constant 0 : index
    %8 = vector.load %arg6[%c0_6, %c0_7] : memref<16x32xf32, #tpu.memory_space<vmem>>, vector<16x32xf32>
    tpu.vector_store %arg6[%c0_6, %c0_7], %7 {strides = array<i32>} : memref<16x32xf32, #tpu.memory_space<vmem>>, vector<16x32xf32>,
    %c0_i32_8 = arith.constant 0 : i32
    %9 = arith.cmpi eq, %arg2, %c0_i32_8 : i32
    %10 = arith.extui %9 : i1 to i32
    %c0_i32_9 = arith.constant 0 : i32
    %11 = arith.cmpi ne, %10, %c0_i32_9 : i32
    scf.if %11 {
      %c0_10 = arith.constant 0 : index
      %c0_11 = arith.constant 0 : index
      %12 = vector.load %arg6[%c0_10, %c0_11] : memref<16x32xf32, #tpu.memory_space<vmem>>, vector<16x32xf32>
      %c0_12 = arith.constant 0 : index
      %c0_13 = arith.constant 0 : index
      %13 = vector.load %arg5[%c0_12, %c0_13] : memref<16x32xf32, #tpu.memory_space<vmem>>, vector<16x32xf32>
      tpu.vector_store %arg5[%c0_12, %c0_13], %12 {strides = array<i32>} : memref<16x32xf32, #tpu.memory_space<vmem>>, vector<16x32xf32>,
    } else {
    }
    return
  }
  func.func @transform_0(%arg0: i32, %arg1: i32, %arg2: i32) -> (i32, i32) {
    %c0_i32 = arith.constant 0 : i32
    return %arg0, %arg2 : i32, i32
  }
  func.func @transform_1(%arg0: i32, %arg1: i32, %arg2: i32) -> (i32, i32) {
    %c0_i32 = arith.constant 0 : i32
    return %arg2, %arg1 : i32, i32
  }
  func.func @transform_2(%arg0: i32, %arg1: i32, %arg2: i32) -> (i32, i32) {
    %c0_i32 = arith.constant 0 : i32
    return %arg0, %arg1 : i32, i32
  }
}

module attributes {stable_mosaic.version = 11 : i64} {
  func.func @_attn_kernel(%arg0: i32, %arg1: i32, %arg2: i32, %arg3: memref<1x8x1x4x8xbf16, #tpu.memory_space<vmem>>, %arg4: memref<1x8x1x4x8xbf16, #tpu.memory_space<vmem>>, %arg5: memref<1x8x1x4x8xbf16, #tpu.memory_space<vmem>>, %arg6: memref<1x8x32xbf16, #tpu.memory_space<vmem>>, %arg7: memref<4x8x1xf32, #tpu.memory_space<vmem>>, %arg8: memref<4x8x1xf32, #tpu.memory_space<vmem>>, %arg9: memref<4x8x8xf32, #tpu.memory_space<vmem>>) attributes {dimension_semantics = [#tpu.dimension_semantics<parallel>, #tpu.dimension_semantics<parallel>, #tpu.dimension_semantics<arbitrary>], iteration_bounds = array<i64: 2, 1, 1>, scalar_prefetch = 0 : i64, scratch_operands = 3 : i64, tpu.core_type = #tpu.core_type<tc>, window_params = [{transform_indices = @transform_0, window_bounds = array<i64: 1, 8, 1, 4, 8>}, {transform_indices = @transform_1, window_bounds = array<i64: 1, 8, 1, 4, 8>}, {transform_indices = @transform_2, window_bounds = array<i64: 1, 8, 1, 4, 8>}, {transform_indices = @transform_3, window_bounds = array<i64: 1, 8, 32>}]} {
    %c0_i32 = arith.constant 0 : i32
    %0 = arith.cmpi eq, %arg2, %c0_i32 : i32
    %1 = arith.extui %0 : i1 to i32
    %c0_i32_0 = arith.constant 0 : i32
    %2 = arith.cmpi ne, %1, %c0_i32_0 : i32
    scf.if %2 {
      %cst = arith.constant 0xFF800000 : f32
      %9 = vector.broadcast %cst : f32 to vector<4x8x1xf32>
      %c0 = arith.constant 0 : index
      %c0_3 = arith.constant 0 : index
      %c0_4 = arith.constant 0 : index
      %10 = vector.load %arg7[%c0, %c0_3, %c0_4] : memref<4x8x1xf32, #tpu.memory_space<vmem>>, vector<4x8x1xf32>
      tpu.vector_store %arg7[%c0, %c0_3, %c0_4], %9 {strides = array<i32>} : memref<4x8x1xf32, #tpu.memory_space<vmem>>, vector<4x8x1xf32>,
      %cst_5 = arith.constant 0.000000e+00 : f32
      %11 = vector.broadcast %cst_5 : f32 to vector<4x8x1xf32>
      %c0_6 = arith.constant 0 : index
      %c0_7 = arith.constant 0 : index
      %c0_8 = arith.constant 0 : index
      %12 = vector.load %arg8[%c0_6, %c0_7, %c0_8] : memref<4x8x1xf32, #tpu.memory_space<vmem>>, vector<4x8x1xf32>
      tpu.vector_store %arg8[%c0_6, %c0_7, %c0_8], %11 {strides = array<i32>} : memref<4x8x1xf32, #tpu.memory_space<vmem>>, vector<4x8x1xf32>,
      %cst_9 = arith.constant 0.000000e+00 : f32
      %13 = vector.broadcast %cst_9 : f32 to vector<4x8x8xf32>
      %c0_10 = arith.constant 0 : index
      %c0_11 = arith.constant 0 : index
      %c0_12 = arith.constant 0 : index
      %14 = vector.load %arg9[%c0_10, %c0_11, %c0_12] : memref<4x8x8xf32, #tpu.memory_space<vmem>>, vector<4x8x8xf32>
      tpu.vector_store %arg9[%c0_10, %c0_11, %c0_12], %13 {strides = array<i32>} : memref<4x8x8xf32, #tpu.memory_space<vmem>>, vector<4x8x8xf32>,
    } else {
    }
    %3 = arith.cmpi slt, %arg2, %arg1 : i32
    %4 = arith.extui %3 : i1 to i32
    %c0_i32_1 = arith.constant 0 : i32
    %5 = arith.cmpi ne, %4, %c0_i32_1 : i32
    scf.if %5 {
      %c0 = arith.constant 0 : index
      %c0_3 = arith.constant 0 : index
      %c0_4 = arith.constant 0 : index
      %c0_5 = arith.constant 0 : index
      %c0_6 = arith.constant 0 : index
      %9 = vector.load %arg3[%c0, %c0_3, %c0_4, %c0_5, %c0_6] : memref<1x8x1x4x8xbf16, #tpu.memory_space<vmem>>, vector<1x8x1x1x8xbf16>
      %10 = vector.shape_cast %9 : vector<1x8x1x1x8xbf16> to vector<8x8xbf16>
      %c0_7 = arith.constant 0 : index
      %c0_8 = arith.constant 0 : index
      %c0_9 = arith.constant 0 : index
      %c0_10 = arith.constant 0 : index
      %c0_11 = arith.constant 0 : index
      %11 = vector.load %arg4[%c0_7, %c0_8, %c0_9, %c0_10, %c0_11] : memref<1x8x1x4x8xbf16, #tpu.memory_space<vmem>>, vector<1x8x1x1x8xbf16>
      %12 = vector.shape_cast %11 : vector<1x8x1x1x8xbf16> to vector<8x8xbf16>
      %c0_12 = arith.constant 0 : index
      %c0_13 = arith.constant 0 : index
      %c0_14 = arith.constant 0 : index
      %c0_15 = arith.constant 0 : index
      %c0_16 = arith.constant 0 : index
      %13 = vector.load %arg5[%c0_12, %c0_13, %c0_14, %c0_15, %c0_16] : memref<1x8x1x4x8xbf16, #tpu.memory_space<vmem>>, vector<1x8x1x1x8xbf16>
      %14 = vector.shape_cast %13 : vector<1x8x1x1x8xbf16> to vector<8x8xbf16>
      %cst = arith.constant dense<0.000000e+00> : vector<8x8xf32>
      %15 = tpu.matmul %10, %12, %cst {dimension_numbers = #tpu.dot_dimension_numbers<[1], [1], [0], [0], [0, 0, 1, 0], [], []>} : vector<8x8xbf16>, vector<8x8xbf16>, vector<8x8xf32> -> vector<8x8xf32>
      %c0_17 = arith.constant 0 : index
      %c0_18 = arith.constant 0 : index
      %c0_19 = arith.constant 0 : index
      %16 = vector.load %arg7[%c0_17, %c0_18, %c0_19] : memref<4x8x1xf32, #tpu.memory_space<vmem>>, vector<1x8x1xf32>
      %17 = vector.shape_cast %16 : vector<1x8x1xf32> to vector<8x1xf32>
      %cst_20 = arith.constant dense<0xFF800000> : vector<8xf32>
      %18 = vector.multi_reduction <maximumf>, %15, %cst_20 [1] : vector<8x8xf32> to vector<8xf32>
      %19 = vector.shape_cast %18 : vector<8xf32> to vector<8x1xf32>
      %20 = arith.maximumf %17, %19 : vector<8x1xf32>
      %21 = arith.subf %17, %20 : vector<8x1xf32>
      %22 = math.exp %21 : vector<8x1xf32>
      %23 = vector.broadcast %20 : vector<8x1xf32> to vector<8x8xf32>
      %24 = arith.subf %15, %23 : vector<8x8xf32>
      %25 = math.exp %24 : vector<8x8xf32>
      %c0_21 = arith.constant 0 : index
      %c0_22 = arith.constant 0 : index
      %c0_23 = arith.constant 0 : index
      %26 = vector.load %arg8[%c0_21, %c0_22, %c0_23] : memref<4x8x1xf32, #tpu.memory_space<vmem>>, vector<1x8x1xf32>
      %27 = vector.shape_cast %26 : vector<1x8x1xf32> to vector<8x1xf32>
      %28 = arith.mulf %22, %27 : vector<8x1xf32>
      %cst_24 = arith.constant dense<0.000000e+00> : vector<8xf32>
      %29 = vector.multi_reduction <add>, %25, %cst_24 [1] : vector<8x8xf32> to vector<8xf32>
      %30 = vector.shape_cast %29 : vector<8xf32> to vector<8x1xf32>
      %31 = arith.addf %28, %30 : vector<8x1xf32>
      %c0_25 = arith.constant 0 : index
      %c0_26 = arith.constant 0 : index
      %c0_27 = arith.constant 0 : index
      %32 = vector.load %arg8[%c0_25, %c0_26, %c0_27] : memref<4x8x1xf32, #tpu.memory_space<vmem>>, vector<1x8x1xf32>
      %33 = vector.shape_cast %32 : vector<1x8x1xf32> to vector<8x1xf32>
      %34 = vector.shape_cast %31 : vector<8x1xf32> to vector<1x8x1xf32>
      tpu.vector_store %arg8[%c0_25, %c0_26, %c0_27], %34 {strides = array<i32>} : memref<4x8x1xf32, #tpu.memory_space<vmem>>, vector<1x8x1xf32>,
      %c0_28 = arith.constant 0 : index
      %c0_29 = arith.constant 0 : index
      %c0_30 = arith.constant 0 : index
      %35 = vector.load %arg9[%c0_28, %c0_29, %c0_30] : memref<4x8x8xf32, #tpu.memory_space<vmem>>, vector<1x8x8xf32>
      %36 = vector.shape_cast %35 : vector<1x8x8xf32> to vector<8x8xf32>
      %37 = vector.broadcast %22 : vector<8x1xf32> to vector<8x8xf32>
      %38 = arith.mulf %37, %36 : vector<8x8xf32>
      %39 = arith.truncf %25 : vector<8x8xf32> to vector<8x8xbf16>
      %cst_31 = arith.constant dense<0.000000e+00> : vector<8x8xf32>
      %40 = tpu.matmul %39, %14, %cst_31 {dimension_numbers = #tpu.dot_dimension_numbers<[1], [0], [0], [1], [0, 0, 1, 1], [], []>} : vector<8x8xbf16>, vector<8x8xbf16>, vector<8x8xf32> -> vector<8x8xf32>
      %41 = arith.addf %38, %40 : vector<8x8xf32>
      %c0_32 = arith.constant 0 : index
      %c0_33 = arith.constant 0 : index
      %c0_34 = arith.constant 0 : index
      %42 = vector.load %arg9[%c0_32, %c0_33, %c0_34] : memref<4x8x8xf32, #tpu.memory_space<vmem>>, vector<1x8x8xf32>
      %43 = vector.shape_cast %42 : vector<1x8x8xf32> to vector<8x8xf32>
      %44 = vector.shape_cast %41 : vector<8x8xf32> to vector<1x8x8xf32>
      tpu.vector_store %arg9[%c0_32, %c0_33, %c0_34], %44 {strides = array<i32>} : memref<4x8x8xf32, #tpu.memory_space<vmem>>, vector<1x8x8xf32>,
      %c0_35 = arith.constant 0 : index
      %c0_36 = arith.constant 0 : index
      %c0_37 = arith.constant 0 : index
      %45 = vector.load %arg7[%c0_35, %c0_36, %c0_37] : memref<4x8x1xf32, #tpu.memory_space<vmem>>, vector<1x8x1xf32>
      %46 = vector.shape_cast %45 : vector<1x8x1xf32> to vector<8x1xf32>
      %47 = vector.shape_cast %20 : vector<8x1xf32> to vector<1x8x1xf32>
      tpu.vector_store %arg7[%c0_35, %c0_36, %c0_37], %47 {strides = array<i32>} : memref<4x8x1xf32, #tpu.memory_space<vmem>>, vector<1x8x1xf32>,
      %c0_38 = arith.constant 0 : index
      %c0_39 = arith.constant 0 : index
      %c0_40 = arith.constant 0 : index
      %c1 = arith.constant 1 : index
      %c0_41 = arith.constant 0 : index
      %48 = vector.load %arg3[%c0_38, %c0_39, %c0_40, %c1, %c0_41] : memref<1x8x1x4x8xbf16, #tpu.memory_space<vmem>>, vector<1x8x1x1x8xbf16>
      %49 = vector.shape_cast %48 : vector<1x8x1x1x8xbf16> to vector<8x8xbf16>
      %c0_42 = arith.constant 0 : index
      %c0_43 = arith.constant 0 : index
      %c0_44 = arith.constant 0 : index
      %c1_45 = arith.constant 1 : index
      %c0_46 = arith.constant 0 : index
      %50 = vector.load %arg4[%c0_42, %c0_43, %c0_44, %c1_45, %c0_46] : memref<1x8x1x4x8xbf16, #tpu.memory_space<vmem>>, vector<1x8x1x1x8xbf16>
      %51 = vector.shape_cast %50 : vector<1x8x1x1x8xbf16> to vector<8x8xbf16>
      %c0_47 = arith.constant 0 : index
      %c0_48 = arith.constant 0 : index
      %c0_49 = arith.constant 0 : index
      %c1_50 = arith.constant 1 : index
      %c0_51 = arith.constant 0 : index
      %52 = vector.load %arg5[%c0_47, %c0_48, %c0_49, %c1_50, %c0_51] : memref<1x8x1x4x8xbf16, #tpu.memory_space<vmem>>, vector<1x8x1x1x8xbf16>
      %53 = vector.shape_cast %52 : vector<1x8x1x1x8xbf16> to vector<8x8xbf16>
      %cst_52 = arith.constant dense<0.000000e+00> : vector<8x8xf32>
      %54 = tpu.matmul %49, %51, %cst_52 {dimension_numbers = #tpu.dot_dimension_numbers<[1], [1], [0], [0], [0, 0, 1, 0], [], []>} : vector<8x8xbf16>, vector<8x8xbf16>, vector<8x8xf32> -> vector<8x8xf32>
      %c1_53 = arith.constant 1 : index
      %c0_54 = arith.constant 0 : index
      %c0_55 = arith.constant 0 : index
      %55 = vector.load %arg7[%c1_53, %c0_54, %c0_55] : memref<4x8x1xf32, #tpu.memory_space<vmem>>, vector<1x8x1xf32>
      %56 = vector.shape_cast %55 : vector<1x8x1xf32> to vector<8x1xf32>
      %cst_56 = arith.constant dense<0xFF800000> : vector<8xf32>
      %57 = vector.multi_reduction <maximumf>, %54, %cst_56 [1] : vector<8x8xf32> to vector<8xf32>
      %58 = vector.shape_cast %57 : vector<8xf32> to vector<8x1xf32>
      %59 = arith.maximumf %56, %58 : vector<8x1xf32>
      %60 = arith.subf %56, %59 : vector<8x1xf32>
      %61 = math.exp %60 : vector<8x1xf32>
      %62 = vector.broadcast %59 : vector<8x1xf32> to vector<8x8xf32>
      %63 = arith.subf %54, %62 : vector<8x8xf32>
      %64 = math.exp %63 : vector<8x8xf32>
      %c1_57 = arith.constant 1 : index
      %c0_58 = arith.constant 0 : index
      %c0_59 = arith.constant 0 : index
      %65 = vector.load %arg8[%c1_57, %c0_58, %c0_59] : memref<4x8x1xf32, #tpu.memory_space<vmem>>, vector<1x8x1xf32>
      %66 = vector.shape_cast %65 : vector<1x8x1xf32> to vector<8x1xf32>
      %67 = arith.mulf %61, %66 : vector<8x1xf32>
      %cst_60 = arith.constant dense<0.000000e+00> : vector<8xf32>
      %68 = vector.multi_reduction <add>, %64, %cst_60 [1] : vector<8x8xf32> to vector<8xf32>
      %69 = vector.shape_cast %68 : vector<8xf32> to vector<8x1xf32>
      %70 = arith.addf %67, %69 : vector<8x1xf32>
      %c1_61 = arith.constant 1 : index
      %c0_62 = arith.constant 0 : index
      %c0_63 = arith.constant 0 : index
      %71 = vector.load %arg8[%c1_61, %c0_62, %c0_63] : memref<4x8x1xf32, #tpu.memory_space<vmem>>, vector<1x8x1xf32>
      %72 = vector.shape_cast %71 : vector<1x8x1xf32> to vector<8x1xf32>
      %73 = vector.shape_cast %70 : vector<8x1xf32> to vector<1x8x1xf32>
      tpu.vector_store %arg8[%c1_61, %c0_62, %c0_63], %73 {strides = array<i32>} : memref<4x8x1xf32, #tpu.memory_space<vmem>>, vector<1x8x1xf32>,
      %c1_64 = arith.constant 1 : index
      %c0_65 = arith.constant 0 : index
      %c0_66 = arith.constant 0 : index
      %74 = vector.load %arg9[%c1_64, %c0_65, %c0_66] : memref<4x8x8xf32, #tpu.memory_space<vmem>>, vector<1x8x8xf32>
      %75 = vector.shape_cast %74 : vector<1x8x8xf32> to vector<8x8xf32>
      %76 = vector.broadcast %61 : vector<8x1xf32> to vector<8x8xf32>
      %77 = arith.mulf %76, %75 : vector<8x8xf32>
      %78 = arith.truncf %64 : vector<8x8xf32> to vector<8x8xbf16>
      %cst_67 = arith.constant dense<0.000000e+00> : vector<8x8xf32>
      %79 = tpu.matmul %78, %53, %cst_67 {dimension_numbers = #tpu.dot_dimension_numbers<[1], [0], [0], [1], [0, 0, 1, 1], [], []>} : vector<8x8xbf16>, vector<8x8xbf16>, vector<8x8xf32> -> vector<8x8xf32>
      %80 = arith.addf %77, %79 : vector<8x8xf32>
      %c1_68 = arith.constant 1 : index
      %c0_69 = arith.constant 0 : index
      %c0_70 = arith.constant 0 : index
      %81 = vector.load %arg9[%c1_68, %c0_69, %c0_70] : memref<4x8x8xf32, #tpu.memory_space<vmem>>, vector<1x8x8xf32>
      %82 = vector.shape_cast %81 : vector<1x8x8xf32> to vector<8x8xf32>
      %83 = vector.shape_cast %80 : vector<8x8xf32> to vector<1x8x8xf32>
      tpu.vector_store %arg9[%c1_68, %c0_69, %c0_70], %83 {strides = array<i32>} : memref<4x8x8xf32, #tpu.memory_space<vmem>>, vector<1x8x8xf32>,
      %c1_71 = arith.constant 1 : index
      %c0_72 = arith.constant 0 : index
      %c0_73 = arith.constant 0 : index
      %84 = vector.load %arg7[%c1_71, %c0_72, %c0_73] : memref<4x8x1xf32, #tpu.memory_space<vmem>>, vector<1x8x1xf32>
      %85 = vector.shape_cast %84 : vector<1x8x1xf32> to vector<8x1xf32>
      %86 = vector.shape_cast %59 : vector<8x1xf32> to vector<1x8x1xf32>
      tpu.vector_store %arg7[%c1_71, %c0_72, %c0_73], %86 {strides = array<i32>} : memref<4x8x1xf32, #tpu.memory_space<vmem>>, vector<1x8x1xf32>,
      %c0_74 = arith.constant 0 : index
      %c0_75 = arith.constant 0 : index
      %c0_76 = arith.constant 0 : index
      %c2 = arith.constant 2 : index
      %c0_77 = arith.constant 0 : index
      %87 = vector.load %arg3[%c0_74, %c0_75, %c0_76, %c2, %c0_77] : memref<1x8x1x4x8xbf16, #tpu.memory_space<vmem>>, vector<1x8x1x1x8xbf16>
      %88 = vector.shape_cast %87 : vector<1x8x1x1x8xbf16> to vector<8x8xbf16>
      %c0_78 = arith.constant 0 : index
      %c0_79 = arith.constant 0 : index
      %c0_80 = arith.constant 0 : index
      %c2_81 = arith.constant 2 : index
      %c0_82 = arith.constant 0 : index
      %89 = vector.load %arg4[%c0_78, %c0_79, %c0_80, %c2_81, %c0_82] : memref<1x8x1x4x8xbf16, #tpu.memory_space<vmem>>, vector<1x8x1x1x8xbf16>
      %90 = vector.shape_cast %89 : vector<1x8x1x1x8xbf16> to vector<8x8xbf16>
      %c0_83 = arith.constant 0 : index
      %c0_84 = arith.constant 0 : index
      %c0_85 = arith.constant 0 : index
      %c2_86 = arith.constant 2 : index
      %c0_87 = arith.constant 0 : index
      %91 = vector.load %arg5[%c0_83, %c0_84, %c0_85, %c2_86, %c0_87] : memref<1x8x1x4x8xbf16, #tpu.memory_space<vmem>>, vector<1x8x1x1x8xbf16>
      %92 = vector.shape_cast %91 : vector<1x8x1x1x8xbf16> to vector<8x8xbf16>
      %cst_88 = arith.constant dense<0.000000e+00> : vector<8x8xf32>
      %93 = tpu.matmul %88, %90, %cst_88 {dimension_numbers = #tpu.dot_dimension_numbers<[1], [1], [0], [0], [0, 0, 1, 0], [], []>} : vector<8x8xbf16>, vector<8x8xbf16>, vector<8x8xf32> -> vector<8x8xf32>
      %c2_89 = arith.constant 2 : index
      %c0_90 = arith.constant 0 : index
      %c0_91 = arith.constant 0 : index
      %94 = vector.load %arg7[%c2_89, %c0_90, %c0_91] : memref<4x8x1xf32, #tpu.memory_space<vmem>>, vector<1x8x1xf32>
      %95 = vector.shape_cast %94 : vector<1x8x1xf32> to vector<8x1xf32>
      %cst_92 = arith.constant dense<0xFF800000> : vector<8xf32>
      %96 = vector.multi_reduction <maximumf>, %93, %cst_92 [1] : vector<8x8xf32> to vector<8xf32>
      %97 = vector.shape_cast %96 : vector<8xf32> to vector<8x1xf32>
      %98 = arith.maximumf %95, %97 : vector<8x1xf32>
      %99 = arith.subf %95, %98 : vector<8x1xf32>
      %100 = math.exp %99 : vector<8x1xf32>
      %101 = vector.broadcast %98 : vector<8x1xf32> to vector<8x8xf32>
      %102 = arith.subf %93, %101 : vector<8x8xf32>
      %103 = math.exp %102 : vector<8x8xf32>
      %c2_93 = arith.constant 2 : index
      %c0_94 = arith.constant 0 : index
      %c0_95 = arith.constant 0 : index
      %104 = vector.load %arg8[%c2_93, %c0_94, %c0_95] : memref<4x8x1xf32, #tpu.memory_space<vmem>>, vector<1x8x1xf32>
      %105 = vector.shape_cast %104 : vector<1x8x1xf32> to vector<8x1xf32>
      %106 = arith.mulf %100, %105 : vector<8x1xf32>
      %cst_96 = arith.constant dense<0.000000e+00> : vector<8xf32>
      %107 = vector.multi_reduction <add>, %103, %cst_96 [1] : vector<8x8xf32> to vector<8xf32>
      %108 = vector.shape_cast %107 : vector<8xf32> to vector<8x1xf32>
      %109 = arith.addf %106, %108 : vector<8x1xf32>
      %c2_97 = arith.constant 2 : index
      %c0_98 = arith.constant 0 : index
      %c0_99 = arith.constant 0 : index
      %110 = vector.load %arg8[%c2_97, %c0_98, %c0_99] : memref<4x8x1xf32, #tpu.memory_space<vmem>>, vector<1x8x1xf32>
      %111 = vector.shape_cast %110 : vector<1x8x1xf32> to vector<8x1xf32>
      %112 = vector.shape_cast %109 : vector<8x1xf32> to vector<1x8x1xf32>
      tpu.vector_store %arg8[%c2_97, %c0_98, %c0_99], %112 {strides = array<i32>} : memref<4x8x1xf32, #tpu.memory_space<vmem>>, vector<1x8x1xf32>,
      %c2_100 = arith.constant 2 : index
      %c0_101 = arith.constant 0 : index
      %c0_102 = arith.constant 0 : index
      %113 = vector.load %arg9[%c2_100, %c0_101, %c0_102] : memref<4x8x8xf32, #tpu.memory_space<vmem>>, vector<1x8x8xf32>
      %114 = vector.shape_cast %113 : vector<1x8x8xf32> to vector<8x8xf32>
      %115 = vector.broadcast %100 : vector<8x1xf32> to vector<8x8xf32>
      %116 = arith.mulf %115, %114 : vector<8x8xf32>
      %117 = arith.truncf %103 : vector<8x8xf32> to vector<8x8xbf16>
      %cst_103 = arith.constant dense<0.000000e+00> : vector<8x8xf32>
      %118 = tpu.matmul %117, %92, %cst_103 {dimension_numbers = #tpu.dot_dimension_numbers<[1], [0], [0], [1], [0, 0, 1, 1], [], []>} : vector<8x8xbf16>, vector<8x8xbf16>, vector<8x8xf32> -> vector<8x8xf32>
      %119 = arith.addf %116, %118 : vector<8x8xf32>
      %c2_104 = arith.constant 2 : index
      %c0_105 = arith.constant 0 : index
      %c0_106 = arith.constant 0 : index
      %120 = vector.load %arg9[%c2_104, %c0_105, %c0_106] : memref<4x8x8xf32, #tpu.memory_space<vmem>>, vector<1x8x8xf32>
      %121 = vector.shape_cast %120 : vector<1x8x8xf32> to vector<8x8xf32>
      %122 = vector.shape_cast %119 : vector<8x8xf32> to vector<1x8x8xf32>
      tpu.vector_store %arg9[%c2_104, %c0_105, %c0_106], %122 {strides = array<i32>} : memref<4x8x8xf32, #tpu.memory_space<vmem>>, vector<1x8x8xf32>,
      %c2_107 = arith.constant 2 : index
      %c0_108 = arith.constant 0 : index
      %c0_109 = arith.constant 0 : index
      %123 = vector.load %arg7[%c2_107, %c0_108, %c0_109] : memref<4x8x1xf32, #tpu.memory_space<vmem>>, vector<1x8x1xf32>
      %124 = vector.shape_cast %123 : vector<1x8x1xf32> to vector<8x1xf32>
      %125 = vector.shape_cast %98 : vector<8x1xf32> to vector<1x8x1xf32>
      tpu.vector_store %arg7[%c2_107, %c0_108, %c0_109], %125 {strides = array<i32>} : memref<4x8x1xf32, #tpu.memory_space<vmem>>, vector<1x8x1xf32>,
      %c0_110 = arith.constant 0 : index
      %c0_111 = arith.constant 0 : index
      %c0_112 = arith.constant 0 : index
      %c3 = arith.constant 3 : index
      %c0_113 = arith.constant 0 : index
      %126 = vector.load %arg3[%c0_110, %c0_111, %c0_112, %c3, %c0_113] : memref<1x8x1x4x8xbf16, #tpu.memory_space<vmem>>, vector<1x8x1x1x8xbf16>
      %127 = vector.shape_cast %126 : vector<1x8x1x1x8xbf16> to vector<8x8xbf16>
      %c0_114 = arith.constant 0 : index
      %c0_115 = arith.constant 0 : index
      %c0_116 = arith.constant 0 : index
      %c3_117 = arith.constant 3 : index
      %c0_118 = arith.constant 0 : index
      %128 = vector.load %arg4[%c0_114, %c0_115, %c0_116, %c3_117, %c0_118] : memref<1x8x1x4x8xbf16, #tpu.memory_space<vmem>>, vector<1x8x1x1x8xbf16>
      %129 = vector.shape_cast %128 : vector<1x8x1x1x8xbf16> to vector<8x8xbf16>
      %c0_119 = arith.constant 0 : index
      %c0_120 = arith.constant 0 : index
      %c0_121 = arith.constant 0 : index
      %c3_122 = arith.constant 3 : index
      %c0_123 = arith.constant 0 : index
      %130 = vector.load %arg5[%c0_119, %c0_120, %c0_121, %c3_122, %c0_123] : memref<1x8x1x4x8xbf16, #tpu.memory_space<vmem>>, vector<1x8x1x1x8xbf16>
      %131 = vector.shape_cast %130 : vector<1x8x1x1x8xbf16> to vector<8x8xbf16>
      %cst_124 = arith.constant dense<0.000000e+00> : vector<8x8xf32>
      %132 = tpu.matmul %127, %129, %cst_124 {dimension_numbers = #tpu.dot_dimension_numbers<[1], [1], [0], [0], [0, 0, 1, 0], [], []>} : vector<8x8xbf16>, vector<8x8xbf16>, vector<8x8xf32> -> vector<8x8xf32>
      %c3_125 = arith.constant 3 : index
      %c0_126 = arith.constant 0 : index
      %c0_127 = arith.constant 0 : index
      %133 = vector.load %arg7[%c3_125, %c0_126, %c0_127] : memref<4x8x1xf32, #tpu.memory_space<vmem>>, vector<1x8x1xf32>
      %134 = vector.shape_cast %133 : vector<1x8x1xf32> to vector<8x1xf32>
      %cst_128 = arith.constant dense<0xFF800000> : vector<8xf32>
      %135 = vector.multi_reduction <maximumf>, %132, %cst_128 [1] : vector<8x8xf32> to vector<8xf32>
      %136 = vector.shape_cast %135 : vector<8xf32> to vector<8x1xf32>
      %137 = arith.maximumf %134, %136 : vector<8x1xf32>
      %138 = arith.subf %134, %137 : vector<8x1xf32>
      %139 = math.exp %138 : vector<8x1xf32>
      %140 = vector.broadcast %137 : vector<8x1xf32> to vector<8x8xf32>
      %141 = arith.subf %132, %140 : vector<8x8xf32>
      %142 = math.exp %141 : vector<8x8xf32>
      %c3_129 = arith.constant 3 : index
      %c0_130 = arith.constant 0 : index
      %c0_131 = arith.constant 0 : index
      %143 = vector.load %arg8[%c3_129, %c0_130, %c0_131] : memref<4x8x1xf32, #tpu.memory_space<vmem>>, vector<1x8x1xf32>
      %144 = vector.shape_cast %143 : vector<1x8x1xf32> to vector<8x1xf32>
      %145 = arith.mulf %139, %144 : vector<8x1xf32>
      %cst_132 = arith.constant dense<0.000000e+00> : vector<8xf32>
      %146 = vector.multi_reduction <add>, %142, %cst_132 [1] : vector<8x8xf32> to vector<8xf32>
      %147 = vector.shape_cast %146 : vector<8xf32> to vector<8x1xf32>
      %148 = arith.addf %145, %147 : vector<8x1xf32>
      %c3_133 = arith.constant 3 : index
      %c0_134 = arith.constant 0 : index
      %c0_135 = arith.constant 0 : index
      %149 = vector.load %arg8[%c3_133, %c0_134, %c0_135] : memref<4x8x1xf32, #tpu.memory_space<vmem>>, vector<1x8x1xf32>
      %150 = vector.shape_cast %149 : vector<1x8x1xf32> to vector<8x1xf32>
      %151 = vector.shape_cast %148 : vector<8x1xf32> to vector<1x8x1xf32>
      tpu.vector_store %arg8[%c3_133, %c0_134, %c0_135], %151 {strides = array<i32>} : memref<4x8x1xf32, #tpu.memory_space<vmem>>, vector<1x8x1xf32>,
      %c3_136 = arith.constant 3 : index
      %c0_137 = arith.constant 0 : index
      %c0_138 = arith.constant 0 : index
      %152 = vector.load %arg9[%c3_136, %c0_137, %c0_138] : memref<4x8x8xf32, #tpu.memory_space<vmem>>, vector<1x8x8xf32>
      %153 = vector.shape_cast %152 : vector<1x8x8xf32> to vector<8x8xf32>
      %154 = vector.broadcast %139 : vector<8x1xf32> to vector<8x8xf32>
      %155 = arith.mulf %154, %153 : vector<8x8xf32>
      %156 = arith.truncf %142 : vector<8x8xf32> to vector<8x8xbf16>
      %cst_139 = arith.constant dense<0.000000e+00> : vector<8x8xf32>
      %157 = tpu.matmul %156, %131, %cst_139 {dimension_numbers = #tpu.dot_dimension_numbers<[1], [0], [0], [1], [0, 0, 1, 1], [], []>} : vector<8x8xbf16>, vector<8x8xbf16>, vector<8x8xf32> -> vector<8x8xf32>
      %158 = arith.addf %155, %157 : vector<8x8xf32>
      %c3_140 = arith.constant 3 : index
      %c0_141 = arith.constant 0 : index
      %c0_142 = arith.constant 0 : index
      %159 = vector.load %arg9[%c3_140, %c0_141, %c0_142] : memref<4x8x8xf32, #tpu.memory_space<vmem>>, vector<1x8x8xf32>
      %160 = vector.shape_cast %159 : vector<1x8x8xf32> to vector<8x8xf32>
      %161 = vector.shape_cast %158 : vector<8x8xf32> to vector<1x8x8xf32>
      tpu.vector_store %arg9[%c3_140, %c0_141, %c0_142], %161 {strides = array<i32>} : memref<4x8x8xf32, #tpu.memory_space<vmem>>, vector<1x8x8xf32>,
      %c3_143 = arith.constant 3 : index
      %c0_144 = arith.constant 0 : index
      %c0_145 = arith.constant 0 : index
      %162 = vector.load %arg7[%c3_143, %c0_144, %c0_145] : memref<4x8x1xf32, #tpu.memory_space<vmem>>, vector<1x8x1xf32>
      %163 = vector.shape_cast %162 : vector<1x8x1xf32> to vector<8x1xf32>
      %164 = vector.shape_cast %137 : vector<8x1xf32> to vector<1x8x1xf32>
      tpu.vector_store %arg7[%c3_143, %c0_144, %c0_145], %164 {strides = array<i32>} : memref<4x8x1xf32, #tpu.memory_space<vmem>>, vector<1x8x1xf32>,
    } else {
    }
    %6 = arith.cmpi eq, %arg2, %arg1 : i32
    %7 = arith.extui %6 : i1 to i32
    %c0_i32_2 = arith.constant 0 : i32
    %8 = arith.cmpi ne, %7, %c0_i32_2 : i32
    scf.if %8 {
      %c0 = arith.constant 0 : index
      %c0_3 = arith.constant 0 : index
      %c0_4 = arith.constant 0 : index
      %c0_5 = arith.constant 0 : index
      %c0_6 = arith.constant 0 : index
      %9 = vector.load %arg3[%c0, %c0_3, %c0_4, %c0_5, %c0_6] : memref<1x8x1x4x8xbf16, #tpu.memory_space<vmem>>, vector<1x8x1x1x8xbf16>
      %10 = vector.shape_cast %9 : vector<1x8x1x1x8xbf16> to vector<8x8xbf16>
      %c0_7 = arith.constant 0 : index
      %c0_8 = arith.constant 0 : index
      %c0_9 = arith.constant 0 : index
      %c0_10 = arith.constant 0 : index
      %c0_11 = arith.constant 0 : index
      %11 = vector.load %arg4[%c0_7, %c0_8, %c0_9, %c0_10, %c0_11] : memref<1x8x1x4x8xbf16, #tpu.memory_space<vmem>>, vector<1x8x1x1x8xbf16>
      %12 = vector.shape_cast %11 : vector<1x8x1x1x8xbf16> to vector<8x8xbf16>
      %c0_12 = arith.constant 0 : index
      %c0_13 = arith.constant 0 : index
      %c0_14 = arith.constant 0 : index
      %c0_15 = arith.constant 0 : index
      %c0_16 = arith.constant 0 : index
      %13 = vector.load %arg5[%c0_12, %c0_13, %c0_14, %c0_15, %c0_16] : memref<1x8x1x4x8xbf16, #tpu.memory_space<vmem>>, vector<1x8x1x1x8xbf16>
      %14 = vector.shape_cast %13 : vector<1x8x1x1x8xbf16> to vector<8x8xbf16>
      %cst = arith.constant dense<0.000000e+00> : vector<8x8xf32>
      %15 = tpu.matmul %10, %12, %cst {dimension_numbers = #tpu.dot_dimension_numbers<[1], [1], [0], [0], [0, 0, 1, 0], [], []>} : vector<8x8xbf16>, vector<8x8xbf16>, vector<8x8xf32> -> vector<8x8xf32>
      %16 = tpu.iota {dimensions = array<i32: 0>} : vector<8x8xi32>
      %17 = tpu.iota {dimensions = array<i32: 1>} : vector<8x8xi32>
      %18 = arith.cmpi sle, %17, %16 : vector<8x8xi32>
      %cst_17 = arith.constant 0xFF800000 : f32
      %19 = vector.broadcast %cst_17 : f32 to vector<8x8xf32>
      %20 = arith.select %18, %15, %19 : vector<8x8xi1>, vector<8x8xf32>
      %c0_18 = arith.constant 0 : index
      %c0_19 = arith.constant 0 : index
      %c0_20 = arith.constant 0 : index
      %21 = vector.load %arg7[%c0_18, %c0_19, %c0_20] : memref<4x8x1xf32, #tpu.memory_space<vmem>>, vector<1x8x1xf32>
      %22 = vector.shape_cast %21 : vector<1x8x1xf32> to vector<8x1xf32>
      %cst_21 = arith.constant dense<0xFF800000> : vector<8xf32>
      %23 = vector.multi_reduction <maximumf>, %20, %cst_21 [1] : vector<8x8xf32> to vector<8xf32>
      %24 = vector.shape_cast %23 : vector<8xf32> to vector<8x1xf32>
      %25 = arith.maximumf %22, %24 : vector<8x1xf32>
      %26 = arith.subf %22, %25 : vector<8x1xf32>
      %27 = math.exp %26 : vector<8x1xf32>
      %28 = vector.broadcast %25 : vector<8x1xf32> to vector<8x8xf32>
      %29 = arith.subf %20, %28 : vector<8x8xf32>
      %30 = math.exp %29 : vector<8x8xf32>
      %c0_22 = arith.constant 0 : index
      %c0_23 = arith.constant 0 : index
      %c0_24 = arith.constant 0 : index
      %31 = vector.load %arg8[%c0_22, %c0_23, %c0_24] : memref<4x8x1xf32, #tpu.memory_space<vmem>>, vector<1x8x1xf32>
      %32 = vector.shape_cast %31 : vector<1x8x1xf32> to vector<8x1xf32>
      %33 = arith.mulf %27, %32 : vector<8x1xf32>
      %cst_25 = arith.constant dense<0.000000e+00> : vector<8xf32>
      %34 = vector.multi_reduction <add>, %30, %cst_25 [1] : vector<8x8xf32> to vector<8xf32>
      %35 = vector.shape_cast %34 : vector<8xf32> to vector<8x1xf32>
      %36 = arith.addf %33, %35 : vector<8x1xf32>
      %c0_26 = arith.constant 0 : index
      %c0_27 = arith.constant 0 : index
      %c0_28 = arith.constant 0 : index
      %37 = vector.load %arg8[%c0_26, %c0_27, %c0_28] : memref<4x8x1xf32, #tpu.memory_space<vmem>>, vector<1x8x1xf32>
      %38 = vector.shape_cast %37 : vector<1x8x1xf32> to vector<8x1xf32>
      %39 = vector.shape_cast %36 : vector<8x1xf32> to vector<1x8x1xf32>
      tpu.vector_store %arg8[%c0_26, %c0_27, %c0_28], %39 {strides = array<i32>} : memref<4x8x1xf32, #tpu.memory_space<vmem>>, vector<1x8x1xf32>,
      %c0_29 = arith.constant 0 : index
      %c0_30 = arith.constant 0 : index
      %c0_31 = arith.constant 0 : index
      %40 = vector.load %arg9[%c0_29, %c0_30, %c0_31] : memref<4x8x8xf32, #tpu.memory_space<vmem>>, vector<1x8x8xf32>
      %41 = vector.shape_cast %40 : vector<1x8x8xf32> to vector<8x8xf32>
      %42 = vector.broadcast %27 : vector<8x1xf32> to vector<8x8xf32>
      %43 = arith.mulf %42, %41 : vector<8x8xf32>
      %44 = arith.truncf %30 : vector<8x8xf32> to vector<8x8xbf16>
      %cst_32 = arith.constant dense<0.000000e+00> : vector<8x8xf32>
      %45 = tpu.matmul %44, %14, %cst_32 {dimension_numbers = #tpu.dot_dimension_numbers<[1], [0], [0], [1], [0, 0, 1, 1], [], []>} : vector<8x8xbf16>, vector<8x8xbf16>, vector<8x8xf32> -> vector<8x8xf32>
      %46 = arith.addf %43, %45 : vector<8x8xf32>
      %c0_33 = arith.constant 0 : index
      %c0_34 = arith.constant 0 : index
      %c0_35 = arith.constant 0 : index
      %47 = vector.load %arg9[%c0_33, %c0_34, %c0_35] : memref<4x8x8xf32, #tpu.memory_space<vmem>>, vector<1x8x8xf32>
      %48 = vector.shape_cast %47 : vector<1x8x8xf32> to vector<8x8xf32>
      %49 = vector.shape_cast %46 : vector<8x8xf32> to vector<1x8x8xf32>
      tpu.vector_store %arg9[%c0_33, %c0_34, %c0_35], %49 {strides = array<i32>} : memref<4x8x8xf32, #tpu.memory_space<vmem>>, vector<1x8x8xf32>,
      %c0_36 = arith.constant 0 : index
      %c0_37 = arith.constant 0 : index
      %c0_38 = arith.constant 0 : index
      %50 = vector.load %arg7[%c0_36, %c0_37, %c0_38] : memref<4x8x1xf32, #tpu.memory_space<vmem>>, vector<1x8x1xf32>
      %51 = vector.shape_cast %50 : vector<1x8x1xf32> to vector<8x1xf32>
      %52 = vector.shape_cast %25 : vector<8x1xf32> to vector<1x8x1xf32>
      tpu.vector_store %arg7[%c0_36, %c0_37, %c0_38], %52 {strides = array<i32>} : memref<4x8x1xf32, #tpu.memory_space<vmem>>, vector<1x8x1xf32>,
      %c0_39 = arith.constant 0 : index
      %c0_40 = arith.constant 0 : index
      %c0_41 = arith.constant 0 : index
      %c1 = arith.constant 1 : index
      %c0_42 = arith.constant 0 : index
      %53 = vector.load %arg3[%c0_39, %c0_40, %c0_41, %c1, %c0_42] : memref<1x8x1x4x8xbf16, #tpu.memory_space<vmem>>, vector<1x8x1x1x8xbf16>
      %54 = vector.shape_cast %53 : vector<1x8x1x1x8xbf16> to vector<8x8xbf16>
      %c0_43 = arith.constant 0 : index
      %c0_44 = arith.constant 0 : index
      %c0_45 = arith.constant 0 : index
      %c1_46 = arith.constant 1 : index
      %c0_47 = arith.constant 0 : index
      %55 = vector.load %arg4[%c0_43, %c0_44, %c0_45, %c1_46, %c0_47] : memref<1x8x1x4x8xbf16, #tpu.memory_space<vmem>>, vector<1x8x1x1x8xbf16>
      %56 = vector.shape_cast %55 : vector<1x8x1x1x8xbf16> to vector<8x8xbf16>
      %c0_48 = arith.constant 0 : index
      %c0_49 = arith.constant 0 : index
      %c0_50 = arith.constant 0 : index
      %c1_51 = arith.constant 1 : index
      %c0_52 = arith.constant 0 : index
      %57 = vector.load %arg5[%c0_48, %c0_49, %c0_50, %c1_51, %c0_52] : memref<1x8x1x4x8xbf16, #tpu.memory_space<vmem>>, vector<1x8x1x1x8xbf16>
      %58 = vector.shape_cast %57 : vector<1x8x1x1x8xbf16> to vector<8x8xbf16>
      %cst_53 = arith.constant dense<0.000000e+00> : vector<8x8xf32>
      %59 = tpu.matmul %54, %56, %cst_53 {dimension_numbers = #tpu.dot_dimension_numbers<[1], [1], [0], [0], [0, 0, 1, 0], [], []>} : vector<8x8xbf16>, vector<8x8xbf16>, vector<8x8xf32> -> vector<8x8xf32>
      %60 = tpu.iota {dimensions = array<i32: 0>} : vector<8x8xi32>
      %61 = tpu.iota {dimensions = array<i32: 1>} : vector<8x8xi32>
      %62 = arith.cmpi sle, %61, %60 : vector<8x8xi32>
      %cst_54 = arith.constant 0xFF800000 : f32
      %63 = vector.broadcast %cst_54 : f32 to vector<8x8xf32>
      %64 = arith.select %62, %59, %63 : vector<8x8xi1>, vector<8x8xf32>
      %c1_55 = arith.constant 1 : index
      %c0_56 = arith.constant 0 : index
      %c0_57 = arith.constant 0 : index
      %65 = vector.load %arg7[%c1_55, %c0_56, %c0_57] : memref<4x8x1xf32, #tpu.memory_space<vmem>>, vector<1x8x1xf32>
      %66 = vector.shape_cast %65 : vector<1x8x1xf32> to vector<8x1xf32>
      %cst_58 = arith.constant dense<0xFF800000> : vector<8xf32>
      %67 = vector.multi_reduction <maximumf>, %64, %cst_58 [1] : vector<8x8xf32> to vector<8xf32>
      %68 = vector.shape_cast %67 : vector<8xf32> to vector<8x1xf32>
      %69 = arith.maximumf %66, %68 : vector<8x1xf32>
      %70 = arith.subf %66, %69 : vector<8x1xf32>
      %71 = math.exp %70 : vector<8x1xf32>
      %72 = vector.broadcast %69 : vector<8x1xf32> to vector<8x8xf32>
      %73 = arith.subf %64, %72 : vector<8x8xf32>
      %74 = math.exp %73 : vector<8x8xf32>
      %c1_59 = arith.constant 1 : index
      %c0_60 = arith.constant 0 : index
      %c0_61 = arith.constant 0 : index
      %75 = vector.load %arg8[%c1_59, %c0_60, %c0_61] : memref<4x8x1xf32, #tpu.memory_space<vmem>>, vector<1x8x1xf32>
      %76 = vector.shape_cast %75 : vector<1x8x1xf32> to vector<8x1xf32>
      %77 = arith.mulf %71, %76 : vector<8x1xf32>
      %cst_62 = arith.constant dense<0.000000e+00> : vector<8xf32>
      %78 = vector.multi_reduction <add>, %74, %cst_62 [1] : vector<8x8xf32> to vector<8xf32>
      %79 = vector.shape_cast %78 : vector<8xf32> to vector<8x1xf32>
      %80 = arith.addf %77, %79 : vector<8x1xf32>
      %c1_63 = arith.constant 1 : index
      %c0_64 = arith.constant 0 : index
      %c0_65 = arith.constant 0 : index
      %81 = vector.load %arg8[%c1_63, %c0_64, %c0_65] : memref<4x8x1xf32, #tpu.memory_space<vmem>>, vector<1x8x1xf32>
      %82 = vector.shape_cast %81 : vector<1x8x1xf32> to vector<8x1xf32>
      %83 = vector.shape_cast %80 : vector<8x1xf32> to vector<1x8x1xf32>
      tpu.vector_store %arg8[%c1_63, %c0_64, %c0_65], %83 {strides = array<i32>} : memref<4x8x1xf32, #tpu.memory_space<vmem>>, vector<1x8x1xf32>,
      %c1_66 = arith.constant 1 : index
      %c0_67 = arith.constant 0 : index
      %c0_68 = arith.constant 0 : index
      %84 = vector.load %arg9[%c1_66, %c0_67, %c0_68] : memref<4x8x8xf32, #tpu.memory_space<vmem>>, vector<1x8x8xf32>
      %85 = vector.shape_cast %84 : vector<1x8x8xf32> to vector<8x8xf32>
      %86 = vector.broadcast %71 : vector<8x1xf32> to vector<8x8xf32>
      %87 = arith.mulf %86, %85 : vector<8x8xf32>
      %88 = arith.truncf %74 : vector<8x8xf32> to vector<8x8xbf16>
      %cst_69 = arith.constant dense<0.000000e+00> : vector<8x8xf32>
      %89 = tpu.matmul %88, %58, %cst_69 {dimension_numbers = #tpu.dot_dimension_numbers<[1], [0], [0], [1], [0, 0, 1, 1], [], []>} : vector<8x8xbf16>, vector<8x8xbf16>, vector<8x8xf32> -> vector<8x8xf32>
      %90 = arith.addf %87, %89 : vector<8x8xf32>
      %c1_70 = arith.constant 1 : index
      %c0_71 = arith.constant 0 : index
      %c0_72 = arith.constant 0 : index
      %91 = vector.load %arg9[%c1_70, %c0_71, %c0_72] : memref<4x8x8xf32, #tpu.memory_space<vmem>>, vector<1x8x8xf32>
      %92 = vector.shape_cast %91 : vector<1x8x8xf32> to vector<8x8xf32>
      %93 = vector.shape_cast %90 : vector<8x8xf32> to vector<1x8x8xf32>
      tpu.vector_store %arg9[%c1_70, %c0_71, %c0_72], %93 {strides = array<i32>} : memref<4x8x8xf32, #tpu.memory_space<vmem>>, vector<1x8x8xf32>,
      %c1_73 = arith.constant 1 : index
      %c0_74 = arith.constant 0 : index
      %c0_75 = arith.constant 0 : index
      %94 = vector.load %arg7[%c1_73, %c0_74, %c0_75] : memref<4x8x1xf32, #tpu.memory_space<vmem>>, vector<1x8x1xf32>
      %95 = vector.shape_cast %94 : vector<1x8x1xf32> to vector<8x1xf32>
      %96 = vector.shape_cast %69 : vector<8x1xf32> to vector<1x8x1xf32>
      tpu.vector_store %arg7[%c1_73, %c0_74, %c0_75], %96 {strides = array<i32>} : memref<4x8x1xf32, #tpu.memory_space<vmem>>, vector<1x8x1xf32>,
      %c0_76 = arith.constant 0 : index
      %c0_77 = arith.constant 0 : index
      %c0_78 = arith.constant 0 : index
      %c2 = arith.constant 2 : index
      %c0_79 = arith.constant 0 : index
      %97 = vector.load %arg3[%c0_76, %c0_77, %c0_78, %c2, %c0_79] : memref<1x8x1x4x8xbf16, #tpu.memory_space<vmem>>, vector<1x8x1x1x8xbf16>
      %98 = vector.shape_cast %97 : vector<1x8x1x1x8xbf16> to vector<8x8xbf16>
      %c0_80 = arith.constant 0 : index
      %c0_81 = arith.constant 0 : index
      %c0_82 = arith.constant 0 : index
      %c2_83 = arith.constant 2 : index
      %c0_84 = arith.constant 0 : index
      %99 = vector.load %arg4[%c0_80, %c0_81, %c0_82, %c2_83, %c0_84] : memref<1x8x1x4x8xbf16, #tpu.memory_space<vmem>>, vector<1x8x1x1x8xbf16>
      %100 = vector.shape_cast %99 : vector<1x8x1x1x8xbf16> to vector<8x8xbf16>
      %c0_85 = arith.constant 0 : index
      %c0_86 = arith.constant 0 : index
      %c0_87 = arith.constant 0 : index
      %c2_88 = arith.constant 2 : index
      %c0_89 = arith.constant 0 : index
      %101 = vector.load %arg5[%c0_85, %c0_86, %c0_87, %c2_88, %c0_89] : memref<1x8x1x4x8xbf16, #tpu.memory_space<vmem>>, vector<1x8x1x1x8xbf16>
      %102 = vector.shape_cast %101 : vector<1x8x1x1x8xbf16> to vector<8x8xbf16>
      %cst_90 = arith.constant dense<0.000000e+00> : vector<8x8xf32>
      %103 = tpu.matmul %98, %100, %cst_90 {dimension_numbers = #tpu.dot_dimension_numbers<[1], [1], [0], [0], [0, 0, 1, 0], [], []>} : vector<8x8xbf16>, vector<8x8xbf16>, vector<8x8xf32> -> vector<8x8xf32>
      %104 = tpu.iota {dimensions = array<i32: 0>} : vector<8x8xi32>
      %105 = tpu.iota {dimensions = array<i32: 1>} : vector<8x8xi32>
      %106 = arith.cmpi sle, %105, %104 : vector<8x8xi32>
      %cst_91 = arith.constant 0xFF800000 : f32
      %107 = vector.broadcast %cst_91 : f32 to vector<8x8xf32>
      %108 = arith.select %106, %103, %107 : vector<8x8xi1>, vector<8x8xf32>
      %c2_92 = arith.constant 2 : index
      %c0_93 = arith.constant 0 : index
      %c0_94 = arith.constant 0 : index
      %109 = vector.load %arg7[%c2_92, %c0_93, %c0_94] : memref<4x8x1xf32, #tpu.memory_space<vmem>>, vector<1x8x1xf32>
      %110 = vector.shape_cast %109 : vector<1x8x1xf32> to vector<8x1xf32>
      %cst_95 = arith.constant dense<0xFF800000> : vector<8xf32>
      %111 = vector.multi_reduction <maximumf>, %108, %cst_95 [1] : vector<8x8xf32> to vector<8xf32>
      %112 = vector.shape_cast %111 : vector<8xf32> to vector<8x1xf32>
      %113 = arith.maximumf %110, %112 : vector<8x1xf32>
      %114 = arith.subf %110, %113 : vector<8x1xf32>
      %115 = math.exp %114 : vector<8x1xf32>
      %116 = vector.broadcast %113 : vector<8x1xf32> to vector<8x8xf32>
      %117 = arith.subf %108, %116 : vector<8x8xf32>
      %118 = math.exp %117 : vector<8x8xf32>
      %c2_96 = arith.constant 2 : index
      %c0_97 = arith.constant 0 : index
      %c0_98 = arith.constant 0 : index
      %119 = vector.load %arg8[%c2_96, %c0_97, %c0_98] : memref<4x8x1xf32, #tpu.memory_space<vmem>>, vector<1x8x1xf32>
      %120 = vector.shape_cast %119 : vector<1x8x1xf32> to vector<8x1xf32>
      %121 = arith.mulf %115, %120 : vector<8x1xf32>
      %cst_99 = arith.constant dense<0.000000e+00> : vector<8xf32>
      %122 = vector.multi_reduction <add>, %118, %cst_99 [1] : vector<8x8xf32> to vector<8xf32>
      %123 = vector.shape_cast %122 : vector<8xf32> to vector<8x1xf32>
      %124 = arith.addf %121, %123 : vector<8x1xf32>
      %c2_100 = arith.constant 2 : index
      %c0_101 = arith.constant 0 : index
      %c0_102 = arith.constant 0 : index
      %125 = vector.load %arg8[%c2_100, %c0_101, %c0_102] : memref<4x8x1xf32, #tpu.memory_space<vmem>>, vector<1x8x1xf32>
      %126 = vector.shape_cast %125 : vector<1x8x1xf32> to vector<8x1xf32>
      %127 = vector.shape_cast %124 : vector<8x1xf32> to vector<1x8x1xf32>
      tpu.vector_store %arg8[%c2_100, %c0_101, %c0_102], %127 {strides = array<i32>} : memref<4x8x1xf32, #tpu.memory_space<vmem>>, vector<1x8x1xf32>,
      %c2_103 = arith.constant 2 : index
      %c0_104 = arith.constant 0 : index
      %c0_105 = arith.constant 0 : index
      %128 = vector.load %arg9[%c2_103, %c0_104, %c0_105] : memref<4x8x8xf32, #tpu.memory_space<vmem>>, vector<1x8x8xf32>
      %129 = vector.shape_cast %128 : vector<1x8x8xf32> to vector<8x8xf32>
      %130 = vector.broadcast %115 : vector<8x1xf32> to vector<8x8xf32>
      %131 = arith.mulf %130, %129 : vector<8x8xf32>
      %132 = arith.truncf %118 : vector<8x8xf32> to vector<8x8xbf16>
      %cst_106 = arith.constant dense<0.000000e+00> : vector<8x8xf32>
      %133 = tpu.matmul %132, %102, %cst_106 {dimension_numbers = #tpu.dot_dimension_numbers<[1], [0], [0], [1], [0, 0, 1, 1], [], []>} : vector<8x8xbf16>, vector<8x8xbf16>, vector<8x8xf32> -> vector<8x8xf32>
      %134 = arith.addf %131, %133 : vector<8x8xf32>
      %c2_107 = arith.constant 2 : index
      %c0_108 = arith.constant 0 : index
      %c0_109 = arith.constant 0 : index
      %135 = vector.load %arg9[%c2_107, %c0_108, %c0_109] : memref<4x8x8xf32, #tpu.memory_space<vmem>>, vector<1x8x8xf32>
      %136 = vector.shape_cast %135 : vector<1x8x8xf32> to vector<8x8xf32>
      %137 = vector.shape_cast %134 : vector<8x8xf32> to vector<1x8x8xf32>
      tpu.vector_store %arg9[%c2_107, %c0_108, %c0_109], %137 {strides = array<i32>} : memref<4x8x8xf32, #tpu.memory_space<vmem>>, vector<1x8x8xf32>,
      %c2_110 = arith.constant 2 : index
      %c0_111 = arith.constant 0 : index
      %c0_112 = arith.constant 0 : index
      %138 = vector.load %arg7[%c2_110, %c0_111, %c0_112] : memref<4x8x1xf32, #tpu.memory_space<vmem>>, vector<1x8x1xf32>
      %139 = vector.shape_cast %138 : vector<1x8x1xf32> to vector<8x1xf32>
      %140 = vector.shape_cast %113 : vector<8x1xf32> to vector<1x8x1xf32>
      tpu.vector_store %arg7[%c2_110, %c0_111, %c0_112], %140 {strides = array<i32>} : memref<4x8x1xf32, #tpu.memory_space<vmem>>, vector<1x8x1xf32>,
      %c0_113 = arith.constant 0 : index
      %c0_114 = arith.constant 0 : index
      %c0_115 = arith.constant 0 : index
      %c3 = arith.constant 3 : index
      %c0_116 = arith.constant 0 : index
      %141 = vector.load %arg3[%c0_113, %c0_114, %c0_115, %c3, %c0_116] : memref<1x8x1x4x8xbf16, #tpu.memory_space<vmem>>, vector<1x8x1x1x8xbf16>
      %142 = vector.shape_cast %141 : vector<1x8x1x1x8xbf16> to vector<8x8xbf16>
      %c0_117 = arith.constant 0 : index
      %c0_118 = arith.constant 0 : index
      %c0_119 = arith.constant 0 : index
      %c3_120 = arith.constant 3 : index
      %c0_121 = arith.constant 0 : index
      %143 = vector.load %arg4[%c0_117, %c0_118, %c0_119, %c3_120, %c0_121] : memref<1x8x1x4x8xbf16, #tpu.memory_space<vmem>>, vector<1x8x1x1x8xbf16>
      %144 = vector.shape_cast %143 : vector<1x8x1x1x8xbf16> to vector<8x8xbf16>
      %c0_122 = arith.constant 0 : index
      %c0_123 = arith.constant 0 : index
      %c0_124 = arith.constant 0 : index
      %c3_125 = arith.constant 3 : index
      %c0_126 = arith.constant 0 : index
      %145 = vector.load %arg5[%c0_122, %c0_123, %c0_124, %c3_125, %c0_126] : memref<1x8x1x4x8xbf16, #tpu.memory_space<vmem>>, vector<1x8x1x1x8xbf16>
      %146 = vector.shape_cast %145 : vector<1x8x1x1x8xbf16> to vector<8x8xbf16>
      %cst_127 = arith.constant dense<0.000000e+00> : vector<8x8xf32>
      %147 = tpu.matmul %142, %144, %cst_127 {dimension_numbers = #tpu.dot_dimension_numbers<[1], [1], [0], [0], [0, 0, 1, 0], [], []>} : vector<8x8xbf16>, vector<8x8xbf16>, vector<8x8xf32> -> vector<8x8xf32>
      %148 = tpu.iota {dimensions = array<i32: 0>} : vector<8x8xi32>
      %149 = tpu.iota {dimensions = array<i32: 1>} : vector<8x8xi32>
      %150 = arith.cmpi sle, %149, %148 : vector<8x8xi32>
      %cst_128 = arith.constant 0xFF800000 : f32
      %151 = vector.broadcast %cst_128 : f32 to vector<8x8xf32>
      %152 = arith.select %150, %147, %151 : vector<8x8xi1>, vector<8x8xf32>
      %c3_129 = arith.constant 3 : index
      %c0_130 = arith.constant 0 : index
      %c0_131 = arith.constant 0 : index
      %153 = vector.load %arg7[%c3_129, %c0_130, %c0_131] : memref<4x8x1xf32, #tpu.memory_space<vmem>>, vector<1x8x1xf32>
      %154 = vector.shape_cast %153 : vector<1x8x1xf32> to vector<8x1xf32>
      %cst_132 = arith.constant dense<0xFF800000> : vector<8xf32>
      %155 = vector.multi_reduction <maximumf>, %152, %cst_132 [1] : vector<8x8xf32> to vector<8xf32>
      %156 = vector.shape_cast %155 : vector<8xf32> to vector<8x1xf32>
      %157 = arith.maximumf %154, %156 : vector<8x1xf32>
      %158 = arith.subf %154, %157 : vector<8x1xf32>
      %159 = math.exp %158 : vector<8x1xf32>
      %160 = vector.broadcast %157 : vector<8x1xf32> to vector<8x8xf32>
      %161 = arith.subf %152, %160 : vector<8x8xf32>
      %162 = math.exp %161 : vector<8x8xf32>
      %c3_133 = arith.constant 3 : index
      %c0_134 = arith.constant 0 : index
      %c0_135 = arith.constant 0 : index
      %163 = vector.load %arg8[%c3_133, %c0_134, %c0_135] : memref<4x8x1xf32, #tpu.memory_space<vmem>>, vector<1x8x1xf32>
      %164 = vector.shape_cast %163 : vector<1x8x1xf32> to vector<8x1xf32>
      %165 = arith.mulf %159, %164 : vector<8x1xf32>
      %cst_136 = arith.constant dense<0.000000e+00> : vector<8xf32>
      %166 = vector.multi_reduction <add>, %162, %cst_136 [1] : vector<8x8xf32> to vector<8xf32>
      %167 = vector.shape_cast %166 : vector<8xf32> to vector<8x1xf32>
      %168 = arith.addf %165, %167 : vector<8x1xf32>
      %c3_137 = arith.constant 3 : index
      %c0_138 = arith.constant 0 : index
      %c0_139 = arith.constant 0 : index
      %169 = vector.load %arg8[%c3_137, %c0_138, %c0_139] : memref<4x8x1xf32, #tpu.memory_space<vmem>>, vector<1x8x1xf32>
      %170 = vector.shape_cast %169 : vector<1x8x1xf32> to vector<8x1xf32>
      %171 = vector.shape_cast %168 : vector<8x1xf32> to vector<1x8x1xf32>
      tpu.vector_store %arg8[%c3_137, %c0_138, %c0_139], %171 {strides = array<i32>} : memref<4x8x1xf32, #tpu.memory_space<vmem>>, vector<1x8x1xf32>,
      %c3_140 = arith.constant 3 : index
      %c0_141 = arith.constant 0 : index
      %c0_142 = arith.constant 0 : index
      %172 = vector.load %arg9[%c3_140, %c0_141, %c0_142] : memref<4x8x8xf32, #tpu.memory_space<vmem>>, vector<1x8x8xf32>
      %173 = vector.shape_cast %172 : vector<1x8x8xf32> to vector<8x8xf32>
      %174 = vector.broadcast %159 : vector<8x1xf32> to vector<8x8xf32>
      %175 = arith.mulf %174, %173 : vector<8x8xf32>
      %176 = arith.truncf %162 : vector<8x8xf32> to vector<8x8xbf16>
      %cst_143 = arith.constant dense<0.000000e+00> : vector<8x8xf32>
      %177 = tpu.matmul %176, %146, %cst_143 {dimension_numbers = #tpu.dot_dimension_numbers<[1], [0], [0], [1], [0, 0, 1, 1], [], []>} : vector<8x8xbf16>, vector<8x8xbf16>, vector<8x8xf32> -> vector<8x8xf32>
      %178 = arith.addf %175, %177 : vector<8x8xf32>
      %c3_144 = arith.constant 3 : index
      %c0_145 = arith.constant 0 : index
      %c0_146 = arith.constant 0 : index
      %179 = vector.load %arg9[%c3_144, %c0_145, %c0_146] : memref<4x8x8xf32, #tpu.memory_space<vmem>>, vector<1x8x8xf32>
      %180 = vector.shape_cast %179 : vector<1x8x8xf32> to vector<8x8xf32>
      %181 = vector.shape_cast %178 : vector<8x8xf32> to vector<1x8x8xf32>
      tpu.vector_store %arg9[%c3_144, %c0_145, %c0_146], %181 {strides = array<i32>} : memref<4x8x8xf32, #tpu.memory_space<vmem>>, vector<1x8x8xf32>,
      %c3_147 = arith.constant 3 : index
      %c0_148 = arith.constant 0 : index
      %c0_149 = arith.constant 0 : index
      %182 = vector.load %arg7[%c3_147, %c0_148, %c0_149] : memref<4x8x1xf32, #tpu.memory_space<vmem>>, vector<1x8x1xf32>
      %183 = vector.shape_cast %182 : vector<1x8x1xf32> to vector<8x1xf32>
      %184 = vector.shape_cast %157 : vector<8x1xf32> to vector<1x8x1xf32>
      tpu.vector_store %arg7[%c3_147, %c0_148, %c0_149], %184 {strides = array<i32>} : memref<4x8x1xf32, #tpu.memory_space<vmem>>, vector<1x8x1xf32>,
      %c0_150 = arith.constant 0 : index
      %c0_151 = arith.constant 0 : index
      %c0_152 = arith.constant 0 : index
      %185 = vector.load %arg8[%c0_150, %c0_151, %c0_152] : memref<4x8x1xf32, #tpu.memory_space<vmem>>, vector<4x8x1xf32>
      %186 = tpu.reciprocal %185 {approx = true} : vector<4x8x1xf32> -> vector<4x8x1xf32>
      %c0_153 = arith.constant 0 : index
      %c0_154 = arith.constant 0 : index
      %c0_155 = arith.constant 0 : index
      %187 = vector.load %arg9[%c0_153, %c0_154, %c0_155] : memref<4x8x8xf32, #tpu.memory_space<vmem>>, vector<4x8x8xf32>
      %188 = vector.broadcast %186 : vector<4x8x1xf32> to vector<4x8x8xf32>
      %189 = arith.mulf %187, %188 : vector<4x8x8xf32>
      %190 = vector.extract_strided_slice %189 {offsets = [0, 0, 0], sizes = [1, 8, 8], strides = [1, 1, 1]} : vector<4x8x8xf32> to vector<1x8x8xf32>
      %191 = vector.shape_cast %190 : vector<1x8x8xf32> to vector<8x8xf32>
      %192 = arith.truncf %191 : vector<8x8xf32> to vector<8x8xbf16>
      %c0_156 = arith.constant 0 : index
      %c0_157 = arith.constant 0 : index
      %c0_158 = arith.constant 0 : index
      %193 = vector.load %arg6[%c0_156, %c0_157, %c0_158] : memref<1x8x32xbf16, #tpu.memory_space<vmem>>, vector<1x8x8xbf16>
      %194 = vector.shape_cast %193 : vector<1x8x8xbf16> to vector<8x8xbf16>
      %195 = vector.shape_cast %192 : vector<8x8xbf16> to vector<1x8x8xbf16>
      tpu.vector_store %arg6[%c0_156, %c0_157, %c0_158], %195 {strides = array<i32>} : memref<1x8x32xbf16, #tpu.memory_space<vmem>>, vector<1x8x8xbf16>,
      %196 = vector.extract_strided_slice %189 {offsets = [1, 0, 0], sizes = [1, 8, 8], strides = [1, 1, 1]} : vector<4x8x8xf32> to vector<1x8x8xf32>
      %197 = vector.shape_cast %196 : vector<1x8x8xf32> to vector<8x8xf32>
      %198 = arith.truncf %197 : vector<8x8xf32> to vector<8x8xbf16>
      %c0_159 = arith.constant 0 : index
      %c0_160 = arith.constant 0 : index
      %c8 = arith.constant 8 : index
      %199 = vector.load %arg6[%c0_159, %c0_160, %c8] : memref<1x8x32xbf16, #tpu.memory_space<vmem>>, vector<1x8x8xbf16>
      %200 = vector.shape_cast %199 : vector<1x8x8xbf16> to vector<8x8xbf16>
      %201 = vector.shape_cast %198 : vector<8x8xbf16> to vector<1x8x8xbf16>
      tpu.vector_store %arg6[%c0_159, %c0_160, %c8], %201 {strides = array<i32>} : memref<1x8x32xbf16, #tpu.memory_space<vmem>>, vector<1x8x8xbf16>,
      %202 = vector.extract_strided_slice %189 {offsets = [2, 0, 0], sizes = [1, 8, 8], strides = [1, 1, 1]} : vector<4x8x8xf32> to vector<1x8x8xf32>
      %203 = vector.shape_cast %202 : vector<1x8x8xf32> to vector<8x8xf32>
      %204 = arith.truncf %203 : vector<8x8xf32> to vector<8x8xbf16>
      %c0_161 = arith.constant 0 : index
      %c0_162 = arith.constant 0 : index
      %c16 = arith.constant 16 : index
      %205 = vector.load %arg6[%c0_161, %c0_162, %c16] : memref<1x8x32xbf16, #tpu.memory_space<vmem>>, vector<1x8x8xbf16>
      %206 = vector.shape_cast %205 : vector<1x8x8xbf16> to vector<8x8xbf16>
      %207 = vector.shape_cast %204 : vector<8x8xbf16> to vector<1x8x8xbf16>
      tpu.vector_store %arg6[%c0_161, %c0_162, %c16], %207 {strides = array<i32>} : memref<1x8x32xbf16, #tpu.memory_space<vmem>>, vector<1x8x8xbf16>,
      %208 = vector.extract_strided_slice %189 {offsets = [3, 0, 0], sizes = [1, 8, 8], strides = [1, 1, 1]} : vector<4x8x8xf32> to vector<1x8x8xf32>
      %209 = vector.shape_cast %208 : vector<1x8x8xf32> to vector<8x8xf32>
      %210 = arith.truncf %209 : vector<8x8xf32> to vector<8x8xbf16>
      %c0_163 = arith.constant 0 : index
      %c0_164 = arith.constant 0 : index
      %c24 = arith.constant 24 : index
      %211 = vector.load %arg6[%c0_163, %c0_164, %c24] : memref<1x8x32xbf16, #tpu.memory_space<vmem>>, vector<1x8x8xbf16>
      %212 = vector.shape_cast %211 : vector<1x8x8xbf16> to vector<8x8xbf16>
      %213 = vector.shape_cast %210 : vector<8x8xbf16> to vector<1x8x8xbf16>
      tpu.vector_store %arg6[%c0_163, %c0_164, %c24], %213 {strides = array<i32>} : memref<1x8x32xbf16, #tpu.memory_space<vmem>>, vector<1x8x8xbf16>,
    } else {
    }
    return
  }
  func.func @transform_0(%arg0: i32, %arg1: i32, %arg2: i32) -> (i32, i32, i32, i32, i32) {
    %c0_i32 = arith.constant 0 : i32
    %c0_i32_0 = arith.constant 0 : i32
    %c0_i32_1 = arith.constant 0 : i32
    %c0_i32_2 = arith.constant 0 : i32
    return %arg0, %arg1, %c0_i32, %c0_i32_0, %c0_i32_1 : i32, i32, i32, i32, i32
  }
  func.func @transform_1(%arg0: i32, %arg1: i32, %arg2: i32) -> (i32, i32, i32, i32, i32) {
    %0 = arith.minsi %arg2, %arg1 : i32
    %c1_i32 = arith.constant 1 : i32
    %c0_i32 = arith.constant 0 : i32
    %c0_i32_0 = arith.constant 0 : i32
    %c0_i32_1 = arith.constant 0 : i32
    return %arg0, %0, %c1_i32, %c0_i32, %c0_i32_0 : i32, i32, i32, i32, i32
  }
  func.func @transform_2(%arg0: i32, %arg1: i32, %arg2: i32) -> (i32, i32, i32, i32, i32) {
    %0 = arith.minsi %arg2, %arg1 : i32
    %c2_i32 = arith.constant 2 : i32
    %c0_i32 = arith.constant 0 : i32
    %c0_i32_0 = arith.constant 0 : i32
    %c0_i32_1 = arith.constant 0 : i32
    return %arg0, %0, %c2_i32, %c0_i32, %c0_i32_0 : i32, i32, i32, i32, i32
  }
  func.func @transform_3(%arg0: i32, %arg1: i32, %arg2: i32) -> (i32, i32, i32) {
    %c0_i32 = arith.constant 0 : i32
    %c0_i32_0 = arith.constant 0 : i32
    return %arg0, %arg1, %c0_i32 : i32, i32, i32
  }
}

</mosaic_0001>

<llo_original>
// kernel: self_attention_pallas.5
$region0: #{self_attention_pallas.5}
  #allocation0 [shape = 'u32[]', space=smem, size = 0x4, offset = 0x4, fixed_abs, tag = 'smem constant byte address 0x4 - core index']
  #allocation1 [shape = 'u32[144,128]{1,0:T(1,128)}', space=vmem, size = 0x12000, scoped, tag = 'internal scratch']
  #allocation2 [shape = 'f32[16,32]{1,0:T(8,128)}', space=vmem, size = 0x2000, scoped, tag = 'scratch operand']
  %s0 = inlined_call_operand.vmem [shape: bf16[16,32], index: 0, kind: input, shape index: {}]
  %s1 = inlined_call_operand.vmem [shape: bf16[32,32], index: 1, kind: input, shape index: {}]
  %s2 = inlined_call_operand.hbm [shape: f32[16,32], index: 2, kind: output, shape index: {}]
  %s3 = sld [smem:[#allocation0]]
  $region26: #{self_attention_pallas.5} parent=0
    _
  %s5 = ssub.s32 1, %s3
  %s6 = scalar_select 0, %s5, %s3
  $region1: #{self_attention_pallas.5} parent=0
    #allocation3 [shape = 'u8[8192]{0}', space=vmem, size = 0x2000, scoped, tag = 'output window, operand 0, single buffered']
    #allocation4 [shape = 's32[1]{0}', space=sflag, size = 0x4, scoped, tag = 'scoped memory for self_attention_pallas.5']
    %7 = vsyncpa [#allocation4], 0
    // Predicated region
    $region2: #{self_attention_pallas.5} parent=1 // pred_check
      _
    $region3: #{self_attention_pallas.5} parent=1 // pred_check_branch
      %9 = sbr.rel (0) target = $region5
    $region4: #{self_attention_pallas.5} parent=1 // pred_region
      _
    $region5: #{self_attention_pallas.5} parent=1 // pred_fallthru
      _
    // Predicated region
    $region6: #{self_attention_pallas.5} parent=1 // pred_check
      _
    $region7: #{self_attention_pallas.5} parent=1 // pred_check_branch
      %11 = sbr.rel (0) target = $region9
    $region8: #{self_attention_pallas.5} parent=1 // pred_region
      _
    $region9: #{self_attention_pallas.5} parent=1 // pred_fallthru
      _
    %p13 = scmp.eq.s32.totalorder 0, 0
    // Predicated region
    $region10: #{self_attention_pallas.5} parent=1 // pred_check
      %p14 = pneg %p13
    $region11: #{self_attention_pallas.5} parent=1 // pred_check_branch
      %16 = sbr.rel (%p14) target = $region13
    $region12: #{self_attention_pallas.5} parent=1 // pred_region
      %vm17 = vcmask 261120
      %18 = vst.msk [vmem:[#allocation2] sm:$0xff] %vm17, 0.0
      %19 = vst.msk [vmem:[#allocation2 + $0x8] sm:$0xff] %vm17, 0.0
    $region13: #{self_attention_pallas.5} parent=1 // pred_fallthru
      _
    %v20 = vld [vmem:[#allocation2] sm:$0xff]
    %v21 = vld [vmem:[#allocation2 + $0x8] sm:$0xff]
    %v22 = vld [vmem:[%s0] sm:$0xf]
    %v23 = vld [vmem:[%s0 + $0x4] sm:$0xf]
    %v24 = vld [vmem:[%s1] sm:$0xf]
    %v25 = vld [vmem:[%s1 + $0x4] sm:$0xf]
    %v26 = vld [vmem:[%s1 + $0x8] sm:$0xf]
    %v27 = vld [vmem:[%s1 + $0xc] sm:$0xf]
    %v30 = vunpack.c.l.b16 %v22
    %v31 = vunpack.c.l.b16 %v23
    %v32 = vpack.c.b16 %v31, %v30
    %v37 = vunpack.c.l.b16 %v24
    %v38 = vunpack.c.l.b16 %v25
    %v39 = vunpack.c.l.b16 %v26
    %v40 = vunpack.c.l.b16 %v27
    %v41 = vpack.c.b16 %v38, %v37
    %v42 = vpack.c.b16 %v40, %v39
    %vm45 = vcmask 261120
    %v47 = vsel %vm45, %v32, 0
    %49 = vmatprep.subr.bf16.mxu0 0
    %50 = vmatpush1.bf16.msra.mxu0 0
    %51 = vmatprep.subr.bf16.mxu0 0
    %52 = vmatpush1.bf16.msra.mxu0 0
    %53 = vmatprep.subr.bf16.mxu0 0
    %54 = vmatpush1.bf16.msra.mxu0 0
    %55 = vmatprep.subr.bf16.mxu0 0
    %56 = vmatpush1.bf16.msra.mxu0 0
    %57 = vmatprep.subr.bf16.mxu0 0
    %58 = vmatpush1.bf16.msra.mxu0 0
    %59 = vmatprep.subr.bf16.mxu0 0
    %60 = vmatpush1.bf16.msra.mxu0 0
    %61 = vmatprep.subr.bf16.mxu0 0
    %62 = vmatpush1.bf16.msra.mxu0 %v42
    %63 = vmatprep.subr.bf16.mxu0 0
    %64 = vmatpush1.bf16.msra.mxu0 %v41
    %65 = vmatprep.subr.bf16.mxu0 0
    %66 = vmatpush2.bf16.msra.mxu0 0
    %67 = vmatprep.subr.bf16.mxu0 0
    %68 = vmatpush2.bf16.msra.mxu0 0
    %69 = vmatprep.subr.bf16.mxu0 0
    %70 = vmatpush2.bf16.msra.mxu0 0
    %71 = vmatprep.subr.bf16.mxu0 0
    %72 = vmatpush2.bf16.msra.mxu0 0
    %73 = vmatprep.subr.bf16.mxu0 0
    %74 = vmatpush2.bf16.msra.mxu0 0
    %75 = vmatprep.subr.bf16.mxu0 0
    %76 = vmatpush2.bf16.msra.mxu0 0
    %77 = vmatprep.subr.bf16.mxu0 0
    %78 = vmatpush2.bf16.msra.mxu0 0
    %79 = vmatprep.subr.bf16.mxu0 0
    %80 = vmatpush2.bf16.msra.mxu0 0
    %81 = vmatprep.mubr.bf16.mxu0 0
    %82 = vmatmul.mubr.bf16.gmra.mxu0 %v47
    %v83 = vpop.f32.mrf.mxu0
    %v84 = vadd.f32 0.0, %v83
    %v85 = vpop.f32.mrf.mxu0
    %v86 = vpop.f32.mrf.mxu0
    %v87 = vadd.f32 0.0, %v86
    %v88 = vpop.f32.mrf.mxu0
    %89 = vdwg.mxu0
    %v90 = vadd.f32 %v20, %v84
    %v91 = vadd.f32 %v21, %v87
    %92 = vst.msk [vmem:[#allocation2] sm:$0xff] %vm45, %v90
    %93 = vst.msk [vmem:[#allocation2 + $0x8] sm:$0xff] %vm45, %v91
    // Predicated region
    $region14: #{self_attention_pallas.5} parent=1 // pred_check
      %p94 = pneg %p13
    $region15: #{self_attention_pallas.5} parent=1 // pred_check_branch
      %96 = sbr.rel (%p94) target = $region17
    $region16: #{self_attention_pallas.5} parent=1 // pred_region
      %v97 = vld [vmem:[#allocation2] sm:$0xff]
      %v98 = vld [vmem:[#allocation2 + $0x8] sm:$0xff]
      %99 = vst.msk [vmem:[#allocation3] sm:$0xff] %vm45, %v97
      %100 = vst.msk [vmem:[#allocation3 + $0x8] sm:$0xff] %vm45, %v98
    $region17: #{self_attention_pallas.5} parent=1 // pred_fallthru
      _
    // Predicated region
    $region18: #{self_attention_pallas.5} parent=1 // pred_check
      _
    $region19: #{self_attention_pallas.5} parent=1 // pred_check_branch
      %102 = sbr.rel (0) target = $region21
    $region20: #{self_attention_pallas.5} parent=1 // pred_region
      %s104 = ssub.s32 256, 256
      %105 = vsyncadd [#allocation4], %s104
      %s106 = sshll.u32 [#allocation3], 4
      %s107 = int_to_ptr.vmem [resolvable:$true] %s106
      %112 = dma.vmem_to_hbm [thread:$0]  %s107, 256, %s2, [#allocation4], 128, 128, 8
    $region21: #{self_attention_pallas.5} parent=1 // pred_fallthru
      _
    // Predicated region
    $region22: #{self_attention_pallas.5} parent=1 // pred_check
      _
    $region23: #{self_attention_pallas.5} parent=1 // pred_check_branch
      %114 = sbr.rel (0) target = $region25
    $region24: #{self_attention_pallas.5} parent=1 // pred_region
      %115 = dma.done [#allocation4], 256
    $region25: #{self_attention_pallas.5} parent=1 // pred_fallthru
      _
    %116 = vsyncpa [#allocation4], 1

// kernel: self_attention_pallas.3
$region0: #{self_attention_pallas.3}
  #allocation0 [shape = 'u32[]', space=smem, size = 0x4, offset = 0x4, fixed_abs, tag = 'smem constant byte address 0x4 - core index']
  #allocation1 [shape = 'u32[144,128]{1,0:T(1,128)}', space=vmem, size = 0x12000, scoped, tag = 'internal scratch']
  #allocation2 [shape = 'f32[16,96]{1,0:T(8,128)}', space=vmem, size = 0x2000, scoped, tag = 'scratch operand']
  %s0 = inlined_call_operand.vmem [shape: bf16[16,32], index: 0, kind: input, shape index: {}]
  %s1 = inlined_call_operand.vmem [shape: bf16[32,96], index: 1, kind: input, shape index: {}]
  %s2 = inlined_call_operand.vmem [shape: bf16[16,96], index: 2, kind: output, shape index: {}]
  %s3 = sld [smem:[#allocation0]]
  $region26: #{self_attention_pallas.3} parent=0
    _
  %s5 = ssub.s32 1, %s3
  %s6 = scalar_select 0, %s5, %s3
  // Predicated region
  $region2: #{self_attention_pallas.3} parent=0 // pred_check
    _
  $region3: #{self_attention_pallas.3} parent=0 // pred_check_branch
    %8 = sbr.rel (0) target = $region5
  $region4: #{self_attention_pallas.3} parent=0 // pred_region
    _
  $region5: #{self_attention_pallas.3} parent=0 // pred_fallthru
    _
  // Predicated region
  $region6: #{self_attention_pallas.3} parent=0 // pred_check
    _
  $region7: #{self_attention_pallas.3} parent=0 // pred_check_branch
    %10 = sbr.rel (0) target = $region9
  $region8: #{self_attention_pallas.3} parent=0 // pred_region
    _
  $region9: #{self_attention_pallas.3} parent=0 // pred_fallthru
    _
  %p12 = scmp.eq.s32.totalorder 0, 0
  // Predicated region
  $region10: #{self_attention_pallas.3} parent=0 // pred_check
    %p13 = pneg %p12
  $region11: #{self_attention_pallas.3} parent=0 // pred_check_branch
    %15 = sbr.rel (%p13) target = $region13
  $region12: #{self_attention_pallas.3} parent=0 // pred_region
    %vm16 = vcmask 785408
    %17 = vst.msk [vmem:[#allocation2] sm:$0xff] %vm16, 0.0
    %18 = vst.msk [vmem:[#allocation2 + $0x8] sm:$0xff] %vm16, 0.0
  $region13: #{self_attention_pallas.3} parent=0 // pred_fallthru
    _
  %v19 = vld [vmem:[#allocation2] sm:$0xff]
  %v20 = vld [vmem:[#allocation2 + $0x8] sm:$0xff]
  %v21 = vld [vmem:[%s0] sm:$0xf]
  %v22 = vld [vmem:[%s0 + $0x4] sm:$0xf]
  %v23 = vld [vmem:[%s1] sm:$0xf]
  %v24 = vld [vmem:[%s1 + $0x4] sm:$0xf]
  %v25 = vld [vmem:[%s1 + $0x8] sm:$0xf]
  %v26 = vld [vmem:[%s1 + $0xc] sm:$0xf]
  %v29 = vunpack.c.l.b16 %v21
  %v30 = vunpack.c.l.b16 %v22
  %v31 = vpack.c.b16 %v30, %v29
  %v36 = vunpack.c.l.b16 %v23
  %v37 = vunpack.c.l.b16 %v24
  %v38 = vunpack.c.l.b16 %v25
  %v39 = vunpack.c.l.b16 %v26
  %v40 = vpack.c.b16 %v37, %v36
  %v41 = vpack.c.b16 %v39, %v38
  %vm44 = vcmask 261120
  %v46 = vsel %vm44, %v31, 0
  %48 = vmatprep.subr.bf16.mxu0 0
  %49 = vmatpush1.bf16.msra.mxu0 0
  %50 = vmatprep.subr.bf16.mxu0 0
  %51 = vmatpush1.bf16.msra.mxu0 0
  %52 = vmatprep.subr.bf16.mxu0 0
  %53 = vmatpush1.bf16.msra.mxu0 0
  %54 = vmatprep.subr.bf16.mxu0 0
  %55 = vmatpush1.bf16.msra.mxu0 0
  %56 = vmatprep.subr.bf16.mxu0 0
  %57 = vmatpush1.bf16.msra.mxu0 0
  %58 = vmatprep.subr.bf16.mxu0 0
  %59 = vmatpush1.bf16.msra.mxu0 0
  %60 = vmatprep.subr.bf16.mxu0 0
  %61 = vmatpush1.bf16.msra.mxu0 %v41
  %62 = vmatprep.subr.bf16.mxu0 0
  %63 = vmatpush1.bf16.msra.mxu0 %v40
  %64 = vmatprep.subr.bf16.mxu0 0
  %65 = vmatpush2.bf16.msra.mxu0 0
  %66 = vmatprep.subr.bf16.mxu0 0
  %67 = vmatpush2.bf16.msra.mxu0 0
  %68 = vmatprep.subr.bf16.mxu0 0
  %69 = vmatpush2.bf16.msra.mxu0 0
  %70 = vmatprep.subr.bf16.mxu0 0
  %71 = vmatpush2.bf16.msra.mxu0 0
  %72 = vmatprep.subr.bf16.mxu0 0
  %73 = vmatpush2.bf16.msra.mxu0 0
  %74 = vmatprep.subr.bf16.mxu0 0
  %75 = vmatpush2.bf16.msra.mxu0 0
  %76 = vmatprep.subr.bf16.mxu0 0
  %77 = vmatpush2.bf16.msra.mxu0 0
  %78 = vmatprep.subr.bf16.mxu0 0
  %79 = vmatpush2.bf16.msra.mxu0 0
  %80 = vmatprep.mubr.bf16.mxu0 0
  %81 = vmatmul.mubr.bf16.gmra.mxu0 %v46
  %v82 = vpop.f32.mrf.mxu0
  %v83 = vadd.f32 0.0, %v82
  %v84 = vpop.f32.mrf.mxu0
  %v85 = vpop.f32.mrf.mxu0
  %v86 = vadd.f32 0.0, %v85
  %v87 = vpop.f32.mrf.mxu0
  %88 = vdwg.mxu0
  %v89 = vadd.f32 %v19, %v83
  %v90 = vadd.f32 %v20, %v86
  %vm91 = vcmask 785408
  %92 = vst.msk [vmem:[#allocation2] sm:$0xff] %vm91, %v89
  %93 = vst.msk [vmem:[#allocation2 + $0x8] sm:$0xff] %vm91, %v90
  // Predicated region
  $region14: #{self_attention_pallas.3} parent=0 // pred_check
    %p94 = pneg %p12
  $region15: #{self_attention_pallas.3} parent=0 // pred_check_branch
    %96 = sbr.rel (%p94) target = $region17
  $region16: #{self_attention_pallas.3} parent=0 // pred_region
    %v97 = vld [vmem:[#allocation2] sm:$0xff]
    %v98 = vld [vmem:[#allocation2 + $0x8] sm:$0xff]
    %v99 = vpack.c.bf16 %v98, %v97
    %v101 = vunpack.c.l.b16 %v99
    %v102 = vunpack.c.h.b16 %v99
    %v103 = vpack.c.b16 %v101, %v101
    %v104 = vpack.c.b16 %v102, %v102
    %vm107 = vcmask 781312
    %108 = vst.msk [vmem:[%s2] sm:$0xf] %vm107, %v103
    %109 = vst.msk [vmem:[%s2 + $0x4] sm:$0xf] %vm107, %v104
  $region17: #{self_attention_pallas.3} parent=0 // pred_fallthru
    _
  // Predicated region
  $region18: #{self_attention_pallas.3} parent=0 // pred_check
    _
  $region19: #{self_attention_pallas.3} parent=0 // pred_check_branch
    %111 = sbr.rel (0) target = $region21
  $region20: #{self_attention_pallas.3} parent=0 // pred_region
    _
  $region21: #{self_attention_pallas.3} parent=0 // pred_fallthru
    _
  // Predicated region
  $region22: #{self_attention_pallas.3} parent=0 // pred_check
    _
  $region23: #{self_attention_pallas.3} parent=0 // pred_check_branch
    %113 = sbr.rel (0) target = $region25
  $region24: #{self_attention_pallas.3} parent=0 // pred_region
    _
  $region25: #{self_attention_pallas.3} parent=0 // pred_fallthru
    _

// kernel: self_attention_pallas.4
$region0: #{self_attention_pallas.4}
  #allocation0 [shape = 'u32[]', space=smem, size = 0x4, offset = 0x4, fixed_abs, tag = 'smem constant byte address 0x4 - core index']
  #allocation1 [shape = 'u32[144,128]{1,0:T(1,128)}', space=vmem, size = 0x12000, scoped, tag = 'internal scratch']
  #allocation2 [shape = 'f32[4,8,1]{2,1,0:T(8,128)}', space=vmem, size = 0x4000, scoped, tag = 'scratch operand']
  #allocation3 [shape = 'f32[4,8,1]{2,1,0:T(8,128)}', space=vmem, size = 0x4000, scoped, tag = 'scratch operand']
  #allocation4 [shape = 'f32[4,8,8]{2,1,0:T(8,128)}', space=vmem, size = 0x4000, scoped, tag = 'scratch operand']
  %s0 = inlined_call_operand.vmem [shape: bf16[2,8,3,4,8], index: 0, kind: input, shape index: {}, may-alias: {0,1,2}]
  %s1 = inlined_call_operand.vmem [shape: bf16[2,8,3,4,8], index: 1, kind: input, shape index: {}, may-alias: {0,1,2}]
  %s2 = inlined_call_operand.vmem [shape: bf16[2,8,3,4,8], index: 2, kind: input, shape index: {}, may-alias: {0,1,2}]
  %s3 = inlined_call_operand.vmem [shape: bf16[2,8,32], index: 3, kind: output, shape index: {}]
  %s4 = sld [smem:[#allocation0]]
  $region180: #{self_attention_pallas.4} parent=0
    _
  %s6 = ssub.s32 1, %s4
  %s7 = scalar_select 0, %s6, %s4
  $region1: #{self_attention_pallas.4} parent=0
    #allocation5 [shape = 'u8[16384]{0}', space=vmem, size = 0x4000, scoped, tag = 'input window, operand 0']
    #allocation6 [shape = 'u8[16384]{0}', space=vmem, size = 0x4000, scoped, tag = 'input window, operand 1']
    #allocation7 [shape = 'u8[16384]{0}', space=vmem, size = 0x4000, scoped, tag = 'input window, operand 2']
    loop: start=0, step=1, limit=4
    $region2: #{self_attention_pallas.4} parent=1 // loop_pre_header
      _
    $region3: #{self_attention_pallas.4} parent=1 // loop_header
      %s9 = sphi 0, %s13
      %p10 = scmp.ge.s32.totalorder %s9, 4
      %s16 = sphi 0, %s35
      %s17 = sphi 0, %s31
      %s18 = sphi 0, %s27
      %s19 = sphi 0, %s16
      %s20 = sphi 0, %s17
      %s21 = sphi 0, %s18
      %s22 = sphi 0, %s19
      %s23 = sphi 0, %s20
      %s24 = sphi 0, %s21
      %s40 = sphi 0, %s42
      %s43 = sphi 0, %s40
      %s44 = sphi 0, %s43
      %s60 = sphi 0, %s44
      %s72 = sphi 0, %s74
      %s75 = sphi 0, %s72
      %s76 = sphi 0, %s75
      %s92 = sphi 0, %s76
      %s104 = sphi 0, %s106
      %s107 = sphi 0, %s104
      %s108 = sphi 0, %s107
      %s124 = sphi 0, %s108
      %s132 = sphi 0, %s134
      %s135 = sphi 0, %s132
      %s136 = sphi 0, %s135
      %s152 = sphi 0, %s136
    $region4: #{self_attention_pallas.4} parent=1 // loop_header_branch
      %12 = sbr.rel (%p10) target = $region8
    $region5: #{self_attention_pallas.4} parent=1 // loop_body
      %s14 = ssub.s32 %s9, 1
      %s15 = ssub.s32 %s9, 2
      %s25 = sadd.s32 1, %s18
      %p26 = scmp.ge.s32.totalorder %s25, 1
      %s27 = scalar_select %p26, 0, %s25
      %s28 = sadd.s32 1, %s17
      %s29 = scalar_select %p26, %s28, %s17
      %p30 = scmp.ge.s32.totalorder %s29, 1
      %s31 = scalar_select %p30, 0, %s29
      %s32 = sadd.s32 1, %s16
      %s33 = scalar_select %p30, %s32, %s16
      %p34 = scmp.ge.s32.totalorder %s33, 2
      %s35 = scalar_select %p34, 0, %s33
      %s36 = ssub.s32 %s16, %s35
      %s37 = ssub.s32 %s17, %s31
      %s38 = sor.u32 %s36, %s37
      %p39 = scmp.eq.s32.totalorder %s38, 0
      %s41 = sadd.s32 %s40, 1
      %s42 = scalar_select %p39, %s40, %s41
      %p45 = pneg %p39
      %p46 = scmp.eq.s32.totalorder %s9, 1
      %p47 = por %p45, %p46
      %p48 = scmp.ne.s32.totalorder %s40, %s43
      %p49 = scmp.eq.s32.totalorder %s9, 0
      %p50 = por %p48, %p49
      %p51 = scmp.ne.s32.totalorder %s40, %s43
      %p52 = scmp.eq.s32.totalorder %s14, 1
      %p53 = por %p51, %p52
      %p54 = scmp.ne.s32.totalorder %s43, %s44
      %p55 = scmp.eq.s32.totalorder %s14, 0
      %p56 = por %p54, %p55
      %p57 = scmp.ne.s32.totalorder %s43, %s44
      %p58 = scmp.eq.s32.totalorder %s15, 1
      %p59 = por %p57, %p58
      %p61 = scmp.ne.s32.totalorder %s44, %s60
      %p62 = scmp.eq.s32.totalorder %s15, 0
      %p63 = por %p61, %p62
      %p64 = scmp.lt.s32.totalorder %s18, %s17
      %s65 = scalar_select %p64, %s18, %s17
      %p66 = scmp.lt.s32.totalorder %s27, %s31
      %s67 = scalar_select %p66, %s27, %s31
      %s68 = ssub.s32 %s16, %s35
      %s69 = ssub.s32 %s65, %s67
      %s70 = sor.u32 %s68, %s69
      %p71 = scmp.eq.s32.totalorder %s70, 0
      %s73 = sadd.s32 %s72, 1
      %s74 = scalar_select %p71, %s72, %s73
      %p77 = pneg %p71
      %p78 = scmp.eq.s32.totalorder %s9, 1
      %p79 = por %p77, %p78
      %p80 = scmp.ne.s32.totalorder %s72, %s75
      %p81 = scmp.eq.s32.totalorder %s9, 0
      %p82 = por %p80, %p81
      %p83 = scmp.ne.s32.totalorder %s72, %s75
      %p84 = scmp.eq.s32.totalorder %s14, 1
      %p85 = por %p83, %p84
      %p86 = scmp.ne.s32.totalorder %s75, %s76
      %p87 = scmp.eq.s32.totalorder %s14, 0
      %p88 = por %p86, %p87
      %p89 = scmp.ne.s32.totalorder %s75, %s76
      %p90 = scmp.eq.s32.totalorder %s15, 1
      %p91 = por %p89, %p90
      %p93 = scmp.ne.s32.totalorder %s76, %s92
      %p94 = scmp.eq.s32.totalorder %s15, 0
      %p95 = por %p93, %p94
      %p96 = scmp.lt.s32.totalorder %s18, %s17
      %s97 = scalar_select %p96, %s18, %s17
      %p98 = scmp.lt.s32.totalorder %s27, %s31
      %s99 = scalar_select %p98, %s27, %s31
      %s100 = ssub.s32 %s16, %s35
      %s101 = ssub.s32 %s97, %s99
      %s102 = sor.u32 %s100, %s101
      %p103 = scmp.eq.s32.totalorder %s102, 0
      %s105 = sadd.s32 %s104, 1
      %s106 = scalar_select %p103, %s104, %s105
      %p109 = pneg %p103
      %p110 = scmp.eq.s32.totalorder %s9, 1
      %p111 = por %p109, %p110
      %p112 = scmp.ne.s32.totalorder %s104, %s107
      %p113 = scmp.eq.s32.totalorder %s9, 0
      %p114 = por %p112, %p113
      %p115 = scmp.ne.s32.totalorder %s104, %s107
      %p116 = scmp.eq.s32.totalorder %s14, 1
      %p117 = por %p115, %p116
      %p118 = scmp.ne.s32.totalorder %s107, %s108
      %p119 = scmp.eq.s32.totalorder %s14, 0
      %p120 = por %p118, %p119
      %p121 = scmp.ne.s32.totalorder %s107, %s108
      %p122 = scmp.eq.s32.totalorder %s15, 1
      %p123 = por %p121, %p122
      %p125 = scmp.ne.s32.totalorder %s108, %s124
      %p126 = scmp.eq.s32.totalorder %s15, 0
      %p127 = por %p125, %p126
      %s128 = ssub.s32 %s16, %s35
      %s129 = ssub.s32 %s17, %s31
      %s130 = sor.u32 %s128, %s129
      %p131 = scmp.eq.s32.totalorder %s130, 0
      %s133 = sadd.s32 %s132, 1
      %s134 = scalar_select %p131, %s132, %s133
      %p137 = pneg %p131
      %p138 = scmp.eq.s32.totalorder %s9, 1
      %p139 = por %p137, %p138
      %p140 = scmp.ne.s32.totalorder %s132, %s135
      %p141 = scmp.eq.s32.totalorder %s9, 0
      %p142 = por %p140, %p141
      %p143 = scmp.ne.s32.totalorder %s132, %s135
      %p144 = scmp.eq.s32.totalorder %s14, 1
      %p145 = por %p143, %p144
      %p146 = scmp.ne.s32.totalorder %s135, %s136
      %p147 = scmp.eq.s32.totalorder %s14, 0
      %p148 = por %p146, %p147
      %p149 = scmp.ne.s32.totalorder %s135, %s136
      %p150 = scmp.eq.s32.totalorder %s15, 1
      %p151 = por %p149, %p150
      %p153 = scmp.ne.s32.totalorder %s136, %s152
      %p154 = scmp.eq.s32.totalorder %s15, 0
      %p155 = por %p153, %p154
      %p156 = scmp.le.s32.totalorder 1, %s9
      %p157 = scmp.lt.s32.totalorder %s9, 3
      %p158 = pnand %p156, %p157
      %p159 = pneg %p158
      // Predicated region
      $region9: #{self_attention_pallas.4} parent=5 // pred_check
        _
      $region10: #{self_attention_pallas.4} parent=5 // pred_check_branch
        %161 = sbr.rel (%p158) target = $region12
      $region11: #{self_attention_pallas.4} parent=5 // pred_region
        %s162 = ssub.s32 %s9, 1
      $region12: #{self_attention_pallas.4} parent=5 // pred_fallthru
        _
      %p163 = scmp.lt.s32.totalorder %s9, 2
      // Predicated region
      $region13: #{self_attention_pallas.4} parent=5 // pred_check
        %p164 = pneg %p163
      $region14: #{self_attention_pallas.4} parent=5 // pred_check_branch
        %166 = sbr.rel (%p164) target = $region16
      $region15: #{self_attention_pallas.4} parent=5 // pred_region
        // Predicated region
        $region17: #{self_attention_pallas.4} parent=15 // pred_check
          %p167 = pneg %p50
        $region18: #{self_attention_pallas.4} parent=15 // pred_check_branch
          %169 = sbr.rel (%p167) target = $region20
        $region19: #{self_attention_pallas.4} parent=15 // pred_region
          %s170 = sand.u32 %s40, 1
          %s171 = sand.u32 %s40, 1
          %s172 = smul.addr %s171, 16
          %s173 = scalar_lea.vmem [#allocation5], %s172
          %s174 = smul.u32 8, %s17
          %s175 = smul.addr %s174, 3
          %s176 = smul.addr %s16, 24
          %s177 = sadd.s32 %s175, %s176
          %s178 = smul.addr %s177, 2
          %s179 = scalar_lea.vmem %s0, %s178
          // Predicated region
          $region21: #{self_attention_pallas.4} parent=19 // pred_check
            _
          $region22: #{self_attention_pallas.4} parent=19 // pred_check_branch
            %181 = sbr.rel (0) target = $region24
          $region23: #{self_attention_pallas.4} parent=19 // pred_region
            // Predicated region
            $region25: #{self_attention_pallas.4} parent=23 // pred_check
              _
            $region26: #{self_attention_pallas.4} parent=23 // pred_check_branch
              %183 = sbr.rel target = $region28
            $region27: #{self_attention_pallas.4} parent=23 // pred_region
              // Predicated region
              $region40: #{self_attention_pallas.4} parent=27 // pred_check
                _
              $region41: #{self_attention_pallas.4} parent=27 // pred_check_branch
                %213 = sbr.rel (0) target = $region43
              $region42: #{self_attention_pallas.4} parent=27 // pred_region
                loop: start=0, step=1, limit=1
                $region44: #{self_attention_pallas.4} parent=42 // loop_pre_header
                  _
                $region45: #{self_attention_pallas.4} parent=42 // loop_header
                  %s215 = sphi 0, %s219
                  %p216 = scmp.ge.s32.totalorder %s215, 1
                  %s220 = sphi %s179, %s179
                  %s221 = sphi %s173, %s173
                $region46: #{self_attention_pallas.4} parent=42 // loop_header_branch
                  %218 = sbr.rel (%p216) target = $region50
                $region47: #{self_attention_pallas.4} parent=42 // loop_body
                  _
                $region48: #{self_attention_pallas.4} parent=42 // loop_footer
                  %s219 = sadd.s32 1, %s215
                $region49: #{self_attention_pallas.4} parent=42 // loop_footer_branch
                  %214 = sbr.rel target = $region45
                $region50: #{self_attention_pallas.4} parent=42 // loop_exit
                  _
                %s223 = ssub.s32 4, 1
                loop: start=0, step=1, limit=1
                $region51: #{self_attention_pallas.4} parent=42 // loop_pre_header
                  _
                $region52: #{self_attention_pallas.4} parent=42 // loop_header
                  %s225 = sphi 0, %s229
                  %p226 = scmp.ge.s32.totalorder %s225, 1
                  %s230 = sphi %s179, %s179
                  %s231 = sphi %s173, %s173
                $region53: #{self_attention_pallas.4} parent=42 // loop_header_branch
                  %228 = sbr.rel (%p226) target = $region57
                $region54: #{self_attention_pallas.4} parent=42 // loop_body
                  %v232 = vld [vmem:[%s230] sm:%s223]
                  %233 = vst [vmem:[%s231] sm:%s223] %v232
                  %v234 = vld [vmem:[%s230 + $0x6] sm:%s223]
                  %235 = vst [vmem:[%s231 + $0x2] sm:%s223] %v234
                  %v236 = vld [vmem:[%s230 + $0xc] sm:%s223]
                  %237 = vst [vmem:[%s231 + $0x4] sm:%s223] %v236
                  %v238 = vld [vmem:[%s230 + $0x12] sm:%s223]
                  %239 = vst [vmem:[%s231 + $0x6] sm:%s223] %v238
                  %v240 = vld [vmem:[%s230 + $0x18] sm:%s223]
                  %241 = vst [vmem:[%s231 + $0x8] sm:%s223] %v240
                  %v242 = vld [vmem:[%s230 + $0x1e] sm:%s223]
                  %243 = vst [vmem:[%s231 + $0xa] sm:%s223] %v242
                  %v244 = vld [vmem:[%s230 + $0x24] sm:%s223]
                  %245 = vst [vmem:[%s231 + $0xc] sm:%s223] %v244
                  %v246 = vld [vmem:[%s230 + $0x2a] sm:%s223]
                  %247 = vst [vmem:[%s231 + $0xe] sm:%s223] %v246
                $region55: #{self_attention_pallas.4} parent=42 // loop_footer
                  %s229 = sadd.s32 1, %s225
                $region56: #{self_attention_pallas.4} parent=42 // loop_footer_branch
                  %224 = sbr.rel target = $region52
                $region57: #{self_attention_pallas.4} parent=42 // loop_exit
                  _
              $region43: #{self_attention_pallas.4} parent=27 // pred_fallthru
                _
            $region28: #{self_attention_pallas.4} parent=23 // pred_fallthru
              _
            // Predicated region
            $region29: #{self_attention_pallas.4} parent=23 // pred_check
              _
            $region30: #{self_attention_pallas.4} parent=23 // pred_check_branch
              %185 = sbr.rel (0) target = $region32
            $region31: #{self_attention_pallas.4} parent=23 // pred_region
              %s187 = ssub.s32 4, 1
              loop: start=0, step=1, limit=1
              $region33: #{self_attention_pallas.4} parent=31 // loop_pre_header
                _
              $region34: #{self_attention_pallas.4} parent=31 // loop_header
                %s189 = sphi 0, %s193
                %p190 = scmp.ge.s32.totalorder %s189, 1
                %s194 = sphi %s179, %s179
                %s195 = sphi %s173, %s173
              $region35: #{self_attention_pallas.4} parent=31 // loop_header_branch
                %192 = sbr.rel (%p190) target = $region39
              $region36: #{self_attention_pallas.4} parent=31 // loop_body
                %v196 = vld [vmem:[%s194] sm:%s187]
                %197 = vst [vmem:[%s195] sm:%s187] %v196
                %v198 = vld [vmem:[%s194 + $0x6] sm:%s187]
                %199 = vst [vmem:[%s195 + $0x2] sm:%s187] %v198
                %v200 = vld [vmem:[%s194 + $0xc] sm:%s187]
                %201 = vst [vmem:[%s195 + $0x4] sm:%s187] %v200
                %v202 = vld [vmem:[%s194 + $0x12] sm:%s187]
                %203 = vst [vmem:[%s195 + $0x6] sm:%s187] %v202
                %v204 = vld [vmem:[%s194 + $0x18] sm:%s187]
                %205 = vst [vmem:[%s195 + $0x8] sm:%s187] %v204
                %v206 = vld [vmem:[%s194 + $0x1e] sm:%s187]
                %207 = vst [vmem:[%s195 + $0xa] sm:%s187] %v206
                %v208 = vld [vmem:[%s194 + $0x24] sm:%s187]
                %209 = vst [vmem:[%s195 + $0xc] sm:%s187] %v208
                %v210 = vld [vmem:[%s194 + $0x2a] sm:%s187]
                %211 = vst [vmem:[%s195 + $0xe] sm:%s187] %v210
              $region37: #{self_attention_pallas.4} parent=31 // loop_footer
                %s193 = sadd.s32 1, %s189
              $region38: #{self_attention_pallas.4} parent=31 // loop_footer_branch
                %188 = sbr.rel target = $region34
              $region39: #{self_attention_pallas.4} parent=31 // loop_exit
                _
            $region32: #{self_attention_pallas.4} parent=23 // pred_fallthru
              _
          $region24: #{self_attention_pallas.4} parent=19 // pred_fallthru
            _
          %248 = vnop
        $region20: #{self_attention_pallas.4} parent=15 // pred_fallthru
          _
        // Predicated region
        $region58: #{self_attention_pallas.4} parent=15 // pred_check
          %p249 = pneg %p82
        $region59: #{self_attention_pallas.4} parent=15 // pred_check_branch
          %251 = sbr.rel (%p249) target = $region61
        $region60: #{self_attention_pallas.4} parent=15 // pred_region
          %s252 = sand.u32 %s72, 1
          %s253 = sand.u32 %s72, 1
          %s254 = smul.addr %s253, 16
          %s255 = scalar_lea.vmem [#allocation6], %s254
          %p256 = scmp.lt.s32.totalorder %s18, %s17
          %s257 = scalar_select %p256, %s18, %s17
          %s258 = smul.u32 8, %s257
          %s259 = smul.addr %s258, 3
          %s260 = sadd.s32 1, %s259
          %s261 = smul.addr %s16, 24
          %s262 = sadd.s32 %s260, %s261
          %s263 = smul.addr %s262, 2
          %s264 = scalar_lea.vmem %s1, %s263
          // Predicated region
          $region62: #{self_attention_pallas.4} parent=60 // pred_check
            _
          $region63: #{self_attention_pallas.4} parent=60 // pred_check_branch
            %266 = sbr.rel (0) target = $region65
          $region64: #{self_attention_pallas.4} parent=60 // pred_region
            // Predicated region
            $region66: #{self_attention_pallas.4} parent=64 // pred_check
              _
            $region67: #{self_attention_pallas.4} parent=64 // pred_check_branch
              %268 = sbr.rel target = $region69
            $region68: #{self_attention_pallas.4} parent=64 // pred_region
              // Predicated region
              $region81: #{self_attention_pallas.4} parent=68 // pred_check
                _
              $region82: #{self_attention_pallas.4} parent=68 // pred_check_branch
                %298 = sbr.rel (0) target = $region84
              $region83: #{self_attention_pallas.4} parent=68 // pred_region
                loop: start=0, step=1, limit=1
                $region85: #{self_attention_pallas.4} parent=83 // loop_pre_header
                  _
                $region86: #{self_attention_pallas.4} parent=83 // loop_header
                  %s300 = sphi 0, %s304
                  %p301 = scmp.ge.s32.totalorder %s300, 1
                  %s305 = sphi %s264, %s264
                  %s306 = sphi %s255, %s255
                $region87: #{self_attention_pallas.4} parent=83 // loop_header_branch
                  %303 = sbr.rel (%p301) target = $region91
                $region88: #{self_attention_pallas.4} parent=83 // loop_body
                  _
                $region89: #{self_attention_pallas.4} parent=83 // loop_footer
                  %s304 = sadd.s32 1, %s300
                $region90: #{self_attention_pallas.4} parent=83 // loop_footer_branch
                  %299 = sbr.rel target = $region86
                $region91: #{self_attention_pallas.4} parent=83 // loop_exit
                  _
                %s308 = ssub.s32 4, 1
                loop: start=0, step=1, limit=1
                $region92: #{self_attention_pallas.4} parent=83 // loop_pre_header
                  _
                $region93: #{self_attention_pallas.4} parent=83 // loop_header
                  %s310 = sphi 0, %s314
                  %p311 = scmp.ge.s32.totalorder %s310, 1
                  %s315 = sphi %s264, %s264
                  %s316 = sphi %s255, %s255
                $region94: #{self_attention_pallas.4} parent=83 // loop_header_branch
                  %313 = sbr.rel (%p311) target = $region98
                $region95: #{self_attention_pallas.4} parent=83 // loop_body
                  %v317 = vld [vmem:[%s315] sm:%s308]
                  %318 = vst [vmem:[%s316] sm:%s308] %v317
                  %v319 = vld [vmem:[%s315 + $0x6] sm:%s308]
                  %320 = vst [vmem:[%s316 + $0x2] sm:%s308] %v319
                  %v321 = vld [vmem:[%s315 + $0xc] sm:%s308]
                  %322 = vst [vmem:[%s316 + $0x4] sm:%s308] %v321
                  %v323 = vld [vmem:[%s315 + $0x12] sm:%s308]
                  %324 = vst [vmem:[%s316 + $0x6] sm:%s308] %v323
                  %v325 = vld [vmem:[%s315 + $0x18] sm:%s308]
                  %326 = vst [vmem:[%s316 + $0x8] sm:%s308] %v325
                  %v327 = vld [vmem:[%s315 + $0x1e] sm:%s308]
                  %328 = vst [vmem:[%s316 + $0xa] sm:%s308] %v327
                  %v329 = vld [vmem:[%s315 + $0x24] sm:%s308]
                  %330 = vst [vmem:[%s316 + $0xc] sm:%s308] %v329
                  %v331 = vld [vmem:[%s315 + $0x2a] sm:%s308]
                  %332 = vst [vmem:[%s316 + $0xe] sm:%s308] %v331
                $region96: #{self_attention_pallas.4} parent=83 // loop_footer
                  %s314 = sadd.s32 1, %s310
                $region97: #{self_attention_pallas.4} parent=83 // loop_footer_branch
                  %309 = sbr.rel target = $region93
                $region98: #{self_attention_pallas.4} parent=83 // loop_exit
                  _
              $region84: #{self_attention_pallas.4} parent=68 // pred_fallthru
                _
            $region69: #{self_attention_pallas.4} parent=64 // pred_fallthru
              _
            // Predicated region
            $region70: #{self_attention_pallas.4} parent=64 // pred_check
              _
            $region71: #{self_attention_pallas.4} parent=64 // pred_check_branch
              %270 = sbr.rel (0) target = $region73
            $region72: #{self_attention_pallas.4} parent=64 // pred_region
              %s272 = ssub.s32 4, 1
              loop: start=0, step=1, limit=1
              $region74: #{self_attention_pallas.4} parent=72 // loop_pre_header
                _
              $region75: #{self_attention_pallas.4} parent=72 // loop_header
                %s274 = sphi 0, %s278
                %p275 = scmp.ge.s32.totalorder %s274, 1
                %s279 = sphi %s264, %s264
                %s280 = sphi %s255, %s255
              $region76: #{self_attention_pallas.4} parent=72 // loop_header_branch
                %277 = sbr.rel (%p275) target = $region80
              $region77: #{self_attention_pallas.4} parent=72 // loop_body
                %v281 = vld [vmem:[%s279] sm:%s272]
                %282 = vst [vmem:[%s280] sm:%s272] %v281
                %v283 = vld [vmem:[%s279 + $0x6] sm:%s272]
                %284 = vst [vmem:[%s280 + $0x2] sm:%s272] %v283
                %v285 = vld [vmem:[%s279 + $0xc] sm:%s272]
                %286 = vst [vmem:[%s280 + $0x4] sm:%s272] %v285
                %v287 = vld [vmem:[%s279 + $0x12] sm:%s272]
                %288 = vst [vmem:[%s280 + $0x6] sm:%s272] %v287
                %v289 = vld [vmem:[%s279 + $0x18] sm:%s272]
                %290 = vst [vmem:[%s280 + $0x8] sm:%s272] %v289
                %v291 = vld [vmem:[%s279 + $0x1e] sm:%s272]
                %292 = vst [vmem:[%s280 + $0xa] sm:%s272] %v291
                %v293 = vld [vmem:[%s279 + $0x24] sm:%s272]
                %294 = vst [vmem:[%s280 + $0xc] sm:%s272] %v293
                %v295 = vld [vmem:[%s279 + $0x2a] sm:%s272]
                %296 = vst [vmem:[%s280 + $0xe] sm:%s272] %v295
              $region78: #{self_attention_pallas.4} parent=72 // loop_footer
                %s278 = sadd.s32 1, %s274
              $region79: #{self_attention_pallas.4} parent=72 // loop_footer_branch
                %273 = sbr.rel target = $region75
              $region80: #{self_attention_pallas.4} parent=72 // loop_exit
                _
            $region73: #{self_attention_pallas.4} parent=64 // pred_fallthru
              _
          $region65: #{self_attention_pallas.4} parent=60 // pred_fallthru
            _
          %333 = vnop
        $region61: #{self_attention_pallas.4} parent=15 // pred_fallthru
          _
        // Predicated region
        $region99: #{self_attention_pallas.4} parent=15 // pred_check
          %p334 = pneg %p114
        $region100: #{self_attention_pallas.4} parent=15 // pred_check_branch
          %336 = sbr.rel (%p334) target = $region102
        $region101: #{self_attention_pallas.4} parent=15 // pred_region
          %s337 = sand.u32 %s104, 1
          %s338 = sand.u32 %s104, 1
          %s339 = smul.addr %s338, 16
          %s340 = scalar_lea.vmem [#allocation7], %s339
          %p341 = scmp.lt.s32.totalorder %s18, %s17
          %s342 = scalar_select %p341, %s18, %s17
          %s343 = smul.u32 8, %s342
          %s344 = smul.addr %s343, 3
          %s345 = sadd.s32 2, %s344
          %s346 = smul.addr %s16, 24
          %s347 = sadd.s32 %s345, %s346
          %s348 = smul.addr %s347, 2
          %s349 = scalar_lea.vmem %s2, %s348
          // Predicated region
          $region103: #{self_attention_pallas.4} parent=101 // pred_check
            _
          $region104: #{self_attention_pallas.4} parent=101 // pred_check_branch
            %351 = sbr.rel (0) target = $region106
          $region105: #{self_attention_pallas.4} parent=101 // pred_region
            // Predicated region
            $region107: #{self_attention_pallas.4} parent=105 // pred_check
              _
            $region108: #{self_attention_pallas.4} parent=105 // pred_check_branch
              %353 = sbr.rel target = $region110
            $region109: #{self_attention_pallas.4} parent=105 // pred_region
              // Predicated region
              $region122: #{self_attention_pallas.4} parent=109 // pred_check
                _
              $region123: #{self_attention_pallas.4} parent=109 // pred_check_branch
                %383 = sbr.rel (0) target = $region125
              $region124: #{self_attention_pallas.4} parent=109 // pred_region
                loop: start=0, step=1, limit=1
                $region126: #{self_attention_pallas.4} parent=124 // loop_pre_header
                  _
                $region127: #{self_attention_pallas.4} parent=124 // loop_header
                  %s385 = sphi 0, %s389
                  %p386 = scmp.ge.s32.totalorder %s385, 1
                  %s390 = sphi %s349, %s349
                  %s391 = sphi %s340, %s340
                $region128: #{self_attention_pallas.4} parent=124 // loop_header_branch
                  %388 = sbr.rel (%p386) target = $region132
                $region129: #{self_attention_pallas.4} parent=124 // loop_body
                  _
                $region130: #{self_attention_pallas.4} parent=124 // loop_footer
                  %s389 = sadd.s32 1, %s385
                $region131: #{self_attention_pallas.4} parent=124 // loop_footer_branch
                  %384 = sbr.rel target = $region127
                $region132: #{self_attention_pallas.4} parent=124 // loop_exit
                  _
                %s393 = ssub.s32 4, 1
                loop: start=0, step=1, limit=1
                $region133: #{self_attention_pallas.4} parent=124 // loop_pre_header
                  _
                $region134: #{self_attention_pallas.4} parent=124 // loop_header
                  %s395 = sphi 0, %s399
                  %p396 = scmp.ge.s32.totalorder %s395, 1
                  %s400 = sphi %s349, %s349
                  %s401 = sphi %s340, %s340
                $region135: #{self_attention_pallas.4} parent=124 // loop_header_branch
                  %398 = sbr.rel (%p396) target = $region139
                $region136: #{self_attention_pallas.4} parent=124 // loop_body
                  %v402 = vld [vmem:[%s400] sm:%s393]
                  %403 = vst [vmem:[%s401] sm:%s393] %v402
                  %v404 = vld [vmem:[%s400 + $0x6] sm:%s393]
                  %405 = vst [vmem:[%s401 + $0x2] sm:%s393] %v404
                  %v406 = vld [vmem:[%s400 + $0xc] sm:%s393]
                  %407 = vst [vmem:[%s401 + $0x4] sm:%s393] %v406
                  %v408 = vld [vmem:[%s400 + $0x12] sm:%s393]
                  %409 = vst [vmem:[%s401 + $0x6] sm:%s393] %v408
                  %v410 = vld [vmem:[%s400 + $0x18] sm:%s393]
                  %411 = vst [vmem:[%s401 + $0x8] sm:%s393] %v410
                  %v412 = vld [vmem:[%s400 + $0x1e] sm:%s393]
                  %413 = vst [vmem:[%s401 + $0xa] sm:%s393] %v412
                  %v414 = vld [vmem:[%s400 + $0x24] sm:%s393]
                  %415 = vst [vmem:[%s401 + $0xc] sm:%s393] %v414
                  %v416 = vld [vmem:[%s400 + $0x2a] sm:%s393]
                  %417 = vst [vmem:[%s401 + $0xe] sm:%s393] %v416
                $region137: #{self_attention_pallas.4} parent=124 // loop_footer
                  %s399 = sadd.s32 1, %s395
                $region138: #{self_attention_pallas.4} parent=124 // loop_footer_branch
                  %394 = sbr.rel target = $region134
                $region139: #{self_attention_pallas.4} parent=124 // loop_exit
                  _
              $region125: #{self_attention_pallas.4} parent=109 // pred_fallthru
                _
            $region110: #{self_attention_pallas.4} parent=105 // pred_fallthru
              _
            // Predicated region
            $region111: #{self_attention_pallas.4} parent=105 // pred_check
              _
            $region112: #{self_attention_pallas.4} parent=105 // pred_check_branch
              %355 = sbr.rel (0) target = $region114
            $region113: #{self_attention_pallas.4} parent=105 // pred_region
              %s357 = ssub.s32 4, 1
              loop: start=0, step=1, limit=1
              $region115: #{self_attention_pallas.4} parent=113 // loop_pre_header
                _
              $region116: #{self_attention_pallas.4} parent=113 // loop_header
                %s359 = sphi 0, %s363
                %p360 = scmp.ge.s32.totalorder %s359, 1
                %s364 = sphi %s349, %s349
                %s365 = sphi %s340, %s340
              $region117: #{self_attention_pallas.4} parent=113 // loop_header_branch
                %362 = sbr.rel (%p360) target = $region121
              $region118: #{self_attention_pallas.4} parent=113 // loop_body
                %v366 = vld [vmem:[%s364] sm:%s357]
                %367 = vst [vmem:[%s365] sm:%s357] %v366
                %v368 = vld [vmem:[%s364 + $0x6] sm:%s357]
                %369 = vst [vmem:[%s365 + $0x2] sm:%s357] %v368
                %v370 = vld [vmem:[%s364 + $0xc] sm:%s357]
                %371 = vst [vmem:[%s365 + $0x4] sm:%s357] %v370
                %v372 = vld [vmem:[%s364 + $0x12] sm:%s357]
                %373 = vst [vmem:[%s365 + $0x6] sm:%s357] %v372
                %v374 = vld [vmem:[%s364 + $0x18] sm:%s357]
                %375 = vst [vmem:[%s365 + $0x8] sm:%s357] %v374
                %v376 = vld [vmem:[%s364 + $0x1e] sm:%s357]
                %377 = vst [vmem:[%s365 + $0xa] sm:%s357] %v376
                %v378 = vld [vmem:[%s364 + $0x24] sm:%s357]
                %379 = vst [vmem:[%s365 + $0xc] sm:%s357] %v378
                %v380 = vld [vmem:[%s364 + $0x2a] sm:%s357]
                %381 = vst [vmem:[%s365 + $0xe] sm:%s357] %v380
              $region119: #{self_attention_pallas.4} parent=113 // loop_footer
                %s363 = sadd.s32 1, %s359
              $region120: #{self_attention_pallas.4} parent=113 // loop_footer_branch
                %358 = sbr.rel target = $region116
              $region121: #{self_attention_pallas.4} parent=113 // loop_exit
                _
            $region114: #{self_attention_pallas.4} parent=105 // pred_fallthru
              _
          $region106: #{self_attention_pallas.4} parent=101 // pred_fallthru
            _
          %418 = vnop
        $region102: #{self_attention_pallas.4} parent=15 // pred_fallthru
          _
      $region16: #{self_attention_pallas.4} parent=5 // pred_fallthru
        _
      %p419 = scmp.le.s32.totalorder 1, %s9
      %p420 = scmp.lt.s32.totalorder %s9, 3
      %p421 = pnand %p419, %p420
      %p422 = pneg %p421
      // Predicated region
      $region140: #{self_attention_pallas.4} parent=5 // pred_check
        _
      $region141: #{self_attention_pallas.4} parent=5 // pred_check_branch
        %424 = sbr.rel (%p421) target = $region143
      $region142: #{self_attention_pallas.4} parent=5 // pred_region
        %s425 = ssub.s32 %s9, 1
        %s426 = sand.u32 %s43, 1
        %s427 = sand.u32 %s43, 1
        %s428 = smul.addr %s427, 16
        %s429 = scalar_lea.vmem [#allocation5], %s428
        // Predicated region
        $region144: #{self_attention_pallas.4} parent=142 // pred_check
          %p430 = pneg %p56
        $region145: #{self_attention_pallas.4} parent=142 // pred_check_branch
          %432 = sbr.rel (%p430) target = $region147
        $region146: #{self_attention_pallas.4} parent=142 // pred_region
          _
        $region147: #{self_attention_pallas.4} parent=142 // pred_fallthru
          _
        %s433 = sand.u32 %s75, 1
        %s434 = sand.u32 %s75, 1
        %s435 = smul.addr %s434, 16
        %s436 = scalar_lea.vmem [#allocation6], %s435
        // Predicated region
        $region148: #{self_attention_pallas.4} parent=142 // pred_check
          %p437 = pneg %p88
        $region149: #{self_attention_pallas.4} parent=142 // pred_check_branch
          %439 = sbr.rel (%p437) target = $region151
        $region150: #{self_attention_pallas.4} parent=142 // pred_region
          _
        $region151: #{self_attention_pallas.4} parent=142 // pred_fallthru
          _
        %s440 = sand.u32 %s107, 1
        %s441 = sand.u32 %s107, 1
        %s442 = smul.addr %s441, 16
        %s443 = scalar_lea.vmem [#allocation7], %s442
        // Predicated region
        $region152: #{self_attention_pallas.4} parent=142 // pred_check
          %p444 = pneg %p120
        $region153: #{self_attention_pallas.4} parent=142 // pred_check_branch
          %446 = sbr.rel (%p444) target = $region155
        $region154: #{self_attention_pallas.4} parent=142 // pred_region
          _
        $region155: #{self_attention_pallas.4} parent=142 // pred_fallthru
          _
        %s447 = sand.u32 %s43, 1
        %s448 = sand.u32 %s43, 1
        %s449 = smul.addr %s448, 16
        %s450 = scalar_lea.vmem [#allocation5], %s449
        %p451 = pneg %p56
        %p452 = pneg %p53
        %s453 = sand.u32 %s75, 1
        %s454 = sand.u32 %s75, 1
        %s455 = smul.addr %s454, 16
        %s456 = scalar_lea.vmem [#allocation6], %s455
        %p457 = pneg %p88
        %p458 = pneg %p85
        %s459 = sand.u32 %s107, 1
        %s460 = sand.u32 %s107, 1
        %s461 = smul.addr %s460, 16
        %s462 = scalar_lea.vmem [#allocation7], %s461
        %p463 = pneg %p120
        %p464 = pneg %p117
        %p465 = pneg %p148
        %p466 = pneg %p145
        %p467 = scmp.lt.s32.totalorder %s19, 1
        %s468 = scalar_select %p467, %s19, 1
        %p469 = scmp.lt.s32.totalorder %s20, 0
        %s470 = scalar_select %p469, %s20, 0
        %s471 = sadd.s32 %s470, %s468
        %s472 = smul.addr %s471, 4
        %s473 = scalar_lea.vmem %s3, %s472
        %s474 = smul.u32 8, %s20
        %p475 = scmp.lt.s32.totalorder %s21, %s20
        %s476 = scalar_select %p475, %s21, %s20
        %s477 = smul.u32 8, %s476
        %p478 = scmp.lt.s32.totalorder %s21, %s20
        %s479 = scalar_select %p478, %s21, %s20
        %s480 = smul.u32 8, %s479
        %p481 = scmp.lt.s32.totalorder %s19, 1
        %s482 = scalar_select %p481, %s19, 1
        %p483 = scmp.lt.s32.totalorder %s20, 0
        %s484 = scalar_select %p483, %s20, 0
        %s485 = sadd.s32 %s484, %s482
        %s486 = smul.addr %s485, 4
        %s487 = scalar_lea.vmem %s3, %s486
        %p489 = scmp.eq.s32.totalorder %s21, 0
        // Predicated region
        $region156: #{self_attention_pallas.4} parent=142 // pred_check
          %p490 = pneg %p489
        $region157: #{self_attention_pallas.4} parent=142 // pred_check_branch
          %492 = sbr.rel (%p490) target = $region159
        $region158: #{self_attention_pallas.4} parent=142 // pred_region
          %vm493 = vcmask 7168
          %494 = vst.msk [vmem:[#allocation2] sm:$0xff] %vm493, -inf
          %495 = vst.msk [vmem:[#allocation2 + $0x8] sm:$0xff] %vm493, -inf
          %496 = vst.msk [vmem:[#allocation2 + $0x10] sm:$0xff] %vm493, -inf
          %497 = vst.msk [vmem:[#allocation2 + $0x18] sm:$0xff] %vm493, -inf
          %498 = vst.msk [vmem:[#allocation3] sm:$0xff] %vm493, 0.0
          %499 = vst.msk [vmem:[#allocation3 + $0x8] sm:$0xff] %vm493, 0.0
          %500 = vst.msk [vmem:[#allocation3 + $0x10] sm:$0xff] %vm493, 0.0
          %501 = vst.msk [vmem:[#allocation3 + $0x18] sm:$0xff] %vm493, 0.0
          %vm502 = vcmask 64512
          %503 = vst.msk [vmem:[#allocation4] sm:$0xff] %vm502, 0.0
          %504 = vst.msk [vmem:[#allocation4 + $0x8] sm:$0xff] %vm502, 0.0
          %505 = vst.msk [vmem:[#allocation4 + $0x10] sm:$0xff] %vm502, 0.0
          %506 = vst.msk [vmem:[#allocation4 + $0x18] sm:$0xff] %vm502, 0.0
        $region159: #{self_attention_pallas.4} parent=142 // pred_fallthru
          _
        %p507 = scmp.lt.s32.totalorder %s21, %s20
        // Predicated region
        $region160: #{self_attention_pallas.4} parent=142 // pred_check
          %p508 = pneg %p507
        $region161: #{self_attention_pallas.4} parent=142 // pred_check_branch
          %510 = sbr.rel (%p508) target = $region163
        $region162: #{self_attention_pallas.4} parent=142 // pred_region
          %v511 = vld [vmem:[%s429] sm:$0x1]
          %v512 = vld [vmem:[%s429 + $0x2] sm:$0x1]
          %v513 = vld [vmem:[%s429 + $0x4] sm:$0x1]
          %v514 = vld [vmem:[%s429 + $0x6] sm:$0x1]
          %v515 = vld [vmem:[%s429 + $0x8] sm:$0x1]
          %v516 = vld [vmem:[%s429 + $0xa] sm:$0x1]
          %v517 = vld [vmem:[%s429 + $0xc] sm:$0x1]
          %v518 = vld [vmem:[%s429 + $0xe] sm:$0x1]
          %v519 = vld [vmem:[%s436] sm:$0x1]
          %v520 = vld [vmem:[%s436 + $0x2] sm:$0x1]
          %v521 = vld [vmem:[%s436 + $0x4] sm:$0x1]
          %v522 = vld [vmem:[%s436 + $0x6] sm:$0x1]
          %v523 = vld [vmem:[%s436 + $0x8] sm:$0x1]
          %v524 = vld [vmem:[%s436 + $0xa] sm:$0x1]
          %v525 = vld [vmem:[%s436 + $0xc] sm:$0x1]
          %v526 = vld [vmem:[%s436 + $0xe] sm:$0x1]
          %v527 = vld [vmem:[%s443] sm:$0x1]
          %v528 = vld [vmem:[%s443 + $0x2] sm:$0x1]
          %v529 = vld [vmem:[%s443 + $0x4] sm:$0x1]
          %v530 = vld [vmem:[%s443 + $0x6] sm:$0x1]
          %v531 = vld [vmem:[%s443 + $0x8] sm:$0x1]
          %v532 = vld [vmem:[%s443 + $0xa] sm:$0x1]
          %v533 = vld [vmem:[%s443 + $0xc] sm:$0x1]
          %v534 = vld [vmem:[%s443 + $0xe] sm:$0x1]
          %v544 = vunpack.c.l.s4 1983009808
          %v545 = vunpack.c.0.s8 %v544
          %v546 = vlaneseq
          %v547 = vshrl.u32 %v546, 7
          %v548 = vsub.s32 %v545, %v547
          %v549 = vrot.slane %v511, %v548
          %v551 = vunpack.c.l.s4 1983009808
          %v552 = vunpack.c.0.s8 %v551
          %v553 = vlaneseq
          %v554 = vshrl.u32 %v553, 7
          %v555 = vsub.s32 %v552, %v554
          %v556 = vrot.slane %v512, %v555
          %v558 = vunpack.c.l.s4 1983009808
          %v559 = vunpack.c.0.s8 %v558
          %v560 = vlaneseq
          %v561 = vshrl.u32 %v560, 7
          %v562 = vsub.s32 %v559, %v561
          %v563 = vrot.slane %v513, %v562
          %v565 = vunpack.c.l.s4 1983009808
          %v566 = vunpack.c.0.s8 %v565
          %v567 = vlaneseq
          %v568 = vshrl.u32 %v567, 7
          %v569 = vsub.s32 %v566, %v568
          %v570 = vrot.slane %v514, %v569
          %v572 = vunpack.c.l.s4 1983009808
          %v573 = vunpack.c.0.s8 %v572
          %v574 = vlaneseq
          %v575 = vshrl.u32 %v574, 7
          %v576 = vsub.s32 %v573, %v575
          %v577 = vrot.slane %v515, %v576
          %v579 = vunpack.c.l.s4 1983009808
          %v580 = vunpack.c.0.s8 %v579
          %v581 = vlaneseq
          %v582 = vshrl.u32 %v581, 7
          %v583 = vsub.s32 %v580, %v582
          %v584 = vrot.slane %v516, %v583
          %v586 = vunpack.c.l.s4 1983009808
          %v587 = vunpack.c.0.s8 %v586
          %v588 = vlaneseq
          %v589 = vshrl.u32 %v588, 7
          %v590 = vsub.s32 %v587, %v589
          %v591 = vrot.slane %v517, %v590
          %v593 = vunpack.c.l.s4 1983009808
          %v594 = vunpack.c.0.s8 %v593
          %v595 = vlaneseq
          %v596 = vshrl.u32 %v595, 7
          %v597 = vsub.s32 %v594, %v596
          %v598 = vrot.slane %v518, %v597
          %v599 = vunpack.c.l.b16 %v549
          %v600 = vunpack.c.l.b16 %v556
          %v601 = vunpack.c.l.b16 %v563
          %v602 = vunpack.c.l.b16 %v570
          %v603 = vunpack.c.l.b16 %v577
          %v604 = vunpack.c.l.b16 %v584
          %v605 = vunpack.c.l.b16 %v591
          %v606 = vunpack.c.l.b16 %v598
          %v607 = vrot.slane %v600, 7
          %vm608 = vcmask 1041409
          %v609 = vsel %vm608, %v607, %v599
          %v610 = vrot.slane %v601, 6
          %vm611 = vcmask 1042434
          %v612 = vsel %vm611, %v610, %v609
          %v613 = vrot.slane %v602, 5
          %vm614 = vcmask 1043459
          %v615 = vsel %vm614, %v613, %v612
          %v616 = vrot.slane %v603, 4
          %vm617 = vcmask 1044484
          %v618 = vsel %vm617, %v616, %v615
          %v619 = vrot.slane %v604, 3
          %vm620 = vcmask 1045509
          %v621 = vsel %vm620, %v619, %v618
          %v622 = vrot.slane %v605, 2
          %vm623 = vcmask 1046534
          %v624 = vsel %vm623, %v622, %v621
          %v625 = vrot.slane %v606, 1
          %vm626 = vcmask 1047559
          %v627 = vsel %vm626, %v625, %v624
          %v628 = vpack.c.b16 %v627, %v627
          %v638 = vunpack.c.l.s4 1983009808
          %v639 = vunpack.c.0.s8 %v638
          %v640 = vlaneseq
          %v641 = vshrl.u32 %v640, 7
          %v642 = vsub.s32 %v639, %v641
          %v643 = vrot.slane %v519, %v642
          %v645 = vunpack.c.l.s4 1983009808
          %v646 = vunpack.c.0.s8 %v645
          %v647 = vlaneseq
          %v648 = vshrl.u32 %v647, 7
          %v649 = vsub.s32 %v646, %v648
          %v650 = vrot.slane %v520, %v649
          %v652 = vunpack.c.l.s4 1983009808
          %v653 = vunpack.c.0.s8 %v652
          %v654 = vlaneseq
          %v655 = vshrl.u32 %v654, 7
          %v656 = vsub.s32 %v653, %v655
          %v657 = vrot.slane %v521, %v656
          %v659 = vunpack.c.l.s4 1983009808
          %v660 = vunpack.c.0.s8 %v659
          %v661 = vlaneseq
          %v662 = vshrl.u32 %v661, 7
          %v663 = vsub.s32 %v660, %v662
          %v664 = vrot.slane %v522, %v663
          %v666 = vunpack.c.l.s4 1983009808
          %v667 = vunpack.c.0.s8 %v666
          %v668 = vlaneseq
          %v669 = vshrl.u32 %v668, 7
          %v670 = vsub.s32 %v667, %v669
          %v671 = vrot.slane %v523, %v670
          %v673 = vunpack.c.l.s4 1983009808
          %v674 = vunpack.c.0.s8 %v673
          %v675 = vlaneseq
          %v676 = vshrl.u32 %v675, 7
          %v677 = vsub.s32 %v674, %v676
          %v678 = vrot.slane %v524, %v677
          %v680 = vunpack.c.l.s4 1983009808
          %v681 = vunpack.c.0.s8 %v680
          %v682 = vlaneseq
          %v683 = vshrl.u32 %v682, 7
          %v684 = vsub.s32 %v681, %v683
          %v685 = vrot.slane %v525, %v684
          %v687 = vunpack.c.l.s4 1983009808
          %v688 = vunpack.c.0.s8 %v687
          %v689 = vlaneseq
          %v690 = vshrl.u32 %v689, 7
          %v691 = vsub.s32 %v688, %v690
          %v692 = vrot.slane %v526, %v691
          %v693 = vunpack.c.l.b16 %v643
          %v694 = vunpack.c.l.b16 %v650
          %v695 = vunpack.c.l.b16 %v657
          %v696 = vunpack.c.l.b16 %v664
          %v697 = vunpack.c.l.b16 %v671
          %v698 = vunpack.c.l.b16 %v678
          %v699 = vunpack.c.l.b16 %v685
          %v700 = vunpack.c.l.b16 %v692
          %v701 = vrot.slane %v694, 7
          %v702 = vsel %vm608, %v701, %v693
          %v703 = vrot.slane %v695, 6
          %v704 = vsel %vm611, %v703, %v702
          %v705 = vrot.slane %v696, 5
          %v706 = vsel %vm614, %v705, %v704
          %v707 = vrot.slane %v697, 4
          %v708 = vsel %vm617, %v707, %v706
          %v709 = vrot.slane %v698, 3
          %v710 = vsel %vm620, %v709, %v708
          %v711 = vrot.slane %v699, 2
          %v712 = vsel %vm623, %v711, %v710
          %v713 = vrot.slane %v700, 1
          %v714 = vsel %vm626, %v713, %v712
          %v715 = vpack.c.b16 %v714, %v714
          %vm716 = vcmask 64512
          %v718 = vsel %vm716, %v628, 0
          %v721 = vsel %vm716, %v715, 0
          %723 = vmatprep.subr.bf16.mxu0 0
          %724 = vmatpush1.bf16.xpose.msra.mxu0 0
          %725 = vmatprep.subr.bf16.mxu0 0
          %726 = vmatpush1.bf16.xpose.msra.mxu0 0
          %727 = vmatprep.subr.bf16.mxu0 0
          %728 = vmatpush1.bf16.xpose.msra.mxu0 0
          %729 = vmatprep.subr.bf16.mxu0 0
          %730 = vmatpush1.bf16.xpose.msra.mxu0 0
          %731 = vmatprep.subr.bf16.mxu0 0
          %732 = vmatpush1.bf16.xpose.msra.mxu0 0
          %733 = vmatprep.subr.bf16.mxu0 0
          %734 = vmatpush1.bf16.xpose.msra.mxu0 0
          %735 = vmatprep.subr.bf16.mxu0 0
          %736 = vmatpush1.bf16.xpose.msra.mxu0 0
          %737 = vmatprep.subr.bf16.mxu0 0
          %738 = vmatpush1.bf16.xpose.msra.mxu0 %v721
          %739 = vmatprep.subr.bf16.mxu0 0
          %740 = vmatpush2.bf16.xpose.msra.mxu0 0
          %741 = vmatprep.subr.bf16.mxu0 0
          %742 = vmatpush2.bf16.xpose.msra.mxu0 0
          %743 = vmatprep.subr.bf16.mxu0 0
          %744 = vmatpush2.bf16.xpose.msra.mxu0 0
          %745 = vmatprep.subr.bf16.mxu0 0
          %746 = vmatpush2.bf16.xpose.msra.mxu0 0
          %747 = vmatprep.subr.bf16.mxu0 0
          %748 = vmatpush2.bf16.xpose.msra.mxu0 0
          %749 = vmatprep.subr.bf16.mxu0 0
          %750 = vmatpush2.bf16.xpose.msra.mxu0 0
          %751 = vmatprep.subr.bf16.mxu0 0
          %752 = vmatpush2.bf16.xpose.msra.mxu0 0
          %753 = vmatprep.subr.bf16.mxu0 0
          %754 = vmatpush2.bf16.xpose.msra.mxu0 0
          %755 = vmatprep.mubr.bf16.mxu0 0
          %756 = vmatmul.mubr.bf16.gmra.mxu0 %v718
          %v757 = vpop.f32.mrf.mxu0
          %v758 = vadd.f32 0.0, %v757
          %v759 = vpop.f32.mrf.mxu0
          %v760 = vpop.f32.mrf.mxu0
          %v761 = vpop.f32.mrf.mxu0
          %762 = vdwg.mxu0
          %v763 = vld [vmem:[#allocation2] sm:$0xff]
          %v764 = vsel %vm716, %v758, -inf
          %765 = vmax.xlane.f32.xlu0 %v764
          %v766 = vpop.xlane.xlu0 %765
          %v767 = vmax.f32 %v763, %v766
          %v768 = vsub.f32 %v763, %v767
          %v769 = vmul.f32 %v768, 1.442695
          %v770 = vpow.pop %v769
          %772 = vset.pattern.permute.xlu0 0
          %773 = vperm.xlu0 %772, %v767
          %v774 = vpop.permute.xlu0 %773
          %v776 = vsub.f32 %v758, %v774
          %v777 = vmul.f32 %v776, 1.442695
          %v778 = vpow.pop %v777
          %v779 = vld [vmem:[#allocation3] sm:$0xff]
          %v780 = vmul.f32 %v770, %v779
          %v781 = vsel %vm716, %v778, 0.0
          %782 = vadd.xlane.f32.xlu0 %v781
          %v783 = vpop.xlane.xlu0 %782
          %v784 = vadd.f32 %v780, %v783
          %vm785 = vcmask 7168
          %786 = vst.msk [vmem:[#allocation3] sm:$0xff] %vm785, %v784
          %v787 = vld [vmem:[#allocation4] sm:$0xff]
          %789 = vset.pattern.permute.xlu0 0
          %790 = vperm.xlu0 %789, %v770
          %v791 = vpop.permute.xlu0 %790
          %v793 = vmul.f32 %v791, %v787
          %v794 = vpack.c.bf16 %v778, %v778
          %v804 = vunpack.c.l.s4 1983009808
          %v805 = vunpack.c.0.s8 %v804
          %v806 = vlaneseq
          %v807 = vshrl.u32 %v806, 7
          %v808 = vsub.s32 %v805, %v807
          %v809 = vrot.slane %v527, %v808
          %v811 = vunpack.c.l.s4 1983009808
          %v812 = vunpack.c.0.s8 %v811
          %v813 = vlaneseq
          %v814 = vshrl.u32 %v813, 7
          %v815 = vsub.s32 %v812, %v814
          %v816 = vrot.slane %v528, %v815
          %v818 = vunpack.c.l.s4 1983009808
          %v819 = vunpack.c.0.s8 %v818
          %v820 = vlaneseq
          %v821 = vshrl.u32 %v820, 7
          %v822 = vsub.s32 %v819, %v821
          %v823 = vrot.slane %v529, %v822
          %v825 = vunpack.c.l.s4 1983009808
          %v826 = vunpack.c.0.s8 %v825
          %v827 = vlaneseq
          %v828 = vshrl.u32 %v827, 7
          %v829 = vsub.s32 %v826, %v828
          %v830 = vrot.slane %v530, %v829
          %v832 = vunpack.c.l.s4 1983009808
          %v833 = vunpack.c.0.s8 %v832
          %v834 = vlaneseq
          %v835 = vshrl.u32 %v834, 7
          %v836 = vsub.s32 %v833, %v835
          %v837 = vrot.slane %v531, %v836
          %v839 = vunpack.c.l.s4 1983009808
          %v840 = vunpack.c.0.s8 %v839
          %v841 = vlaneseq
          %v842 = vshrl.u32 %v841, 7
          %v843 = vsub.s32 %v840, %v842
          %v844 = vrot.slane %v532, %v843
          %v846 = vunpack.c.l.s4 1983009808
          %v847 = vunpack.c.0.s8 %v846
          %v848 = vlaneseq
          %v849 = vshrl.u32 %v848, 7
          %v850 = vsub.s32 %v847, %v849
          %v851 = vrot.slane %v533, %v850
          %v853 = vunpack.c.l.s4 1983009808
          %v854 = vunpack.c.0.s8 %v853
          %v855 = vlaneseq
          %v856 = vshrl.u32 %v855, 7
          %v857 = vsub.s32 %v854, %v856
          %v858 = vrot.slane %v534, %v857
          %v859 = vunpack.c.l.b16 %v809
          %v860 = vunpack.c.l.b16 %v816
          %v861 = vunpack.c.l.b16 %v823
          %v862 = vunpack.c.l.b16 %v830
          %v863 = vunpack.c.l.b16 %v837
          %v864 = vunpack.c.l.b16 %v844
          %v865 = vunpack.c.l.b16 %v851
          %v866 = vunpack.c.l.b16 %v858
          %v867 = vrot.slane %v860, 7
          %v868 = vsel %vm608, %v867, %v859
          %v869 = vrot.slane %v861, 6
          %v870 = vsel %vm611, %v869, %v868
          %v871 = vrot.slane %v862, 5
          %v872 = vsel %vm614, %v871, %v870
          %v873 = vrot.slane %v863, 4
          %v874 = vsel %vm617, %v873, %v872
          %v875 = vrot.slane %v864, 3
          %v876 = vsel %vm620, %v875, %v874
          %v877 = vrot.slane %v865, 2
          %v878 = vsel %vm623, %v877, %v876
          %v879 = vrot.slane %v866, 1
          %v880 = vsel %vm626, %v879, %v878
          %v881 = vpack.c.b16 %v880, %v880
          %v883 = vsel %vm716, %v794, 0
          %vm885 = vcmask 1043456
          %v887 = vsel %vm885, %v881, 0
          %889 = vmatprep.subr.bf16.mxu0 0
          %890 = vmatpush1.bf16.msra.mxu0 0
          %891 = vmatprep.subr.bf16.mxu0 0
          %892 = vmatpush1.bf16.msra.mxu0 0
          %893 = vmatprep.subr.bf16.mxu0 0
          %894 = vmatpush1.bf16.msra.mxu0 0
          %895 = vmatprep.subr.bf16.mxu0 0
          %896 = vmatpush1.bf16.msra.mxu0 0
          %897 = vmatprep.subr.bf16.mxu0 0
          %898 = vmatpush1.bf16.msra.mxu0 0
          %899 = vmatprep.subr.bf16.mxu0 0
          %900 = vmatpush1.bf16.msra.mxu0 0
          %901 = vmatprep.subr.bf16.mxu0 0
          %902 = vmatpush1.bf16.msra.mxu0 0
          %903 = vmatprep.subr.bf16.mxu0 0
          %904 = vmatpush1.bf16.msra.mxu0 %v887
          %905 = vmatprep.subr.bf16.mxu0 0
          %906 = vmatpush2.bf16.msra.mxu0 0
          %907 = vmatprep.subr.bf16.mxu0 0
          %908 = vmatpush2.bf16.msra.mxu0 0
          %909 = vmatprep.subr.bf16.mxu0 0
          %910 = vmatpush2.bf16.msra.mxu0 0
          %911 = vmatprep.subr.bf16.mxu0 0
          %912 = vmatpush2.bf16.msra.mxu0 0
          %913 = vmatprep.subr.bf16.mxu0 0
          %914 = vmatpush2.bf16.msra.mxu0 0
          %915 = vmatprep.subr.bf16.mxu0 0
          %916 = vmatpush2.bf16.msra.mxu0 0
          %917 = vmatprep.subr.bf16.mxu0 0
          %918 = vmatpush2.bf16.msra.mxu0 0
          %919 = vmatprep.subr.bf16.mxu0 0
          %920 = vmatpush2.bf16.msra.mxu0 0
          %921 = vmatprep.mubr.bf16.mxu0 0
          %922 = vmatmul.mubr.bf16.gmra.mxu0 %v883
          %v923 = vpop.f32.mrf.mxu0
          %v924 = vadd.f32 0.0, %v923
          %v925 = vpop.f32.mrf.mxu0
          %v926 = vpop.f32.mrf.mxu0
          %v927 = vpop.f32.mrf.mxu0
          %928 = vdwg.mxu0
          %v929 = vadd.f32 %v793, %v924
          %930 = vst.msk [vmem:[#allocation4] sm:$0xff] %vm716, %v929
          %931 = vst.msk [vmem:[#allocation2] sm:$0xff] %vm785, %v767
          %v932 = vld [vmem:[%s429] sm:$0x1]
          %v933 = vld [vmem:[%s429 + $0x2] sm:$0x1]
          %v934 = vld [vmem:[%s429 + $0x4] sm:$0x1]
          %v935 = vld [vmem:[%s429 + $0x6] sm:$0x1]
          %v936 = vld [vmem:[%s429 + $0x8] sm:$0x1]
          %v937 = vld [vmem:[%s429 + $0xa] sm:$0x1]
          %v938 = vld [vmem:[%s429 + $0xc] sm:$0x1]
          %v939 = vld [vmem:[%s429 + $0xe] sm:$0x1]
          %v940 = vld [vmem:[%s436] sm:$0x1]
          %v941 = vld [vmem:[%s436 + $0x2] sm:$0x1]
          %v942 = vld [vmem:[%s436 + $0x4] sm:$0x1]
          %v943 = vld [vmem:[%s436 + $0x6] sm:$0x1]
          %v944 = vld [vmem:[%s436 + $0x8] sm:$0x1]
          %v945 = vld [vmem:[%s436 + $0xa] sm:$0x1]
          %v946 = vld [vmem:[%s436 + $0xc] sm:$0x1]
          %v947 = vld [vmem:[%s436 + $0xe] sm:$0x1]
          %v948 = vld [vmem:[%s443] sm:$0x1]
          %v949 = vld [vmem:[%s443 + $0x2] sm:$0x1]
          %v950 = vld [vmem:[%s443 + $0x4] sm:$0x1]
          %v951 = vld [vmem:[%s443 + $0x6] sm:$0x1]
          %v952 = vld [vmem:[%s443 + $0x8] sm:$0x1]
          %v953 = vld [vmem:[%s443 + $0xa] sm:$0x1]
          %v954 = vld [vmem:[%s443 + $0xc] sm:$0x1]
          %v955 = vld [vmem:[%s443 + $0xe] sm:$0x1]
          %v965 = vunpack.c.l.s4 1983009808
          %v966 = vunpack.c.0.s8 %v965
          %v967 = vlaneseq
          %v968 = vshrl.u32 %v967, 7
          %v969 = vsub.s32 %v966, %v968
          %v970 = vrot.slane %v932, %v969
          %v972 = vunpack.c.l.s4 1983009808
          %v973 = vunpack.c.0.s8 %v972
          %v974 = vlaneseq
          %v975 = vshrl.u32 %v974, 7
          %v976 = vsub.s32 %v973, %v975
          %v977 = vrot.slane %v933, %v976
          %v979 = vunpack.c.l.s4 1983009808
          %v980 = vunpack.c.0.s8 %v979
          %v981 = vlaneseq
          %v982 = vshrl.u32 %v981, 7
          %v983 = vsub.s32 %v980, %v982
          %v984 = vrot.slane %v934, %v983
          %v986 = vunpack.c.l.s4 1983009808
          %v987 = vunpack.c.0.s8 %v986
          %v988 = vlaneseq
          %v989 = vshrl.u32 %v988, 7
          %v990 = vsub.s32 %v987, %v989
          %v991 = vrot.slane %v935, %v990
          %v993 = vunpack.c.l.s4 1983009808
          %v994 = vunpack.c.0.s8 %v993
          %v995 = vlaneseq
          %v996 = vshrl.u32 %v995, 7
          %v997 = vsub.s32 %v994, %v996
          %v998 = vrot.slane %v936, %v997
          %v1000 = vunpack.c.l.s4 1983009808
          %v1001 = vunpack.c.0.s8 %v1000
          %v1002 = vlaneseq
          %v1003 = vshrl.u32 %v1002, 7
          %v1004 = vsub.s32 %v1001, %v1003
          %v1005 = vrot.slane %v937, %v1004
          %v1007 = vunpack.c.l.s4 1983009808
          %v1008 = vunpack.c.0.s8 %v1007
          %v1009 = vlaneseq
          %v1010 = vshrl.u32 %v1009, 7
          %v1011 = vsub.s32 %v1008, %v1010
          %v1012 = vrot.slane %v938, %v1011
          %v1014 = vunpack.c.l.s4 1983009808
          %v1015 = vunpack.c.0.s8 %v1014
          %v1016 = vlaneseq
          %v1017 = vshrl.u32 %v1016, 7
          %v1018 = vsub.s32 %v1015, %v1017
          %v1019 = vrot.slane %v939, %v1018
          %v1020 = vunpack.c.l.b16 %v970
          %v1021 = vunpack.c.l.b16 %v977
          %v1022 = vunpack.c.l.b16 %v984
          %v1023 = vunpack.c.l.b16 %v991
          %v1024 = vunpack.c.l.b16 %v998
          %v1025 = vunpack.c.l.b16 %v1005
          %v1026 = vunpack.c.l.b16 %v1012
          %v1027 = vunpack.c.l.b16 %v1019
          %v1028 = vrot.slane %v1020, 1
          %v1029 = vsel %vm608, %v1021, %v1028
          %v1030 = vrot.slane %v1022, 7
          %v1031 = vsel %vm611, %v1030, %v1029
          %v1032 = vrot.slane %v1023, 6
          %v1033 = vsel %vm614, %v1032, %v1031
          %v1034 = vrot.slane %v1024, 5
          %v1035 = vsel %vm617, %v1034, %v1033
          %v1036 = vrot.slane %v1025, 4
          %v1037 = vsel %vm620, %v1036, %v1035
          %v1038 = vrot.slane %v1026, 3
          %v1039 = vsel %vm623, %v1038, %v1037
          %v1040 = vrot.slane %v1027, 2
          %v1041 = vsel %vm626, %v1040, %v1039
          %v1042 = vpack.c.b16 %v1041, %v1041
          %v1052 = vunpack.c.l.s4 1983009808
          %v1053 = vunpack.c.0.s8 %v1052
          %v1054 = vlaneseq
          %v1055 = vshrl.u32 %v1054, 7
          %v1056 = vsub.s32 %v1053, %v1055
          %v1057 = vrot.slane %v940, %v1056
          %v1059 = vunpack.c.l.s4 1983009808
          %v1060 = vunpack.c.0.s8 %v1059
          %v1061 = vlaneseq
          %v1062 = vshrl.u32 %v1061, 7
          %v1063 = vsub.s32 %v1060, %v1062
          %v1064 = vrot.slane %v941, %v1063
          %v1066 = vunpack.c.l.s4 1983009808
          %v1067 = vunpack.c.0.s8 %v1066
          %v1068 = vlaneseq
          %v1069 = vshrl.u32 %v1068, 7
          %v1070 = vsub.s32 %v1067, %v1069
          %v1071 = vrot.slane %v942, %v1070
          %v1073 = vunpack.c.l.s4 1983009808
          %v1074 = vunpack.c.0.s8 %v1073
          %v1075 = vlaneseq
          %v1076 = vshrl.u32 %v1075, 7
          %v1077 = vsub.s32 %v1074, %v1076
          %v1078 = vrot.slane %v943, %v1077
          %v1080 = vunpack.c.l.s4 1983009808
          %v1081 = vunpack.c.0.s8 %v1080
          %v1082 = vlaneseq
          %v1083 = vshrl.u32 %v1082, 7
          %v1084 = vsub.s32 %v1081, %v1083
          %v1085 = vrot.slane %v944, %v1084
          %v1087 = vunpack.c.l.s4 1983009808
          %v1088 = vunpack.c.0.s8 %v1087
          %v1089 = vlaneseq
          %v1090 = vshrl.u32 %v1089, 7
          %v1091 = vsub.s32 %v1088, %v1090
          %v1092 = vrot.slane %v945, %v1091
          %v1094 = vunpack.c.l.s4 1983009808
          %v1095 = vunpack.c.0.s8 %v1094
          %v1096 = vlaneseq
          %v1097 = vshrl.u32 %v1096, 7
          %v1098 = vsub.s32 %v1095, %v1097
          %v1099 = vrot.slane %v946, %v1098
          %v1101 = vunpack.c.l.s4 1983009808
          %v1102 = vunpack.c.0.s8 %v1101
          %v1103 = vlaneseq
          %v1104 = vshrl.u32 %v1103, 7
          %v1105 = vsub.s32 %v1102, %v1104
          %v1106 = vrot.slane %v947, %v1105
          %v1107 = vunpack.c.l.b16 %v1057
          %v1108 = vunpack.c.l.b16 %v1064
          %v1109 = vunpack.c.l.b16 %v1071
          %v1110 = vunpack.c.l.b16 %v1078
          %v1111 = vunpack.c.l.b16 %v1085
          %v1112 = vunpack.c.l.b16 %v1092
          %v1113 = vunpack.c.l.b16 %v1099
          %v1114 = vunpack.c.l.b16 %v1106
          %v1115 = vrot.slane %v1107, 1
          %v1116 = vsel %vm608, %v1108, %v1115
          %v1117 = vrot.slane %v1109, 7
          %v1118 = vsel %vm611, %v1117, %v1116
          %v1119 = vrot.slane %v1110, 6
          %v1120 = vsel %vm614, %v1119, %v1118
          %v1121 = vrot.slane %v1111, 5
          %v1122 = vsel %vm617, %v1121, %v1120
          %v1123 = vrot.slane %v1112, 4
          %v1124 = vsel %vm620, %v1123, %v1122
          %v1125 = vrot.slane %v1113, 3
          %v1126 = vsel %vm623, %v1125, %v1124
          %v1127 = vrot.slane %v1114, 2
          %v1128 = vsel %vm626, %v1127, %v1126
          %v1129 = vpack.c.b16 %v1128, %v1128
          %v1131 = vsel %vm716, %v1042, 0
          %v1134 = vsel %vm716, %v1129, 0
          %1136 = vmatprep.subr.bf16.mxu0 0
          %1137 = vmatpush1.bf16.xpose.msra.mxu0 0
          %1138 = vmatprep.subr.bf16.mxu0 0
          %1139 = vmatpush1.bf16.xpose.msra.mxu0 0
          %1140 = vmatprep.subr.bf16.mxu0 0
          %1141 = vmatpush1.bf16.xpose.msra.mxu0 0
          %1142 = vmatprep.subr.bf16.mxu0 0
          %1143 = vmatpush1.bf16.xpose.msra.mxu0 0
          %1144 = vmatprep.subr.bf16.mxu0 0
          %1145 = vmatpush1.bf16.xpose.msra.mxu0 0
          %1146 = vmatprep.subr.bf16.mxu0 0
          %1147 = vmatpush1.bf16.xpose.msra.mxu0 0
          %1148 = vmatprep.subr.bf16.mxu0 0
          %1149 = vmatpush1.bf16.xpose.msra.mxu0 0
          %1150 = vmatprep.subr.bf16.mxu0 0
          %1151 = vmatpush1.bf16.xpose.msra.mxu0 %v1134
          %1152 = vmatprep.subr.bf16.mxu0 0
          %1153 = vmatpush2.bf16.xpose.msra.mxu0 0
          %1154 = vmatprep.subr.bf16.mxu0 0
          %1155 = vmatpush2.bf16.xpose.msra.mxu0 0
          %1156 = vmatprep.subr.bf16.mxu0 0
          %1157 = vmatpush2.bf16.xpose.msra.mxu0 0
          %1158 = vmatprep.subr.bf16.mxu0 0
          %1159 = vmatpush2.bf16.xpose.msra.mxu0 0
          %1160 = vmatprep.subr.bf16.mxu0 0
          %1161 = vmatpush2.bf16.xpose.msra.mxu0 0
          %1162 = vmatprep.subr.bf16.mxu0 0
          %1163 = vmatpush2.bf16.xpose.msra.mxu0 0
          %1164 = vmatprep.subr.bf16.mxu0 0
          %1165 = vmatpush2.bf16.xpose.msra.mxu0 0
          %1166 = vmatprep.subr.bf16.mxu0 0
          %1167 = vmatpush2.bf16.xpose.msra.mxu0 0
          %1168 = vmatprep.mubr.bf16.mxu0 0
          %1169 = vmatmul.mubr.bf16.gmra.mxu0 %v1131
          %v1170 = vpop.f32.mrf.mxu0
          %v1171 = vadd.f32 0.0, %v1170
          %v1172 = vpop.f32.mrf.mxu0
          %v1173 = vpop.f32.mrf.mxu0
          %v1174 = vpop.f32.mrf.mxu0
          %1175 = vdwg.mxu0
          %s1176 = scalar_lea.vmem [#allocation2], 8
          %v1177 = vld [vmem:[%s1176] sm:$0xff]
          %v1178 = vsel %vm716, %v1171, -inf
          %1179 = vmax.xlane.f32.xlu0 %v1178
          %v1180 = vpop.xlane.xlu0 %1179
          %v1181 = vmax.f32 %v1177, %v1180
          %v1182 = vsub.f32 %v1177, %v1181
          %v1183 = vmul.f32 %v1182, 1.442695
          %v1184 = vpow.pop %v1183
          %1186 = vset.pattern.permute.xlu0 0
          %1187 = vperm.xlu0 %1186, %v1181
          %v1188 = vpop.permute.xlu0 %1187
          %v1190 = vsub.f32 %v1171, %v1188
          %v1191 = vmul.f32 %v1190, 1.442695
          %v1192 = vpow.pop %v1191
          %s1193 = scalar_lea.vmem [#allocation3], 8
          %v1194 = vld [vmem:[%s1193] sm:$0xff]
          %v1195 = vmul.f32 %v1184, %v1194
          %v1196 = vsel %vm716, %v1192, 0.0
          %1197 = vadd.xlane.f32.xlu0 %v1196
          %v1198 = vpop.xlane.xlu0 %1197
          %v1199 = vadd.f32 %v1195, %v1198
          %1200 = vst.msk [vmem:[%s1193] sm:$0xff] %vm785, %v1199
          %s1201 = scalar_lea.vmem [#allocation4], 8
          %v1202 = vld [vmem:[%s1201] sm:$0xff]
          %1204 = vset.pattern.permute.xlu0 0
          %1205 = vperm.xlu0 %1204, %v1184
          %v1206 = vpop.permute.xlu0 %1205
          %v1208 = vmul.f32 %v1206, %v1202
          %v1209 = vpack.c.bf16 %v1192, %v1192
          %v1219 = vunpack.c.l.s4 1983009808
          %v1220 = vunpack.c.0.s8 %v1219
          %v1221 = vlaneseq
          %v1222 = vshrl.u32 %v1221, 7
          %v1223 = vsub.s32 %v1220, %v1222
          %v1224 = vrot.slane %v948, %v1223
          %v1226 = vunpack.c.l.s4 1983009808
          %v1227 = vunpack.c.0.s8 %v1226
          %v1228 = vlaneseq
          %v1229 = vshrl.u32 %v1228, 7
          %v1230 = vsub.s32 %v1227, %v1229
          %v1231 = vrot.slane %v949, %v1230
          %v1233 = vunpack.c.l.s4 1983009808
          %v1234 = vunpack.c.0.s8 %v1233
          %v1235 = vlaneseq
          %v1236 = vshrl.u32 %v1235, 7
          %v1237 = vsub.s32 %v1234, %v1236
          %v1238 = vrot.slane %v950, %v1237
          %v1240 = vunpack.c.l.s4 1983009808
          %v1241 = vunpack.c.0.s8 %v1240
          %v1242 = vlaneseq
          %v1243 = vshrl.u32 %v1242, 7
          %v1244 = vsub.s32 %v1241, %v1243
          %v1245 = vrot.slane %v951, %v1244
          %v1247 = vunpack.c.l.s4 1983009808
          %v1248 = vunpack.c.0.s8 %v1247
          %v1249 = vlaneseq
          %v1250 = vshrl.u32 %v1249, 7
          %v1251 = vsub.s32 %v1248, %v1250
          %v1252 = vrot.slane %v952, %v1251
          %v1254 = vunpack.c.l.s4 1983009808
          %v1255 = vunpack.c.0.s8 %v1254
          %v1256 = vlaneseq
          %v1257 = vshrl.u32 %v1256, 7
          %v1258 = vsub.s32 %v1255, %v1257
          %v1259 = vrot.slane %v953, %v1258
          %v1261 = vunpack.c.l.s4 1983009808
          %v1262 = vunpack.c.0.s8 %v1261
          %v1263 = vlaneseq
          %v1264 = vshrl.u32 %v1263, 7
          %v1265 = vsub.s32 %v1262, %v1264
          %v1266 = vrot.slane %v954, %v1265
          %v1268 = vunpack.c.l.s4 1983009808
          %v1269 = vunpack.c.0.s8 %v1268
          %v1270 = vlaneseq
          %v1271 = vshrl.u32 %v1270, 7
          %v1272 = vsub.s32 %v1269, %v1271
          %v1273 = vrot.slane %v955, %v1272
          %v1274 = vunpack.c.l.b16 %v1224
          %v1275 = vunpack.c.l.b16 %v1231
          %v1276 = vunpack.c.l.b16 %v1238
          %v1277 = vunpack.c.l.b16 %v1245
          %v1278 = vunpack.c.l.b16 %v1252
          %v1279 = vunpack.c.l.b16 %v1259
          %v1280 = vunpack.c.l.b16 %v1266
          %v1281 = vunpack.c.l.b16 %v1273
          %v1282 = vrot.slane %v1274, 1
          %v1283 = vsel %vm608, %v1275, %v1282
          %v1284 = vrot.slane %v1276, 7
          %v1285 = vsel %vm611, %v1284, %v1283
          %v1286 = vrot.slane %v1277, 6
          %v1287 = vsel %vm614, %v1286, %v1285
          %v1288 = vrot.slane %v1278, 5
          %v1289 = vsel %vm617, %v1288, %v1287
          %v1290 = vrot.slane %v1279, 4
          %v1291 = vsel %vm620, %v1290, %v1289
          %v1292 = vrot.slane %v1280, 3
          %v1293 = vsel %vm623, %v1292, %v1291
          %v1294 = vrot.slane %v1281, 2
          %v1295 = vsel %vm626, %v1294, %v1293
          %v1296 = vpack.c.b16 %v1295, %v1295
          %v1298 = vsel %vm716, %v1209, 0
          %v1301 = vsel %vm885, %v1296, 0
          %1303 = vmatprep.subr.bf16.mxu0 0
          %1304 = vmatpush1.bf16.msra.mxu0 0
          %1305 = vmatprep.subr.bf16.mxu0 0
          %1306 = vmatpush1.bf16.msra.mxu0 0
          %1307 = vmatprep.subr.bf16.mxu0 0
          %1308 = vmatpush1.bf16.msra.mxu0 0
          %1309 = vmatprep.subr.bf16.mxu0 0
          %1310 = vmatpush1.bf16.msra.mxu0 0
          %1311 = vmatprep.subr.bf16.mxu0 0
          %1312 = vmatpush1.bf16.msra.mxu0 0
          %1313 = vmatprep.subr.bf16.mxu0 0
          %1314 = vmatpush1.bf16.msra.mxu0 0
          %1315 = vmatprep.subr.bf16.mxu0 0
          %1316 = vmatpush1.bf16.msra.mxu0 0
          %1317 = vmatprep.subr.bf16.mxu0 0
          %1318 = vmatpush1.bf16.msra.mxu0 %v1301
          %1319 = vmatprep.subr.bf16.mxu0 0
          %1320 = vmatpush2.bf16.msra.mxu0 0
          %1321 = vmatprep.subr.bf16.mxu0 0
          %1322 = vmatpush2.bf16.msra.mxu0 0
          %1323 = vmatprep.subr.bf16.mxu0 0
          %1324 = vmatpush2.bf16.msra.mxu0 0
          %1325 = vmatprep.subr.bf16.mxu0 0
          %1326 = vmatpush2.bf16.msra.mxu0 0
          %1327 = vmatprep.subr.bf16.mxu0 0
          %1328 = vmatpush2.bf16.msra.mxu0 0
          %1329 = vmatprep.subr.bf16.mxu0 0
          %1330 = vmatpush2.bf16.msra.mxu0 0
          %1331 = vmatprep.subr.bf16.mxu0 0
          %1332 = vmatpush2.bf16.msra.mxu0 0
          %1333 = vmatprep.subr.bf16.mxu0 0
          %1334 = vmatpush2.bf16.msra.mxu0 0
          %1335 = vmatprep.mubr.bf16.mxu0 0
          %1336 = vmatmul.mubr.bf16.gmra.mxu0 %v1298
          %v1337 = vpop.f32.mrf.mxu0
          %v1338 = vadd.f32 0.0, %v1337
          %v1339 = vpop.f32.mrf.mxu0
          %v1340 = vpop.f32.mrf.mxu0
          %v1341 = vpop.f32.mrf.mxu0
          %1342 = vdwg.mxu0
          %v1343 = vadd.f32 %v1208, %v1338
          %1344 = vst.msk [vmem:[%s1201] sm:$0xff] %vm716, %v1343
          %1345 = vst.msk [vmem:[%s1176] sm:$0xff] %vm785, %v1181
          %v1346 = vld [vmem:[%s429] sm:$0x2]
          %v1347 = vld [vmem:[%s429 + $0x2] sm:$0x2]
          %v1348 = vld [vmem:[%s429 + $0x4] sm:$0x2]
          %v1349 = vld [vmem:[%s429 + $0x6] sm:$0x2]
          %v1350 = vld [vmem:[%s429 + $0x8] sm:$0x2]
          %v1351 = vld [vmem:[%s429 + $0xa] sm:$0x2]
          %v1352 = vld [vmem:[%s429 + $0xc] sm:$0x2]
          %v1353 = vld [vmem:[%s429 + $0xe] sm:$0x2]
          %v1354 = vld [vmem:[%s436] sm:$0x2]
          %v1355 = vld [vmem:[%s436 + $0x2] sm:$0x2]
          %v1356 = vld [vmem:[%s436 + $0x4] sm:$0x2]
          %v1357 = vld [vmem:[%s436 + $0x6] sm:$0x2]
          %v1358 = vld [vmem:[%s436 + $0x8] sm:$0x2]
          %v1359 = vld [vmem:[%s436 + $0xa] sm:$0x2]
          %v1360 = vld [vmem:[%s436 + $0xc] sm:$0x2]
          %v1361 = vld [vmem:[%s436 + $0xe] sm:$0x2]
          %v1362 = vld [vmem:[%s443] sm:$0x2]
          %v1363 = vld [vmem:[%s443 + $0x2] sm:$0x2]
          %v1364 = vld [vmem:[%s443 + $0x4] sm:$0x2]
          %v1365 = vld [vmem:[%s443 + $0x6] sm:$0x2]
          %v1366 = vld [vmem:[%s443 + $0x8] sm:$0x2]
          %v1367 = vld [vmem:[%s443 + $0xa] sm:$0x2]
          %v1368 = vld [vmem:[%s443 + $0xc] sm:$0x2]
          %v1369 = vld [vmem:[%s443 + $0xe] sm:$0x2]
          %v1379 = vunpack.c.l.s4 1983009808
          %v1380 = vunpack.c.0.s8 %v1379
          %v1381 = vlaneseq
          %v1382 = vshrl.u32 %v1381, 7
          %v1383 = vsub.s32 %v1380, %v1382
          %v1384 = vrot.slane %v1346, %v1383
          %v1386 = vunpack.c.l.s4 1983009808
          %v1387 = vunpack.c.0.s8 %v1386
          %v1388 = vlaneseq
          %v1389 = vshrl.u32 %v1388, 7
          %v1390 = vsub.s32 %v1387, %v1389
          %v1391 = vrot.slane %v1347, %v1390
          %v1393 = vunpack.c.l.s4 1983009808
          %v1394 = vunpack.c.0.s8 %v1393
          %v1395 = vlaneseq
          %v1396 = vshrl.u32 %v1395, 7
          %v1397 = vsub.s32 %v1394, %v1396
          %v1398 = vrot.slane %v1348, %v1397
          %v1400 = vunpack.c.l.s4 1983009808
          %v1401 = vunpack.c.0.s8 %v1400
          %v1402 = vlaneseq
          %v1403 = vshrl.u32 %v1402, 7
          %v1404 = vsub.s32 %v1401, %v1403
          %v1405 = vrot.slane %v1349, %v1404
          %v1407 = vunpack.c.l.s4 1983009808
          %v1408 = vunpack.c.0.s8 %v1407
          %v1409 = vlaneseq
          %v1410 = vshrl.u32 %v1409, 7
          %v1411 = vsub.s32 %v1408, %v1410
          %v1412 = vrot.slane %v1350, %v1411
          %v1414 = vunpack.c.l.s4 1983009808
          %v1415 = vunpack.c.0.s8 %v1414
          %v1416 = vlaneseq
          %v1417 = vshrl.u32 %v1416, 7
          %v1418 = vsub.s32 %v1415, %v1417
          %v1419 = vrot.slane %v1351, %v1418
          %v1421 = vunpack.c.l.s4 1983009808
          %v1422 = vunpack.c.0.s8 %v1421
          %v1423 = vlaneseq
          %v1424 = vshrl.u32 %v1423, 7
          %v1425 = vsub.s32 %v1422, %v1424
          %v1426 = vrot.slane %v1352, %v1425
          %v1428 = vunpack.c.l.s4 1983009808
          %v1429 = vunpack.c.0.s8 %v1428
          %v1430 = vlaneseq
          %v1431 = vshrl.u32 %v1430, 7
          %v1432 = vsub.s32 %v1429, %v1431
          %v1433 = vrot.slane %v1353, %v1432
          %v1434 = vunpack.c.l.b16 %v1384
          %v1435 = vunpack.c.l.b16 %v1391
          %v1436 = vunpack.c.l.b16 %v1398
          %v1437 = vunpack.c.l.b16 %v1405
          %v1438 = vunpack.c.l.b16 %v1412
          %v1439 = vunpack.c.l.b16 %v1419
          %v1440 = vunpack.c.l.b16 %v1426
          %v1441 = vunpack.c.l.b16 %v1433
          %v1442 = vrot.slane %v1434, 2
          %v1443 = vrot.slane %v1435, 1
          %v1444 = vsel %vm608, %v1443, %v1442
          %v1445 = vsel %vm611, %v1436, %v1444
          %v1446 = vrot.slane %v1437, 7
          %v1447 = vsel %vm614, %v1446, %v1445
          %v1448 = vrot.slane %v1438, 6
          %v1449 = vsel %vm617, %v1448, %v1447
          %v1450 = vrot.slane %v1439, 5
          %v1451 = vsel %vm620, %v1450, %v1449
          %v1452 = vrot.slane %v1440, 4
          %v1453 = vsel %vm623, %v1452, %v1451
          %v1454 = vrot.slane %v1441, 3
          %v1455 = vsel %vm626, %v1454, %v1453
          %v1456 = vpack.c.b16 %v1455, %v1455
          %v1466 = vunpack.c.l.s4 1983009808
          %v1467 = vunpack.c.0.s8 %v1466
          %v1468 = vlaneseq
          %v1469 = vshrl.u32 %v1468, 7
          %v1470 = vsub.s32 %v1467, %v1469
          %v1471 = vrot.slane %v1354, %v1470
          %v1473 = vunpack.c.l.s4 1983009808
          %v1474 = vunpack.c.0.s8 %v1473
          %v1475 = vlaneseq
          %v1476 = vshrl.u32 %v1475, 7
          %v1477 = vsub.s32 %v1474, %v1476
          %v1478 = vrot.slane %v1355, %v1477
          %v1480 = vunpack.c.l.s4 1983009808
          %v1481 = vunpack.c.0.s8 %v1480
          %v1482 = vlaneseq
          %v1483 = vshrl.u32 %v1482, 7
          %v1484 = vsub.s32 %v1481, %v1483
          %v1485 = vrot.slane %v1356, %v1484
          %v1487 = vunpack.c.l.s4 1983009808
          %v1488 = vunpack.c.0.s8 %v1487
          %v1489 = vlaneseq
          %v1490 = vshrl.u32 %v1489, 7
          %v1491 = vsub.s32 %v1488, %v1490
          %v1492 = vrot.slane %v1357, %v1491
          %v1494 = vunpack.c.l.s4 1983009808
          %v1495 = vunpack.c.0.s8 %v1494
          %v1496 = vlaneseq
          %v1497 = vshrl.u32 %v1496, 7
          %v1498 = vsub.s32 %v1495, %v1497
          %v1499 = vrot.slane %v1358, %v1498
          %v1501 = vunpack.c.l.s4 1983009808
          %v1502 = vunpack.c.0.s8 %v1501
          %v1503 = vlaneseq
          %v1504 = vshrl.u32 %v1503, 7
          %v1505 = vsub.s32 %v1502, %v1504
          %v1506 = vrot.slane %v1359, %v1505
          %v1508 = vunpack.c.l.s4 1983009808
          %v1509 = vunpack.c.0.s8 %v1508
          %v1510 = vlaneseq
          %v1511 = vshrl.u32 %v1510, 7
          %v1512 = vsub.s32 %v1509, %v1511
          %v1513 = vrot.slane %v1360, %v1512
          %v1515 = vunpack.c.l.s4 1983009808
          %v1516 = vunpack.c.0.s8 %v1515
          %v1517 = vlaneseq
          %v1518 = vshrl.u32 %v1517, 7
          %v1519 = vsub.s32 %v1516, %v1518
          %v1520 = vrot.slane %v1361, %v1519
          %v1521 = vunpack.c.l.b16 %v1471
          %v1522 = vunpack.c.l.b16 %v1478
          %v1523 = vunpack.c.l.b16 %v1485
          %v1524 = vunpack.c.l.b16 %v1492
          %v1525 = vunpack.c.l.b16 %v1499
          %v1526 = vunpack.c.l.b16 %v1506
          %v1527 = vunpack.c.l.b16 %v1513
          %v1528 = vunpack.c.l.b16 %v1520
          %v1529 = vrot.slane %v1521, 2
          %v1530 = vrot.slane %v1522, 1
          %v1531 = vsel %vm608, %v1530, %v1529
          %v1532 = vsel %vm611, %v1523, %v1531
          %v1533 = vrot.slane %v1524, 7
          %v1534 = vsel %vm614, %v1533, %v1532
          %v1535 = vrot.slane %v1525, 6
          %v1536 = vsel %vm617, %v1535, %v1534
          %v1537 = vrot.slane %v1526, 5
          %v1538 = vsel %vm620, %v1537, %v1536
          %v1539 = vrot.slane %v1527, 4
          %v1540 = vsel %vm623, %v1539, %v1538
          %v1541 = vrot.slane %v1528, 3
          %v1542 = vsel %vm626, %v1541, %v1540
          %v1543 = vpack.c.b16 %v1542, %v1542
          %v1545 = vsel %vm716, %v1456, 0
          %v1548 = vsel %vm716, %v1543, 0
          %1550 = vmatprep.subr.bf16.mxu0 0
          %1551 = vmatpush1.bf16.xpose.msra.mxu0 0
          %1552 = vmatprep.subr.bf16.mxu0 0
          %1553 = vmatpush1.bf16.xpose.msra.mxu0 0
          %1554 = vmatprep.subr.bf16.mxu0 0
          %1555 = vmatpush1.bf16.xpose.msra.mxu0 0
          %1556 = vmatprep.subr.bf16.mxu0 0
          %1557 = vmatpush1.bf16.xpose.msra.mxu0 0
          %1558 = vmatprep.subr.bf16.mxu0 0
          %1559 = vmatpush1.bf16.xpose.msra.mxu0 0
          %1560 = vmatprep.subr.bf16.mxu0 0
          %1561 = vmatpush1.bf16.xpose.msra.mxu0 0
          %1562 = vmatprep.subr.bf16.mxu0 0
          %1563 = vmatpush1.bf16.xpose.msra.mxu0 0
          %1564 = vmatprep.subr.bf16.mxu0 0
          %1565 = vmatpush1.bf16.xpose.msra.mxu0 %v1548
          %1566 = vmatprep.subr.bf16.mxu0 0
          %1567 = vmatpush2.bf16.xpose.msra.mxu0 0
          %1568 = vmatprep.subr.bf16.mxu0 0
          %1569 = vmatpush2.bf16.xpose.msra.mxu0 0
          %1570 = vmatprep.subr.bf16.mxu0 0
          %1571 = vmatpush2.bf16.xpose.msra.mxu0 0
          %1572 = vmatprep.subr.bf16.mxu0 0
          %1573 = vmatpush2.bf16.xpose.msra.mxu0 0
          %1574 = vmatprep.subr.bf16.mxu0 0
          %1575 = vmatpush2.bf16.xpose.msra.mxu0 0
          %1576 = vmatprep.subr.bf16.mxu0 0
          %1577 = vmatpush2.bf16.xpose.msra.mxu0 0
          %1578 = vmatprep.subr.bf16.mxu0 0
          %1579 = vmatpush2.bf16.xpose.msra.mxu0 0
          %1580 = vmatprep.subr.bf16.mxu0 0
          %1581 = vmatpush2.bf16.xpose.msra.mxu0 0
          %1582 = vmatprep.mubr.bf16.mxu0 0
          %1583 = vmatmul.mubr.bf16.gmra.mxu0 %v1545
          %v1584 = vpop.f32.mrf.mxu0
          %v1585 = vadd.f32 0.0, %v1584
          %v1586 = vpop.f32.mrf.mxu0
          %v1587 = vpop.f32.mrf.mxu0
          %v1588 = vpop.f32.mrf.mxu0
          %1589 = vdwg.mxu0
          %s1590 = scalar_lea.vmem [#allocation2], 16
          %v1591 = vld [vmem:[%s1590] sm:$0xff]
          %v1592 = vsel %vm716, %v1585, -inf
          %1593 = vmax.xlane.f32.xlu0 %v1592
          %v1594 = vpop.xlane.xlu0 %1593
          %v1595 = vmax.f32 %v1591, %v1594
          %v1596 = vsub.f32 %v1591, %v1595
          %v1597 = vmul.f32 %v1596, 1.442695
          %v1598 = vpow.pop %v1597
          %1600 = vset.pattern.permute.xlu0 0
          %1601 = vperm.xlu0 %1600, %v1595
          %v1602 = vpop.permute.xlu0 %1601
          %v1604 = vsub.f32 %v1585, %v1602
          %v1605 = vmul.f32 %v1604, 1.442695
          %v1606 = vpow.pop %v1605
          %s1607 = scalar_lea.vmem [#allocation3], 16
          %v1608 = vld [vmem:[%s1607] sm:$0xff]
          %v1609 = vmul.f32 %v1598, %v1608
          %v1610 = vsel %vm716, %v1606, 0.0
          %1611 = vadd.xlane.f32.xlu0 %v1610
          %v1612 = vpop.xlane.xlu0 %1611
          %v1613 = vadd.f32 %v1609, %v1612
          %1614 = vst.msk [vmem:[%s1607] sm:$0xff] %vm785, %v1613
          %s1615 = scalar_lea.vmem [#allocation4], 16
          %v1616 = vld [vmem:[%s1615] sm:$0xff]
          %1618 = vset.pattern.permute.xlu0 0
          %1619 = vperm.xlu0 %1618, %v1598
          %v1620 = vpop.permute.xlu0 %1619
          %v1622 = vmul.f32 %v1620, %v1616
          %v1623 = vpack.c.bf16 %v1606, %v1606
          %v1633 = vunpack.c.l.s4 1983009808
          %v1634 = vunpack.c.0.s8 %v1633
          %v1635 = vlaneseq
          %v1636 = vshrl.u32 %v1635, 7
          %v1637 = vsub.s32 %v1634, %v1636
          %v1638 = vrot.slane %v1362, %v1637
          %v1640 = vunpack.c.l.s4 1983009808
          %v1641 = vunpack.c.0.s8 %v1640
          %v1642 = vlaneseq
          %v1643 = vshrl.u32 %v1642, 7
          %v1644 = vsub.s32 %v1641, %v1643
          %v1645 = vrot.slane %v1363, %v1644
          %v1647 = vunpack.c.l.s4 1983009808
          %v1648 = vunpack.c.0.s8 %v1647
          %v1649 = vlaneseq
          %v1650 = vshrl.u32 %v1649, 7
          %v1651 = vsub.s32 %v1648, %v1650
          %v1652 = vrot.slane %v1364, %v1651
          %v1654 = vunpack.c.l.s4 1983009808
          %v1655 = vunpack.c.0.s8 %v1654
          %v1656 = vlaneseq
          %v1657 = vshrl.u32 %v1656, 7
          %v1658 = vsub.s32 %v1655, %v1657
          %v1659 = vrot.slane %v1365, %v1658
          %v1661 = vunpack.c.l.s4 1983009808
          %v1662 = vunpack.c.0.s8 %v1661
          %v1663 = vlaneseq
          %v1664 = vshrl.u32 %v1663, 7
          %v1665 = vsub.s32 %v1662, %v1664
          %v1666 = vrot.slane %v1366, %v1665
          %v1668 = vunpack.c.l.s4 1983009808
          %v1669 = vunpack.c.0.s8 %v1668
          %v1670 = vlaneseq
          %v1671 = vshrl.u32 %v1670, 7
          %v1672 = vsub.s32 %v1669, %v1671
          %v1673 = vrot.slane %v1367, %v1672
          %v1675 = vunpack.c.l.s4 1983009808
          %v1676 = vunpack.c.0.s8 %v1675
          %v1677 = vlaneseq
          %v1678 = vshrl.u32 %v1677, 7
          %v1679 = vsub.s32 %v1676, %v1678
          %v1680 = vrot.slane %v1368, %v1679
          %v1682 = vunpack.c.l.s4 1983009808
          %v1683 = vunpack.c.0.s8 %v1682
          %v1684 = vlaneseq
          %v1685 = vshrl.u32 %v1684, 7
          %v1686 = vsub.s32 %v1683, %v1685
          %v1687 = vrot.slane %v1369, %v1686
          %v1688 = vunpack.c.l.b16 %v1638
          %v1689 = vunpack.c.l.b16 %v1645
          %v1690 = vunpack.c.l.b16 %v1652
          %v1691 = vunpack.c.l.b16 %v1659
          %v1692 = vunpack.c.l.b16 %v1666
          %v1693 = vunpack.c.l.b16 %v1673
          %v1694 = vunpack.c.l.b16 %v1680
          %v1695 = vunpack.c.l.b16 %v1687
          %v1696 = vrot.slane %v1688, 2
          %v1697 = vrot.slane %v1689, 1
          %v1698 = vsel %vm608, %v1697, %v1696
          %v1699 = vsel %vm611, %v1690, %v1698
          %v1700 = vrot.slane %v1691, 7
          %v1701 = vsel %vm614, %v1700, %v1699
          %v1702 = vrot.slane %v1692, 6
          %v1703 = vsel %vm617, %v1702, %v1701
          %v1704 = vrot.slane %v1693, 5
          %v1705 = vsel %vm620, %v1704, %v1703
          %v1706 = vrot.slane %v1694, 4
          %v1707 = vsel %vm623, %v1706, %v1705
          %v1708 = vrot.slane %v1695, 3
          %v1709 = vsel %vm626, %v1708, %v1707
          %v1710 = vpack.c.b16 %v1709, %v1709
          %v1712 = vsel %vm716, %v1623, 0
          %v1715 = vsel %vm885, %v1710, 0
          %1717 = vmatprep.subr.bf16.mxu0 0
          %1718 = vmatpush1.bf16.msra.mxu0 0
          %1719 = vmatprep.subr.bf16.mxu0 0
          %1720 = vmatpush1.bf16.msra.mxu0 0
          %1721 = vmatprep.subr.bf16.mxu0 0
          %1722 = vmatpush1.bf16.msra.mxu0 0
          %1723 = vmatprep.subr.bf16.mxu0 0
          %1724 = vmatpush1.bf16.msra.mxu0 0
          %1725 = vmatprep.subr.bf16.mxu0 0
          %1726 = vmatpush1.bf16.msra.mxu0 0
          %1727 = vmatprep.subr.bf16.mxu0 0
          %1728 = vmatpush1.bf16.msra.mxu0 0
          %1729 = vmatprep.subr.bf16.mxu0 0
          %1730 = vmatpush1.bf16.msra.mxu0 0
          %1731 = vmatprep.subr.bf16.mxu0 0
          %1732 = vmatpush1.bf16.msra.mxu0 %v1715
          %1733 = vmatprep.subr.bf16.mxu0 0
          %1734 = vmatpush2.bf16.msra.mxu0 0
          %1735 = vmatprep.subr.bf16.mxu0 0
          %1736 = vmatpush2.bf16.msra.mxu0 0
          %1737 = vmatprep.subr.bf16.mxu0 0
          %1738 = vmatpush2.bf16.msra.mxu0 0
          %1739 = vmatprep.subr.bf16.mxu0 0
          %1740 = vmatpush2.bf16.msra.mxu0 0
          %1741 = vmatprep.subr.bf16.mxu0 0
          %1742 = vmatpush2.bf16.msra.mxu0 0
          %1743 = vmatprep.subr.bf16.mxu0 0
          %1744 = vmatpush2.bf16.msra.mxu0 0
          %1745 = vmatprep.subr.bf16.mxu0 0
          %1746 = vmatpush2.bf16.msra.mxu0 0
          %1747 = vmatprep.subr.bf16.mxu0 0
          %1748 = vmatpush2.bf16.msra.mxu0 0
          %1749 = vmatprep.mubr.bf16.mxu0 0
          %1750 = vmatmul.mubr.bf16.gmra.mxu0 %v1712
          %v1751 = vpop.f32.mrf.mxu0
          %v1752 = vadd.f32 0.0, %v1751
          %v1753 = vpop.f32.mrf.mxu0
          %v1754 = vpop.f32.mrf.mxu0
          %v1755 = vpop.f32.mrf.mxu0
          %1756 = vdwg.mxu0
          %v1757 = vadd.f32 %v1622, %v1752
          %1758 = vst.msk [vmem:[%s1615] sm:$0xff] %vm716, %v1757
          %1759 = vst.msk [vmem:[%s1590] sm:$0xff] %vm785, %v1595
          %v1760 = vld [vmem:[%s429] sm:$0x2]
          %v1761 = vld [vmem:[%s429 + $0x2] sm:$0x2]
          %v1762 = vld [vmem:[%s429 + $0x4] sm:$0x2]
          %v1763 = vld [vmem:[%s429 + $0x6] sm:$0x2]
          %v1764 = vld [vmem:[%s429 + $0x8] sm:$0x2]
          %v1765 = vld [vmem:[%s429 + $0xa] sm:$0x2]
          %v1766 = vld [vmem:[%s429 + $0xc] sm:$0x2]
          %v1767 = vld [vmem:[%s429 + $0xe] sm:$0x2]
          %v1768 = vld [vmem:[%s436] sm:$0x2]
          %v1769 = vld [vmem:[%s436 + $0x2] sm:$0x2]
          %v1770 = vld [vmem:[%s436 + $0x4] sm:$0x2]
          %v1771 = vld [vmem:[%s436 + $0x6] sm:$0x2]
          %v1772 = vld [vmem:[%s436 + $0x8] sm:$0x2]
          %v1773 = vld [vmem:[%s436 + $0xa] sm:$0x2]
          %v1774 = vld [vmem:[%s436 + $0xc] sm:$0x2]
          %v1775 = vld [vmem:[%s436 + $0xe] sm:$0x2]
          %v1776 = vld [vmem:[%s443] sm:$0x2]
          %v1777 = vld [vmem:[%s443 + $0x2] sm:$0x2]
          %v1778 = vld [vmem:[%s443 + $0x4] sm:$0x2]
          %v1779 = vld [vmem:[%s443 + $0x6] sm:$0x2]
          %v1780 = vld [vmem:[%s443 + $0x8] sm:$0x2]
          %v1781 = vld [vmem:[%s443 + $0xa] sm:$0x2]
          %v1782 = vld [vmem:[%s443 + $0xc] sm:$0x2]
          %v1783 = vld [vmem:[%s443 + $0xe] sm:$0x2]
          %v1793 = vunpack.c.l.s4 1983009808
          %v1794 = vunpack.c.0.s8 %v1793
          %v1795 = vlaneseq
          %v1796 = vshrl.u32 %v1795, 7
          %v1797 = vsub.s32 %v1794, %v1796
          %v1798 = vrot.slane %v1760, %v1797
          %v1800 = vunpack.c.l.s4 1983009808
          %v1801 = vunpack.c.0.s8 %v1800
          %v1802 = vlaneseq
          %v1803 = vshrl.u32 %v1802, 7
          %v1804 = vsub.s32 %v1801, %v1803
          %v1805 = vrot.slane %v1761, %v1804
          %v1807 = vunpack.c.l.s4 1983009808
          %v1808 = vunpack.c.0.s8 %v1807
          %v1809 = vlaneseq
          %v1810 = vshrl.u32 %v1809, 7
          %v1811 = vsub.s32 %v1808, %v1810
          %v1812 = vrot.slane %v1762, %v1811
          %v1814 = vunpack.c.l.s4 1983009808
          %v1815 = vunpack.c.0.s8 %v1814
          %v1816 = vlaneseq
          %v1817 = vshrl.u32 %v1816, 7
          %v1818 = vsub.s32 %v1815, %v1817
          %v1819 = vrot.slane %v1763, %v1818
          %v1821 = vunpack.c.l.s4 1983009808
          %v1822 = vunpack.c.0.s8 %v1821
          %v1823 = vlaneseq
          %v1824 = vshrl.u32 %v1823, 7
          %v1825 = vsub.s32 %v1822, %v1824
          %v1826 = vrot.slane %v1764, %v1825
          %v1828 = vunpack.c.l.s4 1983009808
          %v1829 = vunpack.c.0.s8 %v1828
          %v1830 = vlaneseq
          %v1831 = vshrl.u32 %v1830, 7
          %v1832 = vsub.s32 %v1829, %v1831
          %v1833 = vrot.slane %v1765, %v1832
          %v1835 = vunpack.c.l.s4 1983009808
          %v1836 = vunpack.c.0.s8 %v1835
          %v1837 = vlaneseq
          %v1838 = vshrl.u32 %v1837, 7
          %v1839 = vsub.s32 %v1836, %v1838
          %v1840 = vrot.slane %v1766, %v1839
          %v1842 = vunpack.c.l.s4 1983009808
          %v1843 = vunpack.c.0.s8 %v1842
          %v1844 = vlaneseq
          %v1845 = vshrl.u32 %v1844, 7
          %v1846 = vsub.s32 %v1843, %v1845
          %v1847 = vrot.slane %v1767, %v1846
          %v1848 = vunpack.c.l.b16 %v1798
          %v1849 = vunpack.c.l.b16 %v1805
          %v1850 = vunpack.c.l.b16 %v1812
          %v1851 = vunpack.c.l.b16 %v1819
          %v1852 = vunpack.c.l.b16 %v1826
          %v1853 = vunpack.c.l.b16 %v1833
          %v1854 = vunpack.c.l.b16 %v1840
          %v1855 = vunpack.c.l.b16 %v1847
          %v1856 = vrot.slane %v1848, 3
          %v1857 = vrot.slane %v1849, 2
          %v1858 = vsel %vm608, %v1857, %v1856
          %v1859 = vrot.slane %v1850, 1
          %v1860 = vsel %vm611, %v1859, %v1858
          %v1861 = vsel %vm614, %v1851, %v1860
          %v1862 = vrot.slane %v1852, 7
          %v1863 = vsel %vm617, %v1862, %v1861
          %v1864 = vrot.slane %v1853, 6
          %v1865 = vsel %vm620, %v1864, %v1863
          %v1866 = vrot.slane %v1854, 5
          %v1867 = vsel %vm623, %v1866, %v1865
          %v1868 = vrot.slane %v1855, 4
          %v1869 = vsel %vm626, %v1868, %v1867
          %v1870 = vpack.c.b16 %v1869, %v1869
          %v1880 = vunpack.c.l.s4 1983009808
          %v1881 = vunpack.c.0.s8 %v1880
          %v1882 = vlaneseq
          %v1883 = vshrl.u32 %v1882, 7
          %v1884 = vsub.s32 %v1881, %v1883
          %v1885 = vrot.slane %v1768, %v1884
          %v1887 = vunpack.c.l.s4 1983009808
          %v1888 = vunpack.c.0.s8 %v1887
          %v1889 = vlaneseq
          %v1890 = vshrl.u32 %v1889, 7
          %v1891 = vsub.s32 %v1888, %v1890
          %v1892 = vrot.slane %v1769, %v1891
          %v1894 = vunpack.c.l.s4 1983009808
          %v1895 = vunpack.c.0.s8 %v1894
          %v1896 = vlaneseq
          %v1897 = vshrl.u32 %v1896, 7
          %v1898 = vsub.s32 %v1895, %v1897
          %v1899 = vrot.slane %v1770, %v1898
          %v1901 = vunpack.c.l.s4 1983009808
          %v1902 = vunpack.c.0.s8 %v1901
          %v1903 = vlaneseq
          %v1904 = vshrl.u32 %v1903, 7
          %v1905 = vsub.s32 %v1902, %v1904
          %v1906 = vrot.slane %v1771, %v1905
          %v1908 = vunpack.c.l.s4 1983009808
          %v1909 = vunpack.c.0.s8 %v1908
          %v1910 = vlaneseq
          %v1911 = vshrl.u32 %v1910, 7
          %v1912 = vsub.s32 %v1909, %v1911
          %v1913 = vrot.slane %v1772, %v1912
          %v1915 = vunpack.c.l.s4 1983009808
          %v1916 = vunpack.c.0.s8 %v1915
          %v1917 = vlaneseq
          %v1918 = vshrl.u32 %v1917, 7
          %v1919 = vsub.s32 %v1916, %v1918
          %v1920 = vrot.slane %v1773, %v1919
          %v1922 = vunpack.c.l.s4 1983009808
          %v1923 = vunpack.c.0.s8 %v1922
          %v1924 = vlaneseq
          %v1925 = vshrl.u32 %v1924, 7
          %v1926 = vsub.s32 %v1923, %v1925
          %v1927 = vrot.slane %v1774, %v1926
          %v1929 = vunpack.c.l.s4 1983009808
          %v1930 = vunpack.c.0.s8 %v1929
          %v1931 = vlaneseq
          %v1932 = vshrl.u32 %v1931, 7
          %v1933 = vsub.s32 %v1930, %v1932
          %v1934 = vrot.slane %v1775, %v1933
          %v1935 = vunpack.c.l.b16 %v1885
          %v1936 = vunpack.c.l.b16 %v1892
          %v1937 = vunpack.c.l.b16 %v1899
          %v1938 = vunpack.c.l.b16 %v1906
          %v1939 = vunpack.c.l.b16 %v1913
          %v1940 = vunpack.c.l.b16 %v1920
          %v1941 = vunpack.c.l.b16 %v1927
          %v1942 = vunpack.c.l.b16 %v1934
          %v1943 = vrot.slane %v1935, 3
          %v1944 = vrot.slane %v1936, 2
          %v1945 = vsel %vm608, %v1944, %v1943
          %v1946 = vrot.slane %v1937, 1
          %v1947 = vsel %vm611, %v1946, %v1945
          %v1948 = vsel %vm614, %v1938, %v1947
          %v1949 = vrot.slane %v1939, 7
          %v1950 = vsel %vm617, %v1949, %v1948
          %v1951 = vrot.slane %v1940, 6
          %v1952 = vsel %vm620, %v1951, %v1950
          %v1953 = vrot.slane %v1941, 5
          %v1954 = vsel %vm623, %v1953, %v1952
          %v1955 = vrot.slane %v1942, 4
          %v1956 = vsel %vm626, %v1955, %v1954
          %v1957 = vpack.c.b16 %v1956, %v1956
          %v1959 = vsel %vm716, %v1870, 0
          %v1962 = vsel %vm716, %v1957, 0
          %1964 = vmatprep.subr.bf16.mxu0 0
          %1965 = vmatpush1.bf16.xpose.msra.mxu0 0
          %1966 = vmatprep.subr.bf16.mxu0 0
          %1967 = vmatpush1.bf16.xpose.msra.mxu0 0
          %1968 = vmatprep.subr.bf16.mxu0 0
          %1969 = vmatpush1.bf16.xpose.msra.mxu0 0
          %1970 = vmatprep.subr.bf16.mxu0 0
          %1971 = vmatpush1.bf16.xpose.msra.mxu0 0
          %1972 = vmatprep.subr.bf16.mxu0 0
          %1973 = vmatpush1.bf16.xpose.msra.mxu0 0
          %1974 = vmatprep.subr.bf16.mxu0 0
          %1975 = vmatpush1.bf16.xpose.msra.mxu0 0
          %1976 = vmatprep.subr.bf16.mxu0 0
          %1977 = vmatpush1.bf16.xpose.msra.mxu0 0
          %1978 = vmatprep.subr.bf16.mxu0 0
          %1979 = vmatpush1.bf16.xpose.msra.mxu0 %v1962
          %1980 = vmatprep.subr.bf16.mxu0 0
          %1981 = vmatpush2.bf16.xpose.msra.mxu0 0
          %1982 = vmatprep.subr.bf16.mxu0 0
          %1983 = vmatpush2.bf16.xpose.msra.mxu0 0
          %1984 = vmatprep.subr.bf16.mxu0 0
          %1985 = vmatpush2.bf16.xpose.msra.mxu0 0
          %1986 = vmatprep.subr.bf16.mxu0 0
          %1987 = vmatpush2.bf16.xpose.msra.mxu0 0
          %1988 = vmatprep.subr.bf16.mxu0 0
          %1989 = vmatpush2.bf16.xpose.msra.mxu0 0
          %1990 = vmatprep.subr.bf16.mxu0 0
          %1991 = vmatpush2.bf16.xpose.msra.mxu0 0
          %1992 = vmatprep.subr.bf16.mxu0 0
          %1993 = vmatpush2.bf16.xpose.msra.mxu0 0
          %1994 = vmatprep.subr.bf16.mxu0 0
          %1995 = vmatpush2.bf16.xpose.msra.mxu0 0
          %1996 = vmatprep.mubr.bf16.mxu0 0
          %1997 = vmatmul.mubr.bf16.gmra.mxu0 %v1959
          %v1998 = vpop.f32.mrf.mxu0
          %v1999 = vadd.f32 0.0, %v1998
          %v2000 = vpop.f32.mrf.mxu0
          %v2001 = vpop.f32.mrf.mxu0
          %v2002 = vpop.f32.mrf.mxu0
          %2003 = vdwg.mxu0
          %s2004 = scalar_lea.vmem [#allocation2], 24
          %v2005 = vld [vmem:[%s2004] sm:$0xff]
          %v2006 = vsel %vm716, %v1999, -inf
          %2007 = vmax.xlane.f32.xlu0 %v2006
          %v2008 = vpop.xlane.xlu0 %2007
          %v2009 = vmax.f32 %v2005, %v2008
          %v2010 = vsub.f32 %v2005, %v2009
          %v2011 = vmul.f32 %v2010, 1.442695
          %v2012 = vpow.pop %v2011
          %2014 = vset.pattern.permute.xlu0 0
          %2015 = vperm.xlu0 %2014, %v2009
          %v2016 = vpop.permute.xlu0 %2015
          %v2018 = vsub.f32 %v1999, %v2016
          %v2019 = vmul.f32 %v2018, 1.442695
          %v2020 = vpow.pop %v2019
          %s2021 = scalar_lea.vmem [#allocation3], 24
          %v2022 = vld [vmem:[%s2021] sm:$0xff]
          %v2023 = vmul.f32 %v2012, %v2022
          %v2024 = vsel %vm716, %v2020, 0.0
          %2025 = vadd.xlane.f32.xlu0 %v2024
          %v2026 = vpop.xlane.xlu0 %2025
          %v2027 = vadd.f32 %v2023, %v2026
          %2028 = vst.msk [vmem:[%s2021] sm:$0xff] %vm785, %v2027
          %s2029 = scalar_lea.vmem [#allocation4], 24
          %v2030 = vld [vmem:[%s2029] sm:$0xff]
          %2032 = vset.pattern.permute.xlu0 0
          %2033 = vperm.xlu0 %2032, %v2012
          %v2034 = vpop.permute.xlu0 %2033
          %v2036 = vmul.f32 %v2034, %v2030
          %v2037 = vpack.c.bf16 %v2020, %v2020
          %v2047 = vunpack.c.l.s4 1983009808
          %v2048 = vunpack.c.0.s8 %v2047
          %v2049 = vlaneseq
          %v2050 = vshrl.u32 %v2049, 7
          %v2051 = vsub.s32 %v2048, %v2050
          %v2052 = vrot.slane %v1776, %v2051
          %v2054 = vunpack.c.l.s4 1983009808
          %v2055 = vunpack.c.0.s8 %v2054
          %v2056 = vlaneseq
          %v2057 = vshrl.u32 %v2056, 7
          %v2058 = vsub.s32 %v2055, %v2057
          %v2059 = vrot.slane %v1777, %v2058
          %v2061 = vunpack.c.l.s4 1983009808
          %v2062 = vunpack.c.0.s8 %v2061
          %v2063 = vlaneseq
          %v2064 = vshrl.u32 %v2063, 7
          %v2065 = vsub.s32 %v2062, %v2064
          %v2066 = vrot.slane %v1778, %v2065
          %v2068 = vunpack.c.l.s4 1983009808
          %v2069 = vunpack.c.0.s8 %v2068
          %v2070 = vlaneseq
          %v2071 = vshrl.u32 %v2070, 7
          %v2072 = vsub.s32 %v2069, %v2071
          %v2073 = vrot.slane %v1779, %v2072
          %v2075 = vunpack.c.l.s4 1983009808
          %v2076 = vunpack.c.0.s8 %v2075
          %v2077 = vlaneseq
          %v2078 = vshrl.u32 %v2077, 7
          %v2079 = vsub.s32 %v2076, %v2078
          %v2080 = vrot.slane %v1780, %v2079
          %v2082 = vunpack.c.l.s4 1983009808
          %v2083 = vunpack.c.0.s8 %v2082
          %v2084 = vlaneseq
          %v2085 = vshrl.u32 %v2084, 7
          %v2086 = vsub.s32 %v2083, %v2085
          %v2087 = vrot.slane %v1781, %v2086
          %v2089 = vunpack.c.l.s4 1983009808
          %v2090 = vunpack.c.0.s8 %v2089
          %v2091 = vlaneseq
          %v2092 = vshrl.u32 %v2091, 7
          %v2093 = vsub.s32 %v2090, %v2092
          %v2094 = vrot.slane %v1782, %v2093
          %v2096 = vunpack.c.l.s4 1983009808
          %v2097 = vunpack.c.0.s8 %v2096
          %v2098 = vlaneseq
          %v2099 = vshrl.u32 %v2098, 7
          %v2100 = vsub.s32 %v2097, %v2099
          %v2101 = vrot.slane %v1783, %v2100
          %v2102 = vunpack.c.l.b16 %v2052
          %v2103 = vunpack.c.l.b16 %v2059
          %v2104 = vunpack.c.l.b16 %v2066
          %v2105 = vunpack.c.l.b16 %v2073
          %v2106 = vunpack.c.l.b16 %v2080
          %v2107 = vunpack.c.l.b16 %v2087
          %v2108 = vunpack.c.l.b16 %v2094
          %v2109 = vunpack.c.l.b16 %v2101
          %v2110 = vrot.slane %v2102, 3
          %v2111 = vrot.slane %v2103, 2
          %v2112 = vsel %vm608, %v2111, %v2110
          %v2113 = vrot.slane %v2104, 1
          %v2114 = vsel %vm611, %v2113, %v2112
          %v2115 = vsel %vm614, %v2105, %v2114
          %v2116 = vrot.slane %v2106, 7
          %v2117 = vsel %vm617, %v2116, %v2115
          %v2118 = vrot.slane %v2107, 6
          %v2119 = vsel %vm620, %v2118, %v2117
          %v2120 = vrot.slane %v2108, 5
          %v2121 = vsel %vm623, %v2120, %v2119
          %v2122 = vrot.slane %v2109, 4
          %v2123 = vsel %vm626, %v2122, %v2121
          %v2124 = vpack.c.b16 %v2123, %v2123
          %v2126 = vsel %vm716, %v2037, 0
          %v2129 = vsel %vm885, %v2124, 0
          %2131 = vmatprep.subr.bf16.mxu0 0
          %2132 = vmatpush1.bf16.msra.mxu0 0
          %2133 = vmatprep.subr.bf16.mxu0 0
          %2134 = vmatpush1.bf16.msra.mxu0 0
          %2135 = vmatprep.subr.bf16.mxu0 0
          %2136 = vmatpush1.bf16.msra.mxu0 0
          %2137 = vmatprep.subr.bf16.mxu0 0
          %2138 = vmatpush1.bf16.msra.mxu0 0
          %2139 = vmatprep.subr.bf16.mxu0 0
          %2140 = vmatpush1.bf16.msra.mxu0 0
          %2141 = vmatprep.subr.bf16.mxu0 0
          %2142 = vmatpush1.bf16.msra.mxu0 0
          %2143 = vmatprep.subr.bf16.mxu0 0
          %2144 = vmatpush1.bf16.msra.mxu0 0
          %2145 = vmatprep.subr.bf16.mxu0 0
          %2146 = vmatpush1.bf16.msra.mxu0 %v2129
          %2147 = vmatprep.subr.bf16.mxu0 0
          %2148 = vmatpush2.bf16.msra.mxu0 0
          %2149 = vmatprep.subr.bf16.mxu0 0
          %2150 = vmatpush2.bf16.msra.mxu0 0
          %2151 = vmatprep.subr.bf16.mxu0 0
          %2152 = vmatpush2.bf16.msra.mxu0 0
          %2153 = vmatprep.subr.bf16.mxu0 0
          %2154 = vmatpush2.bf16.msra.mxu0 0
          %2155 = vmatprep.subr.bf16.mxu0 0
          %2156 = vmatpush2.bf16.msra.mxu0 0
          %2157 = vmatprep.subr.bf16.mxu0 0
          %2158 = vmatpush2.bf16.msra.mxu0 0
          %2159 = vmatprep.subr.bf16.mxu0 0
          %2160 = vmatpush2.bf16.msra.mxu0 0
          %2161 = vmatprep.subr.bf16.mxu0 0
          %2162 = vmatpush2.bf16.msra.mxu0 0
          %2163 = vmatprep.mubr.bf16.mxu0 0
          %2164 = vmatmul.mubr.bf16.gmra.mxu0 %v2126
          %v2165 = vpop.f32.mrf.mxu0
          %v2166 = vadd.f32 0.0, %v2165
          %v2167 = vpop.f32.mrf.mxu0
          %v2168 = vpop.f32.mrf.mxu0
          %v2169 = vpop.f32.mrf.mxu0
          %2170 = vdwg.mxu0
          %v2171 = vadd.f32 %v2036, %v2166
          %2172 = vst.msk [vmem:[%s2029] sm:$0xff] %vm716, %v2171
          %2173 = vst.msk [vmem:[%s2004] sm:$0xff] %vm785, %v2009
        $region163: #{self_attention_pallas.4} parent=142 // pred_fallthru
          _
        %p2174 = scmp.eq.s32.totalorder %s21, %s20
        // Predicated region
        $region164: #{self_attention_pallas.4} parent=142 // pred_check
          %p2175 = pneg %p2174
        $region165: #{self_attention_pallas.4} parent=142 // pred_check_branch
          %2177 = sbr.rel (%p2175) target = $region167
        $region166: #{self_attention_pallas.4} parent=142 // pred_region
          %v2178 = vld [vmem:[%s429] sm:$0x1]
          %v2179 = vld [vmem:[%s429 + $0x2] sm:$0x1]
          %v2180 = vld [vmem:[%s429 + $0x4] sm:$0x1]
          %v2181 = vld [vmem:[%s429 + $0x6] sm:$0x1]
          %v2182 = vld [vmem:[%s429 + $0x8] sm:$0x1]
          %v2183 = vld [vmem:[%s429 + $0xa] sm:$0x1]
          %v2184 = vld [vmem:[%s429 + $0xc] sm:$0x1]
          %v2185 = vld [vmem:[%s429 + $0xe] sm:$0x1]
          %v2186 = vld [vmem:[%s436] sm:$0x1]
          %v2187 = vld [vmem:[%s436 + $0x2] sm:$0x1]
          %v2188 = vld [vmem:[%s436 + $0x4] sm:$0x1]
          %v2189 = vld [vmem:[%s436 + $0x6] sm:$0x1]
          %v2190 = vld [vmem:[%s436 + $0x8] sm:$0x1]
          %v2191 = vld [vmem:[%s436 + $0xa] sm:$0x1]
          %v2192 = vld [vmem:[%s436 + $0xc] sm:$0x1]
          %v2193 = vld [vmem:[%s436 + $0xe] sm:$0x1]
          %v2194 = vld [vmem:[%s443] sm:$0x1]
          %v2195 = vld [vmem:[%s443 + $0x2] sm:$0x1]
          %v2196 = vld [vmem:[%s443 + $0x4] sm:$0x1]
          %v2197 = vld [vmem:[%s443 + $0x6] sm:$0x1]
          %v2198 = vld [vmem:[%s443 + $0x8] sm:$0x1]
          %v2199 = vld [vmem:[%s443 + $0xa] sm:$0x1]
          %v2200 = vld [vmem:[%s443 + $0xc] sm:$0x1]
          %v2201 = vld [vmem:[%s443 + $0xe] sm:$0x1]
          %v2211 = vunpack.c.l.s4 1983009808
          %v2212 = vunpack.c.0.s8 %v2211
          %v2213 = vlaneseq
          %v2214 = vshrl.u32 %v2213, 7
          %v2215 = vsub.s32 %v2212, %v2214
          %v2216 = vrot.slane %v2178, %v2215
          %v2218 = vunpack.c.l.s4 1983009808
          %v2219 = vunpack.c.0.s8 %v2218
          %v2220 = vlaneseq
          %v2221 = vshrl.u32 %v2220, 7
          %v2222 = vsub.s32 %v2219, %v2221
          %v2223 = vrot.slane %v2179, %v2222
          %v2225 = vunpack.c.l.s4 1983009808
          %v2226 = vunpack.c.0.s8 %v2225
          %v2227 = vlaneseq
          %v2228 = vshrl.u32 %v2227, 7
          %v2229 = vsub.s32 %v2226, %v2228
          %v2230 = vrot.slane %v2180, %v2229
          %v2232 = vunpack.c.l.s4 1983009808
          %v2233 = vunpack.c.0.s8 %v2232
          %v2234 = vlaneseq
          %v2235 = vshrl.u32 %v2234, 7
          %v2236 = vsub.s32 %v2233, %v2235
          %v2237 = vrot.slane %v2181, %v2236
          %v2239 = vunpack.c.l.s4 1983009808
          %v2240 = vunpack.c.0.s8 %v2239
          %v2241 = vlaneseq
          %v2242 = vshrl.u32 %v2241, 7
          %v2243 = vsub.s32 %v2240, %v2242
          %v2244 = vrot.slane %v2182, %v2243
          %v2246 = vunpack.c.l.s4 1983009808
          %v2247 = vunpack.c.0.s8 %v2246
          %v2248 = vlaneseq
          %v2249 = vshrl.u32 %v2248, 7
          %v2250 = vsub.s32 %v2247, %v2249
          %v2251 = vrot.slane %v2183, %v2250
          %v2253 = vunpack.c.l.s4 1983009808
          %v2254 = vunpack.c.0.s8 %v2253
          %v2255 = vlaneseq
          %v2256 = vshrl.u32 %v2255, 7
          %v2257 = vsub.s32 %v2254, %v2256
          %v2258 = vrot.slane %v2184, %v2257
          %v2260 = vunpack.c.l.s4 1983009808
          %v2261 = vunpack.c.0.s8 %v2260
          %v2262 = vlaneseq
          %v2263 = vshrl.u32 %v2262, 7
          %v2264 = vsub.s32 %v2261, %v2263
          %v2265 = vrot.slane %v2185, %v2264
          %v2266 = vunpack.c.l.b16 %v2216
          %v2267 = vunpack.c.l.b16 %v2223
          %v2268 = vunpack.c.l.b16 %v2230
          %v2269 = vunpack.c.l.b16 %v2237
          %v2270 = vunpack.c.l.b16 %v2244
          %v2271 = vunpack.c.l.b16 %v2251
          %v2272 = vunpack.c.l.b16 %v2258
          %v2273 = vunpack.c.l.b16 %v2265
          %v2274 = vrot.slane %v2267, 7
          %vm2275 = vcmask 1041409
          %v2276 = vsel %vm2275, %v2274, %v2266
          %v2277 = vrot.slane %v2268, 6
          %vm2278 = vcmask 1042434
          %v2279 = vsel %vm2278, %v2277, %v2276
          %v2280 = vrot.slane %v2269, 5
          %vm2281 = vcmask 1043459
          %v2282 = vsel %vm2281, %v2280, %v2279
          %v2283 = vrot.slane %v2270, 4
          %vm2284 = vcmask 1044484
          %v2285 = vsel %vm2284, %v2283, %v2282
          %v2286 = vrot.slane %v2271, 3
          %vm2287 = vcmask 1045509
          %v2288 = vsel %vm2287, %v2286, %v2285
          %v2289 = vrot.slane %v2272, 2
          %vm2290 = vcmask 1046534
          %v2291 = vsel %vm2290, %v2289, %v2288
          %v2292 = vrot.slane %v2273, 1
          %vm2293 = vcmask 1047559
          %v2294 = vsel %vm2293, %v2292, %v2291
          %v2295 = vpack.c.b16 %v2294, %v2294
          %v2305 = vunpack.c.l.s4 1983009808
          %v2306 = vunpack.c.0.s8 %v2305
          %v2307 = vlaneseq
          %v2308 = vshrl.u32 %v2307, 7
          %v2309 = vsub.s32 %v2306, %v2308
          %v2310 = vrot.slane %v2186, %v2309
          %v2312 = vunpack.c.l.s4 1983009808
          %v2313 = vunpack.c.0.s8 %v2312
          %v2314 = vlaneseq
          %v2315 = vshrl.u32 %v2314, 7
          %v2316 = vsub.s32 %v2313, %v2315
          %v2317 = vrot.slane %v2187, %v2316
          %v2319 = vunpack.c.l.s4 1983009808
          %v2320 = vunpack.c.0.s8 %v2319
          %v2321 = vlaneseq
          %v2322 = vshrl.u32 %v2321, 7
          %v2323 = vsub.s32 %v2320, %v2322
          %v2324 = vrot.slane %v2188, %v2323
          %v2326 = vunpack.c.l.s4 1983009808
          %v2327 = vunpack.c.0.s8 %v2326
          %v2328 = vlaneseq
          %v2329 = vshrl.u32 %v2328, 7
          %v2330 = vsub.s32 %v2327, %v2329
          %v2331 = vrot.slane %v2189, %v2330
          %v2333 = vunpack.c.l.s4 1983009808
          %v2334 = vunpack.c.0.s8 %v2333
          %v2335 = vlaneseq
          %v2336 = vshrl.u32 %v2335, 7
          %v2337 = vsub.s32 %v2334, %v2336
          %v2338 = vrot.slane %v2190, %v2337
          %v2340 = vunpack.c.l.s4 1983009808
          %v2341 = vunpack.c.0.s8 %v2340
          %v2342 = vlaneseq
          %v2343 = vshrl.u32 %v2342, 7
          %v2344 = vsub.s32 %v2341, %v2343
          %v2345 = vrot.slane %v2191, %v2344
          %v2347 = vunpack.c.l.s4 1983009808
          %v2348 = vunpack.c.0.s8 %v2347
          %v2349 = vlaneseq
          %v2350 = vshrl.u32 %v2349, 7
          %v2351 = vsub.s32 %v2348, %v2350
          %v2352 = vrot.slane %v2192, %v2351
          %v2354 = vunpack.c.l.s4 1983009808
          %v2355 = vunpack.c.0.s8 %v2354
          %v2356 = vlaneseq
          %v2357 = vshrl.u32 %v2356, 7
          %v2358 = vsub.s32 %v2355, %v2357
          %v2359 = vrot.slane %v2193, %v2358
          %v2360 = vunpack.c.l.b16 %v2310
          %v2361 = vunpack.c.l.b16 %v2317
          %v2362 = vunpack.c.l.b16 %v2324
          %v2363 = vunpack.c.l.b16 %v2331
          %v2364 = vunpack.c.l.b16 %v2338
          %v2365 = vunpack.c.l.b16 %v2345
          %v2366 = vunpack.c.l.b16 %v2352
          %v2367 = vunpack.c.l.b16 %v2359
          %v2368 = vrot.slane %v2361, 7
          %v2369 = vsel %vm2275, %v2368, %v2360
          %v2370 = vrot.slane %v2362, 6
          %v2371 = vsel %vm2278, %v2370, %v2369
          %v2372 = vrot.slane %v2363, 5
          %v2373 = vsel %vm2281, %v2372, %v2371
          %v2374 = vrot.slane %v2364, 4
          %v2375 = vsel %vm2284, %v2374, %v2373
          %v2376 = vrot.slane %v2365, 3
          %v2377 = vsel %vm2287, %v2376, %v2375
          %v2378 = vrot.slane %v2366, 2
          %v2379 = vsel %vm2290, %v2378, %v2377
          %v2380 = vrot.slane %v2367, 1
          %v2381 = vsel %vm2293, %v2380, %v2379
          %v2382 = vpack.c.b16 %v2381, %v2381
          %vm2383 = vcmask 64512
          %v2385 = vsel %vm2383, %v2295, 0
          %v2388 = vsel %vm2383, %v2382, 0
          %2390 = vmatprep.subr.bf16.mxu0 0
          %2391 = vmatpush1.bf16.xpose.msra.mxu0 0
          %2392 = vmatprep.subr.bf16.mxu0 0
          %2393 = vmatpush1.bf16.xpose.msra.mxu0 0
          %2394 = vmatprep.subr.bf16.mxu0 0
          %2395 = vmatpush1.bf16.xpose.msra.mxu0 0
          %2396 = vmatprep.subr.bf16.mxu0 0
          %2397 = vmatpush1.bf16.xpose.msra.mxu0 0
          %2398 = vmatprep.subr.bf16.mxu0 0
          %2399 = vmatpush1.bf16.xpose.msra.mxu0 0
          %2400 = vmatprep.subr.bf16.mxu0 0
          %2401 = vmatpush1.bf16.xpose.msra.mxu0 0
          %2402 = vmatprep.subr.bf16.mxu0 0
          %2403 = vmatpush1.bf16.xpose.msra.mxu0 0
          %2404 = vmatprep.subr.bf16.mxu0 0
          %2405 = vmatpush1.bf16.xpose.msra.mxu0 %v2388
          %2406 = vmatprep.subr.bf16.mxu0 0
          %2407 = vmatpush2.bf16.xpose.msra.mxu0 0
          %2408 = vmatprep.subr.bf16.mxu0 0
          %2409 = vmatpush2.bf16.xpose.msra.mxu0 0
          %2410 = vmatprep.subr.bf16.mxu0 0
          %2411 = vmatpush2.bf16.xpose.msra.mxu0 0
          %2412 = vmatprep.subr.bf16.mxu0 0
          %2413 = vmatpush2.bf16.xpose.msra.mxu0 0
          %2414 = vmatprep.subr.bf16.mxu0 0
          %2415 = vmatpush2.bf16.xpose.msra.mxu0 0
          %2416 = vmatprep.subr.bf16.mxu0 0
          %2417 = vmatpush2.bf16.xpose.msra.mxu0 0
          %2418 = vmatprep.subr.bf16.mxu0 0
          %2419 = vmatpush2.bf16.xpose.msra.mxu0 0
          %2420 = vmatprep.subr.bf16.mxu0 0
          %2421 = vmatpush2.bf16.xpose.msra.mxu0 0
          %2422 = vmatprep.mubr.bf16.mxu0 0
          %2423 = vmatmul.mubr.bf16.gmra.mxu0 %v2385
          %v2424 = vpop.f32.mrf.mxu0
          %v2425 = vadd.f32 0.0, %v2424
          %v2426 = vpop.f32.mrf.mxu0
          %v2427 = vpop.f32.mrf.mxu0
          %v2428 = vpop.f32.mrf.mxu0
          %2429 = vdwg.mxu0
          %v2430 = vlaneseq
          %v2431 = vshrl.u32 %v2430, 7
          %v2432 = vlaneseq
          %v2433 = vand.u32 %v2432, 127
          %vm2434 = vcmp.le.s32.totalorder %v2433, %v2431
          %v2435 = vsel %vm2434, %v2425, -inf
          %v2436 = vld [vmem:[#allocation2] sm:$0xff]
          %v2437 = vsel %vm2383, %v2435, -inf
          %2438 = vmax.xlane.f32.xlu0 %v2437
          %v2439 = vpop.xlane.xlu0 %2438
          %v2440 = vmax.f32 %v2436, %v2439
          %v2441 = vsub.f32 %v2436, %v2440
          %v2442 = vmul.f32 %v2441, 1.442695
          %v2443 = vpow.pop %v2442
          %2445 = vset.pattern.permute.xlu0 0
          %2446 = vperm.xlu0 %2445, %v2440
          %v2447 = vpop.permute.xlu0 %2446
          %v2449 = vsub.f32 %v2435, %v2447
          %v2450 = vmul.f32 %v2449, 1.442695
          %v2451 = vpow.pop %v2450
          %v2452 = vld [vmem:[#allocation3] sm:$0xff]
          %v2453 = vmul.f32 %v2443, %v2452
          %v2454 = vsel %vm2383, %v2451, 0.0
          %2455 = vadd.xlane.f32.xlu0 %v2454
          %v2456 = vpop.xlane.xlu0 %2455
          %v2457 = vadd.f32 %v2453, %v2456
          %vm2458 = vcmask 7168
          %2459 = vst.msk [vmem:[#allocation3] sm:$0xff] %vm2458, %v2457
          %v2460 = vld [vmem:[#allocation4] sm:$0xff]
          %2462 = vset.pattern.permute.xlu0 0
          %2463 = vperm.xlu0 %2462, %v2443
          %v2464 = vpop.permute.xlu0 %2463
          %v2466 = vmul.f32 %v2464, %v2460
          %v2467 = vpack.c.bf16 %v2451, %v2451
          %v2477 = vunpack.c.l.s4 1983009808
          %v2478 = vunpack.c.0.s8 %v2477
          %v2479 = vlaneseq
          %v2480 = vshrl.u32 %v2479, 7
          %v2481 = vsub.s32 %v2478, %v2480
          %v2482 = vrot.slane %v2194, %v2481
          %v2484 = vunpack.c.l.s4 1983009808
          %v2485 = vunpack.c.0.s8 %v2484
          %v2486 = vlaneseq
          %v2487 = vshrl.u32 %v2486, 7
          %v2488 = vsub.s32 %v2485, %v2487
          %v2489 = vrot.slane %v2195, %v2488
          %v2491 = vunpack.c.l.s4 1983009808
          %v2492 = vunpack.c.0.s8 %v2491
          %v2493 = vlaneseq
          %v2494 = vshrl.u32 %v2493, 7
          %v2495 = vsub.s32 %v2492, %v2494
          %v2496 = vrot.slane %v2196, %v2495
          %v2498 = vunpack.c.l.s4 1983009808
          %v2499 = vunpack.c.0.s8 %v2498
          %v2500 = vlaneseq
          %v2501 = vshrl.u32 %v2500, 7
          %v2502 = vsub.s32 %v2499, %v2501
          %v2503 = vrot.slane %v2197, %v2502
          %v2505 = vunpack.c.l.s4 1983009808
          %v2506 = vunpack.c.0.s8 %v2505
          %v2507 = vlaneseq
          %v2508 = vshrl.u32 %v2507, 7
          %v2509 = vsub.s32 %v2506, %v2508
          %v2510 = vrot.slane %v2198, %v2509
          %v2512 = vunpack.c.l.s4 1983009808
          %v2513 = vunpack.c.0.s8 %v2512
          %v2514 = vlaneseq
          %v2515 = vshrl.u32 %v2514, 7
          %v2516 = vsub.s32 %v2513, %v2515
          %v2517 = vrot.slane %v2199, %v2516
          %v2519 = vunpack.c.l.s4 1983009808
          %v2520 = vunpack.c.0.s8 %v2519
          %v2521 = vlaneseq
          %v2522 = vshrl.u32 %v2521, 7
          %v2523 = vsub.s32 %v2520, %v2522
          %v2524 = vrot.slane %v2200, %v2523
          %v2526 = vunpack.c.l.s4 1983009808
          %v2527 = vunpack.c.0.s8 %v2526
          %v2528 = vlaneseq
          %v2529 = vshrl.u32 %v2528, 7
          %v2530 = vsub.s32 %v2527, %v2529
          %v2531 = vrot.slane %v2201, %v2530
          %v2532 = vunpack.c.l.b16 %v2482
          %v2533 = vunpack.c.l.b16 %v2489
          %v2534 = vunpack.c.l.b16 %v2496
          %v2535 = vunpack.c.l.b16 %v2503
          %v2536 = vunpack.c.l.b16 %v2510
          %v2537 = vunpack.c.l.b16 %v2517
          %v2538 = vunpack.c.l.b16 %v2524
          %v2539 = vunpack.c.l.b16 %v2531
          %v2540 = vrot.slane %v2533, 7
          %v2541 = vsel %vm2275, %v2540, %v2532
          %v2542 = vrot.slane %v2534, 6
          %v2543 = vsel %vm2278, %v2542, %v2541
          %v2544 = vrot.slane %v2535, 5
          %v2545 = vsel %vm2281, %v2544, %v2543
          %v2546 = vrot.slane %v2536, 4
          %v2547 = vsel %vm2284, %v2546, %v2545
          %v2548 = vrot.slane %v2537, 3
          %v2549 = vsel %vm2287, %v2548, %v2547
          %v2550 = vrot.slane %v2538, 2
          %v2551 = vsel %vm2290, %v2550, %v2549
          %v2552 = vrot.slane %v2539, 1
          %v2553 = vsel %vm2293, %v2552, %v2551
          %v2554 = vpack.c.b16 %v2553, %v2553
          %v2556 = vsel %vm2383, %v2467, 0
          %vm2558 = vcmask 1043456
          %v2560 = vsel %vm2558, %v2554, 0
          %2562 = vmatprep.subr.bf16.mxu0 0
          %2563 = vmatpush1.bf16.msra.mxu0 0
          %2564 = vmatprep.subr.bf16.mxu0 0
          %2565 = vmatpush1.bf16.msra.mxu0 0
          %2566 = vmatprep.subr.bf16.mxu0 0
          %2567 = vmatpush1.bf16.msra.mxu0 0
          %2568 = vmatprep.subr.bf16.mxu0 0
          %2569 = vmatpush1.bf16.msra.mxu0 0
          %2570 = vmatprep.subr.bf16.mxu0 0
          %2571 = vmatpush1.bf16.msra.mxu0 0
          %2572 = vmatprep.subr.bf16.mxu0 0
          %2573 = vmatpush1.bf16.msra.mxu0 0
          %2574 = vmatprep.subr.bf16.mxu0 0
          %2575 = vmatpush1.bf16.msra.mxu0 0
          %2576 = vmatprep.subr.bf16.mxu0 0
          %2577 = vmatpush1.bf16.msra.mxu0 %v2560
          %2578 = vmatprep.subr.bf16.mxu0 0
          %2579 = vmatpush2.bf16.msra.mxu0 0
          %2580 = vmatprep.subr.bf16.mxu0 0
          %2581 = vmatpush2.bf16.msra.mxu0 0
          %2582 = vmatprep.subr.bf16.mxu0 0
          %2583 = vmatpush2.bf16.msra.mxu0 0
          %2584 = vmatprep.subr.bf16.mxu0 0
          %2585 = vmatpush2.bf16.msra.mxu0 0
          %2586 = vmatprep.subr.bf16.mxu0 0
          %2587 = vmatpush2.bf16.msra.mxu0 0
          %2588 = vmatprep.subr.bf16.mxu0 0
          %2589 = vmatpush2.bf16.msra.mxu0 0
          %2590 = vmatprep.subr.bf16.mxu0 0
          %2591 = vmatpush2.bf16.msra.mxu0 0
          %2592 = vmatprep.subr.bf16.mxu0 0
          %2593 = vmatpush2.bf16.msra.mxu0 0
          %2594 = vmatprep.mubr.bf16.mxu0 0
          %2595 = vmatmul.mubr.bf16.gmra.mxu0 %v2556
          %v2596 = vpop.f32.mrf.mxu0
          %v2597 = vadd.f32 0.0, %v2596
          %v2598 = vpop.f32.mrf.mxu0
          %v2599 = vpop.f32.mrf.mxu0
          %v2600 = vpop.f32.mrf.mxu0
          %2601 = vdwg.mxu0
          %v2602 = vadd.f32 %v2466, %v2597
          %2603 = vst.msk [vmem:[#allocation4] sm:$0xff] %vm2383, %v2602
          %2604 = vst.msk [vmem:[#allocation2] sm:$0xff] %vm2458, %v2440
          %v2605 = vld [vmem:[%s429] sm:$0x1]
          %v2606 = vld [vmem:[%s429 + $0x2] sm:$0x1]
          %v2607 = vld [vmem:[%s429 + $0x4] sm:$0x1]
          %v2608 = vld [vmem:[%s429 + $0x6] sm:$0x1]
          %v2609 = vld [vmem:[%s429 + $0x8] sm:$0x1]
          %v2610 = vld [vmem:[%s429 + $0xa] sm:$0x1]
          %v2611 = vld [vmem:[%s429 + $0xc] sm:$0x1]
          %v2612 = vld [vmem:[%s429 + $0xe] sm:$0x1]
          %v2613 = vld [vmem:[%s436] sm:$0x1]
          %v2614 = vld [vmem:[%s436 + $0x2] sm:$0x1]
          %v2615 = vld [vmem:[%s436 + $0x4] sm:$0x1]
          %v2616 = vld [vmem:[%s436 + $0x6] sm:$0x1]
          %v2617 = vld [vmem:[%s436 + $0x8] sm:$0x1]
          %v2618 = vld [vmem:[%s436 + $0xa] sm:$0x1]
          %v2619 = vld [vmem:[%s436 + $0xc] sm:$0x1]
          %v2620 = vld [vmem:[%s436 + $0xe] sm:$0x1]
          %v2621 = vld [vmem:[%s443] sm:$0x1]
          %v2622 = vld [vmem:[%s443 + $0x2] sm:$0x1]
          %v2623 = vld [vmem:[%s443 + $0x4] sm:$0x1]
          %v2624 = vld [vmem:[%s443 + $0x6] sm:$0x1]
          %v2625 = vld [vmem:[%s443 + $0x8] sm:$0x1]
          %v2626 = vld [vmem:[%s443 + $0xa] sm:$0x1]
          %v2627 = vld [vmem:[%s443 + $0xc] sm:$0x1]
          %v2628 = vld [vmem:[%s443 + $0xe] sm:$0x1]
          %v2638 = vunpack.c.l.s4 1983009808
          %v2639 = vunpack.c.0.s8 %v2638
          %v2640 = vlaneseq
          %v2641 = vshrl.u32 %v2640, 7
          %v2642 = vsub.s32 %v2639, %v2641
          %v2643 = vrot.slane %v2605, %v2642
          %v2645 = vunpack.c.l.s4 1983009808
          %v2646 = vunpack.c.0.s8 %v2645
          %v2647 = vlaneseq
          %v2648 = vshrl.u32 %v2647, 7
          %v2649 = vsub.s32 %v2646, %v2648
          %v2650 = vrot.slane %v2606, %v2649
          %v2652 = vunpack.c.l.s4 1983009808
          %v2653 = vunpack.c.0.s8 %v2652
          %v2654 = vlaneseq
          %v2655 = vshrl.u32 %v2654, 7
          %v2656 = vsub.s32 %v2653, %v2655
          %v2657 = vrot.slane %v2607, %v2656
          %v2659 = vunpack.c.l.s4 1983009808
          %v2660 = vunpack.c.0.s8 %v2659
          %v2661 = vlaneseq
          %v2662 = vshrl.u32 %v2661, 7
          %v2663 = vsub.s32 %v2660, %v2662
          %v2664 = vrot.slane %v2608, %v2663
          %v2666 = vunpack.c.l.s4 1983009808
          %v2667 = vunpack.c.0.s8 %v2666
          %v2668 = vlaneseq
          %v2669 = vshrl.u32 %v2668, 7
          %v2670 = vsub.s32 %v2667, %v2669
          %v2671 = vrot.slane %v2609, %v2670
          %v2673 = vunpack.c.l.s4 1983009808
          %v2674 = vunpack.c.0.s8 %v2673
          %v2675 = vlaneseq
          %v2676 = vshrl.u32 %v2675, 7
          %v2677 = vsub.s32 %v2674, %v2676
          %v2678 = vrot.slane %v2610, %v2677
          %v2680 = vunpack.c.l.s4 1983009808
          %v2681 = vunpack.c.0.s8 %v2680
          %v2682 = vlaneseq
          %v2683 = vshrl.u32 %v2682, 7
          %v2684 = vsub.s32 %v2681, %v2683
          %v2685 = vrot.slane %v2611, %v2684
          %v2687 = vunpack.c.l.s4 1983009808
          %v2688 = vunpack.c.0.s8 %v2687
          %v2689 = vlaneseq
          %v2690 = vshrl.u32 %v2689, 7
          %v2691 = vsub.s32 %v2688, %v2690
          %v2692 = vrot.slane %v2612, %v2691
          %v2693 = vunpack.c.l.b16 %v2643
          %v2694 = vunpack.c.l.b16 %v2650
          %v2695 = vunpack.c.l.b16 %v2657
          %v2696 = vunpack.c.l.b16 %v2664
          %v2697 = vunpack.c.l.b16 %v2671
          %v2698 = vunpack.c.l.b16 %v2678
          %v2699 = vunpack.c.l.b16 %v2685
          %v2700 = vunpack.c.l.b16 %v2692
          %v2701 = vrot.slane %v2693, 1
          %v2702 = vsel %vm2275, %v2694, %v2701
          %v2703 = vrot.slane %v2695, 7
          %v2704 = vsel %vm2278, %v2703, %v2702
          %v2705 = vrot.slane %v2696, 6
          %v2706 = vsel %vm2281, %v2705, %v2704
          %v2707 = vrot.slane %v2697, 5
          %v2708 = vsel %vm2284, %v2707, %v2706
          %v2709 = vrot.slane %v2698, 4
          %v2710 = vsel %vm2287, %v2709, %v2708
          %v2711 = vrot.slane %v2699, 3
          %v2712 = vsel %vm2290, %v2711, %v2710
          %v2713 = vrot.slane %v2700, 2
          %v2714 = vsel %vm2293, %v2713, %v2712
          %v2715 = vpack.c.b16 %v2714, %v2714
          %v2725 = vunpack.c.l.s4 1983009808
          %v2726 = vunpack.c.0.s8 %v2725
          %v2727 = vlaneseq
          %v2728 = vshrl.u32 %v2727, 7
          %v2729 = vsub.s32 %v2726, %v2728
          %v2730 = vrot.slane %v2613, %v2729
          %v2732 = vunpack.c.l.s4 1983009808
          %v2733 = vunpack.c.0.s8 %v2732
          %v2734 = vlaneseq
          %v2735 = vshrl.u32 %v2734, 7
          %v2736 = vsub.s32 %v2733, %v2735
          %v2737 = vrot.slane %v2614, %v2736
          %v2739 = vunpack.c.l.s4 1983009808
          %v2740 = vunpack.c.0.s8 %v2739
          %v2741 = vlaneseq
          %v2742 = vshrl.u32 %v2741, 7
          %v2743 = vsub.s32 %v2740, %v2742
          %v2744 = vrot.slane %v2615, %v2743
          %v2746 = vunpack.c.l.s4 1983009808
          %v2747 = vunpack.c.0.s8 %v2746
          %v2748 = vlaneseq
          %v2749 = vshrl.u32 %v2748, 7
          %v2750 = vsub.s32 %v2747, %v2749
          %v2751 = vrot.slane %v2616, %v2750
          %v2753 = vunpack.c.l.s4 1983009808
          %v2754 = vunpack.c.0.s8 %v2753
          %v2755 = vlaneseq
          %v2756 = vshrl.u32 %v2755, 7
          %v2757 = vsub.s32 %v2754, %v2756
          %v2758 = vrot.slane %v2617, %v2757
          %v2760 = vunpack.c.l.s4 1983009808
          %v2761 = vunpack.c.0.s8 %v2760
          %v2762 = vlaneseq
          %v2763 = vshrl.u32 %v2762, 7
          %v2764 = vsub.s32 %v2761, %v2763
          %v2765 = vrot.slane %v2618, %v2764
          %v2767 = vunpack.c.l.s4 1983009808
          %v2768 = vunpack.c.0.s8 %v2767
          %v2769 = vlaneseq
          %v2770 = vshrl.u32 %v2769, 7
          %v2771 = vsub.s32 %v2768, %v2770
          %v2772 = vrot.slane %v2619, %v2771
          %v2774 = vunpack.c.l.s4 1983009808
          %v2775 = vunpack.c.0.s8 %v2774
          %v2776 = vlaneseq
          %v2777 = vshrl.u32 %v2776, 7
          %v2778 = vsub.s32 %v2775, %v2777
          %v2779 = vrot.slane %v2620, %v2778
          %v2780 = vunpack.c.l.b16 %v2730
          %v2781 = vunpack.c.l.b16 %v2737
          %v2782 = vunpack.c.l.b16 %v2744
          %v2783 = vunpack.c.l.b16 %v2751
          %v2784 = vunpack.c.l.b16 %v2758
          %v2785 = vunpack.c.l.b16 %v2765
          %v2786 = vunpack.c.l.b16 %v2772
          %v2787 = vunpack.c.l.b16 %v2779
          %v2788 = vrot.slane %v2780, 1
          %v2789 = vsel %vm2275, %v2781, %v2788
          %v2790 = vrot.slane %v2782, 7
          %v2791 = vsel %vm2278, %v2790, %v2789
          %v2792 = vrot.slane %v2783, 6
          %v2793 = vsel %vm2281, %v2792, %v2791
          %v2794 = vrot.slane %v2784, 5
          %v2795 = vsel %vm2284, %v2794, %v2793
          %v2796 = vrot.slane %v2785, 4
          %v2797 = vsel %vm2287, %v2796, %v2795
          %v2798 = vrot.slane %v2786, 3
          %v2799 = vsel %vm2290, %v2798, %v2797
          %v2800 = vrot.slane %v2787, 2
          %v2801 = vsel %vm2293, %v2800, %v2799
          %v2802 = vpack.c.b16 %v2801, %v2801
          %v2804 = vsel %vm2383, %v2715, 0
          %v2807 = vsel %vm2383, %v2802, 0
          %2809 = vmatprep.subr.bf16.mxu0 0
          %2810 = vmatpush1.bf16.xpose.msra.mxu0 0
          %2811 = vmatprep.subr.bf16.mxu0 0
          %2812 = vmatpush1.bf16.xpose.msra.mxu0 0
          %2813 = vmatprep.subr.bf16.mxu0 0
          %2814 = vmatpush1.bf16.xpose.msra.mxu0 0
          %2815 = vmatprep.subr.bf16.mxu0 0
          %2816 = vmatpush1.bf16.xpose.msra.mxu0 0
          %2817 = vmatprep.subr.bf16.mxu0 0
          %2818 = vmatpush1.bf16.xpose.msra.mxu0 0
          %2819 = vmatprep.subr.bf16.mxu0 0
          %2820 = vmatpush1.bf16.xpose.msra.mxu0 0
          %2821 = vmatprep.subr.bf16.mxu0 0
          %2822 = vmatpush1.bf16.xpose.msra.mxu0 0
          %2823 = vmatprep.subr.bf16.mxu0 0
          %2824 = vmatpush1.bf16.xpose.msra.mxu0 %v2807
          %2825 = vmatprep.subr.bf16.mxu0 0
          %2826 = vmatpush2.bf16.xpose.msra.mxu0 0
          %2827 = vmatprep.subr.bf16.mxu0 0
          %2828 = vmatpush2.bf16.xpose.msra.mxu0 0
          %2829 = vmatprep.subr.bf16.mxu0 0
          %2830 = vmatpush2.bf16.xpose.msra.mxu0 0
          %2831 = vmatprep.subr.bf16.mxu0 0
          %2832 = vmatpush2.bf16.xpose.msra.mxu0 0
          %2833 = vmatprep.subr.bf16.mxu0 0
          %2834 = vmatpush2.bf16.xpose.msra.mxu0 0
          %2835 = vmatprep.subr.bf16.mxu0 0
          %2836 = vmatpush2.bf16.xpose.msra.mxu0 0
          %2837 = vmatprep.subr.bf16.mxu0 0
          %2838 = vmatpush2.bf16.xpose.msra.mxu0 0
          %2839 = vmatprep.subr.bf16.mxu0 0
          %2840 = vmatpush2.bf16.xpose.msra.mxu0 0
          %2841 = vmatprep.mubr.bf16.mxu0 0
          %2842 = vmatmul.mubr.bf16.gmra.mxu0 %v2804
          %v2843 = vpop.f32.mrf.mxu0
          %v2844 = vadd.f32 0.0, %v2843
          %v2845 = vpop.f32.mrf.mxu0
          %v2846 = vpop.f32.mrf.mxu0
          %v2847 = vpop.f32.mrf.mxu0
          %2848 = vdwg.mxu0
          %v2849 = vsel %vm2434, %v2844, -inf
          %s2850 = scalar_lea.vmem [#allocation2], 8
          %v2851 = vld [vmem:[%s2850] sm:$0xff]
          %v2852 = vsel %vm2383, %v2849, -inf
          %2853 = vmax.xlane.f32.xlu0 %v2852
          %v2854 = vpop.xlane.xlu0 %2853
          %v2855 = vmax.f32 %v2851, %v2854
          %v2856 = vsub.f32 %v2851, %v2855
          %v2857 = vmul.f32 %v2856, 1.442695
          %v2858 = vpow.pop %v2857
          %2860 = vset.pattern.permute.xlu0 0
          %2861 = vperm.xlu0 %2860, %v2855
          %v2862 = vpop.permute.xlu0 %2861
          %v2864 = vsub.f32 %v2849, %v2862
          %v2865 = vmul.f32 %v2864, 1.442695
          %v2866 = vpow.pop %v2865
          %s2867 = scalar_lea.vmem [#allocation3], 8
          %v2868 = vld [vmem:[%s2867] sm:$0xff]
          %v2869 = vmul.f32 %v2858, %v2868
          %v2870 = vsel %vm2383, %v2866, 0.0
          %2871 = vadd.xlane.f32.xlu0 %v2870
          %v2872 = vpop.xlane.xlu0 %2871
          %v2873 = vadd.f32 %v2869, %v2872
          %2874 = vst.msk [vmem:[%s2867] sm:$0xff] %vm2458, %v2873
          %s2875 = scalar_lea.vmem [#allocation4], 8
          %v2876 = vld [vmem:[%s2875] sm:$0xff]
          %2878 = vset.pattern.permute.xlu0 0
          %2879 = vperm.xlu0 %2878, %v2858
          %v2880 = vpop.permute.xlu0 %2879
          %v2882 = vmul.f32 %v2880, %v2876
          %v2883 = vpack.c.bf16 %v2866, %v2866
          %v2893 = vunpack.c.l.s4 1983009808
          %v2894 = vunpack.c.0.s8 %v2893
          %v2895 = vlaneseq
          %v2896 = vshrl.u32 %v2895, 7
          %v2897 = vsub.s32 %v2894, %v2896
          %v2898 = vrot.slane %v2621, %v2897
          %v2900 = vunpack.c.l.s4 1983009808
          %v2901 = vunpack.c.0.s8 %v2900
          %v2902 = vlaneseq
          %v2903 = vshrl.u32 %v2902, 7
          %v2904 = vsub.s32 %v2901, %v2903
          %v2905 = vrot.slane %v2622, %v2904
          %v2907 = vunpack.c.l.s4 1983009808
          %v2908 = vunpack.c.0.s8 %v2907
          %v2909 = vlaneseq
          %v2910 = vshrl.u32 %v2909, 7
          %v2911 = vsub.s32 %v2908, %v2910
          %v2912 = vrot.slane %v2623, %v2911
          %v2914 = vunpack.c.l.s4 1983009808
          %v2915 = vunpack.c.0.s8 %v2914
          %v2916 = vlaneseq
          %v2917 = vshrl.u32 %v2916, 7
          %v2918 = vsub.s32 %v2915, %v2917
          %v2919 = vrot.slane %v2624, %v2918
          %v2921 = vunpack.c.l.s4 1983009808
          %v2922 = vunpack.c.0.s8 %v2921
          %v2923 = vlaneseq
          %v2924 = vshrl.u32 %v2923, 7
          %v2925 = vsub.s32 %v2922, %v2924
          %v2926 = vrot.slane %v2625, %v2925
          %v2928 = vunpack.c.l.s4 1983009808
          %v2929 = vunpack.c.0.s8 %v2928
          %v2930 = vlaneseq
          %v2931 = vshrl.u32 %v2930, 7
          %v2932 = vsub.s32 %v2929, %v2931
          %v2933 = vrot.slane %v2626, %v2932
          %v2935 = vunpack.c.l.s4 1983009808
          %v2936 = vunpack.c.0.s8 %v2935
          %v2937 = vlaneseq
          %v2938 = vshrl.u32 %v2937, 7
          %v2939 = vsub.s32 %v2936, %v2938
          %v2940 = vrot.slane %v2627, %v2939
          %v2942 = vunpack.c.l.s4 1983009808
          %v2943 = vunpack.c.0.s8 %v2942
          %v2944 = vlaneseq
          %v2945 = vshrl.u32 %v2944, 7
          %v2946 = vsub.s32 %v2943, %v2945
          %v2947 = vrot.slane %v2628, %v2946
          %v2948 = vunpack.c.l.b16 %v2898
          %v2949 = vunpack.c.l.b16 %v2905
          %v2950 = vunpack.c.l.b16 %v2912
          %v2951 = vunpack.c.l.b16 %v2919
          %v2952 = vunpack.c.l.b16 %v2926
          %v2953 = vunpack.c.l.b16 %v2933
          %v2954 = vunpack.c.l.b16 %v2940
          %v2955 = vunpack.c.l.b16 %v2947
          %v2956 = vrot.slane %v2948, 1
          %v2957 = vsel %vm2275, %v2949, %v2956
          %v2958 = vrot.slane %v2950, 7
          %v2959 = vsel %vm2278, %v2958, %v2957
          %v2960 = vrot.slane %v2951, 6
          %v2961 = vsel %vm2281, %v2960, %v2959
          %v2962 = vrot.slane %v2952, 5
          %v2963 = vsel %vm2284, %v2962, %v2961
          %v2964 = vrot.slane %v2953, 4
          %v2965 = vsel %vm2287, %v2964, %v2963
          %v2966 = vrot.slane %v2954, 3
          %v2967 = vsel %vm2290, %v2966, %v2965
          %v2968 = vrot.slane %v2955, 2
          %v2969 = vsel %vm2293, %v2968, %v2967
          %v2970 = vpack.c.b16 %v2969, %v2969
          %v2972 = vsel %vm2383, %v2883, 0
          %v2975 = vsel %vm2558, %v2970, 0
          %2977 = vmatprep.subr.bf16.mxu0 0
          %2978 = vmatpush1.bf16.msra.mxu0 0
          %2979 = vmatprep.subr.bf16.mxu0 0
          %2980 = vmatpush1.bf16.msra.mxu0 0
          %2981 = vmatprep.subr.bf16.mxu0 0
          %2982 = vmatpush1.bf16.msra.mxu0 0
          %2983 = vmatprep.subr.bf16.mxu0 0
          %2984 = vmatpush1.bf16.msra.mxu0 0
          %2985 = vmatprep.subr.bf16.mxu0 0
          %2986 = vmatpush1.bf16.msra.mxu0 0
          %2987 = vmatprep.subr.bf16.mxu0 0
          %2988 = vmatpush1.bf16.msra.mxu0 0
          %2989 = vmatprep.subr.bf16.mxu0 0
          %2990 = vmatpush1.bf16.msra.mxu0 0
          %2991 = vmatprep.subr.bf16.mxu0 0
          %2992 = vmatpush1.bf16.msra.mxu0 %v2975
          %2993 = vmatprep.subr.bf16.mxu0 0
          %2994 = vmatpush2.bf16.msra.mxu0 0
          %2995 = vmatprep.subr.bf16.mxu0 0
          %2996 = vmatpush2.bf16.msra.mxu0 0
          %2997 = vmatprep.subr.bf16.mxu0 0
          %2998 = vmatpush2.bf16.msra.mxu0 0
          %2999 = vmatprep.subr.bf16.mxu0 0
          %3000 = vmatpush2.bf16.msra.mxu0 0
          %3001 = vmatprep.subr.bf16.mxu0 0
          %3002 = vmatpush2.bf16.msra.mxu0 0
          %3003 = vmatprep.subr.bf16.mxu0 0
          %3004 = vmatpush2.bf16.msra.mxu0 0
          %3005 = vmatprep.subr.bf16.mxu0 0
          %3006 = vmatpush2.bf16.msra.mxu0 0
          %3007 = vmatprep.subr.bf16.mxu0 0
          %3008 = vmatpush2.bf16.msra.mxu0 0
          %3009 = vmatprep.mubr.bf16.mxu0 0
          %3010 = vmatmul.mubr.bf16.gmra.mxu0 %v2972
          %v3011 = vpop.f32.mrf.mxu0
          %v3012 = vadd.f32 0.0, %v3011
          %v3013 = vpop.f32.mrf.mxu0
          %v3014 = vpop.f32.mrf.mxu0
          %v3015 = vpop.f32.mrf.mxu0
          %3016 = vdwg.mxu0
          %v3017 = vadd.f32 %v2882, %v3012
          %3018 = vst.msk [vmem:[%s2875] sm:$0xff] %vm2383, %v3017
          %3019 = vst.msk [vmem:[%s2850] sm:$0xff] %vm2458, %v2855
          %v3020 = vld [vmem:[%s429] sm:$0x2]
          %v3021 = vld [vmem:[%s429 + $0x2] sm:$0x2]
          %v3022 = vld [vmem:[%s429 + $0x4] sm:$0x2]
          %v3023 = vld [vmem:[%s429 + $0x6] sm:$0x2]
          %v3024 = vld [vmem:[%s429 + $0x8] sm:$0x2]
          %v3025 = vld [vmem:[%s429 + $0xa] sm:$0x2]
          %v3026 = vld [vmem:[%s429 + $0xc] sm:$0x2]
          %v3027 = vld [vmem:[%s429 + $0xe] sm:$0x2]
          %v3028 = vld [vmem:[%s436] sm:$0x2]
          %v3029 = vld [vmem:[%s436 + $0x2] sm:$0x2]
          %v3030 = vld [vmem:[%s436 + $0x4] sm:$0x2]
          %v3031 = vld [vmem:[%s436 + $0x6] sm:$0x2]
          %v3032 = vld [vmem:[%s436 + $0x8] sm:$0x2]
          %v3033 = vld [vmem:[%s436 + $0xa] sm:$0x2]
          %v3034 = vld [vmem:[%s436 + $0xc] sm:$0x2]
          %v3035 = vld [vmem:[%s436 + $0xe] sm:$0x2]
          %v3036 = vld [vmem:[%s443] sm:$0x2]
          %v3037 = vld [vmem:[%s443 + $0x2] sm:$0x2]
          %v3038 = vld [vmem:[%s443 + $0x4] sm:$0x2]
          %v3039 = vld [vmem:[%s443 + $0x6] sm:$0x2]
          %v3040 = vld [vmem:[%s443 + $0x8] sm:$0x2]
          %v3041 = vld [vmem:[%s443 + $0xa] sm:$0x2]
          %v3042 = vld [vmem:[%s443 + $0xc] sm:$0x2]
          %v3043 = vld [vmem:[%s443 + $0xe] sm:$0x2]
          %v3053 = vunpack.c.l.s4 1983009808
          %v3054 = vunpack.c.0.s8 %v3053
          %v3055 = vlaneseq
          %v3056 = vshrl.u32 %v3055, 7
          %v3057 = vsub.s32 %v3054, %v3056
          %v3058 = vrot.slane %v3020, %v3057
          %v3060 = vunpack.c.l.s4 1983009808
          %v3061 = vunpack.c.0.s8 %v3060
          %v3062 = vlaneseq
          %v3063 = vshrl.u32 %v3062, 7
          %v3064 = vsub.s32 %v3061, %v3063
          %v3065 = vrot.slane %v3021, %v3064
          %v3067 = vunpack.c.l.s4 1983009808
          %v3068 = vunpack.c.0.s8 %v3067
          %v3069 = vlaneseq
          %v3070 = vshrl.u32 %v3069, 7
          %v3071 = vsub.s32 %v3068, %v3070
          %v3072 = vrot.slane %v3022, %v3071
          %v3074 = vunpack.c.l.s4 1983009808
          %v3075 = vunpack.c.0.s8 %v3074
          %v3076 = vlaneseq
          %v3077 = vshrl.u32 %v3076, 7
          %v3078 = vsub.s32 %v3075, %v3077
          %v3079 = vrot.slane %v3023, %v3078
          %v3081 = vunpack.c.l.s4 1983009808
          %v3082 = vunpack.c.0.s8 %v3081
          %v3083 = vlaneseq
          %v3084 = vshrl.u32 %v3083, 7
          %v3085 = vsub.s32 %v3082, %v3084
          %v3086 = vrot.slane %v3024, %v3085
          %v3088 = vunpack.c.l.s4 1983009808
          %v3089 = vunpack.c.0.s8 %v3088
          %v3090 = vlaneseq
          %v3091 = vshrl.u32 %v3090, 7
          %v3092 = vsub.s32 %v3089, %v3091
          %v3093 = vrot.slane %v3025, %v3092
          %v3095 = vunpack.c.l.s4 1983009808
          %v3096 = vunpack.c.0.s8 %v3095
          %v3097 = vlaneseq
          %v3098 = vshrl.u32 %v3097, 7
          %v3099 = vsub.s32 %v3096, %v3098
          %v3100 = vrot.slane %v3026, %v3099
          %v3102 = vunpack.c.l.s4 1983009808
          %v3103 = vunpack.c.0.s8 %v3102
          %v3104 = vlaneseq
          %v3105 = vshrl.u32 %v3104, 7
          %v3106 = vsub.s32 %v3103, %v3105
          %v3107 = vrot.slane %v3027, %v3106
          %v3108 = vunpack.c.l.b16 %v3058
          %v3109 = vunpack.c.l.b16 %v3065
          %v3110 = vunpack.c.l.b16 %v3072
          %v3111 = vunpack.c.l.b16 %v3079
          %v3112 = vunpack.c.l.b16 %v3086
          %v3113 = vunpack.c.l.b16 %v3093
          %v3114 = vunpack.c.l.b16 %v3100
          %v3115 = vunpack.c.l.b16 %v3107
          %v3116 = vrot.slane %v3108, 2
          %v3117 = vrot.slane %v3109, 1
          %v3118 = vsel %vm2275, %v3117, %v3116
          %v3119 = vsel %vm2278, %v3110, %v3118
          %v3120 = vrot.slane %v3111, 7
          %v3121 = vsel %vm2281, %v3120, %v3119
          %v3122 = vrot.slane %v3112, 6
          %v3123 = vsel %vm2284, %v3122, %v3121
          %v3124 = vrot.slane %v3113, 5
          %v3125 = vsel %vm2287, %v3124, %v3123
          %v3126 = vrot.slane %v3114, 4
          %v3127 = vsel %vm2290, %v3126, %v3125
          %v3128 = vrot.slane %v3115, 3
          %v3129 = vsel %vm2293, %v3128, %v3127
          %v3130 = vpack.c.b16 %v3129, %v3129
          %v3140 = vunpack.c.l.s4 1983009808
          %v3141 = vunpack.c.0.s8 %v3140
          %v3142 = vlaneseq
          %v3143 = vshrl.u32 %v3142, 7
          %v3144 = vsub.s32 %v3141, %v3143
          %v3145 = vrot.slane %v3028, %v3144
          %v3147 = vunpack.c.l.s4 1983009808
          %v3148 = vunpack.c.0.s8 %v3147
          %v3149 = vlaneseq
          %v3150 = vshrl.u32 %v3149, 7
          %v3151 = vsub.s32 %v3148, %v3150
          %v3152 = vrot.slane %v3029, %v3151
          %v3154 = vunpack.c.l.s4 1983009808
          %v3155 = vunpack.c.0.s8 %v3154
          %v3156 = vlaneseq
          %v3157 = vshrl.u32 %v3156, 7
          %v3158 = vsub.s32 %v3155, %v3157
          %v3159 = vrot.slane %v3030, %v3158
          %v3161 = vunpack.c.l.s4 1983009808
          %v3162 = vunpack.c.0.s8 %v3161
          %v3163 = vlaneseq
          %v3164 = vshrl.u32 %v3163, 7
          %v3165 = vsub.s32 %v3162, %v3164
          %v3166 = vrot.slane %v3031, %v3165
          %v3168 = vunpack.c.l.s4 1983009808
          %v3169 = vunpack.c.0.s8 %v3168
          %v3170 = vlaneseq
          %v3171 = vshrl.u32 %v3170, 7
          %v3172 = vsub.s32 %v3169, %v3171
          %v3173 = vrot.slane %v3032, %v3172
          %v3175 = vunpack.c.l.s4 1983009808
          %v3176 = vunpack.c.0.s8 %v3175
          %v3177 = vlaneseq
          %v3178 = vshrl.u32 %v3177, 7
          %v3179 = vsub.s32 %v3176, %v3178
          %v3180 = vrot.slane %v3033, %v3179
          %v3182 = vunpack.c.l.s4 1983009808
          %v3183 = vunpack.c.0.s8 %v3182
          %v3184 = vlaneseq
          %v3185 = vshrl.u32 %v3184, 7
          %v3186 = vsub.s32 %v3183, %v3185
          %v3187 = vrot.slane %v3034, %v3186
          %v3189 = vunpack.c.l.s4 1983009808
          %v3190 = vunpack.c.0.s8 %v3189
          %v3191 = vlaneseq
          %v3192 = vshrl.u32 %v3191, 7
          %v3193 = vsub.s32 %v3190, %v3192
          %v3194 = vrot.slane %v3035, %v3193
          %v3195 = vunpack.c.l.b16 %v3145
          %v3196 = vunpack.c.l.b16 %v3152
          %v3197 = vunpack.c.l.b16 %v3159
          %v3198 = vunpack.c.l.b16 %v3166
          %v3199 = vunpack.c.l.b16 %v3173
          %v3200 = vunpack.c.l.b16 %v3180
          %v3201 = vunpack.c.l.b16 %v3187
          %v3202 = vunpack.c.l.b16 %v3194
          %v3203 = vrot.slane %v3195, 2
          %v3204 = vrot.slane %v3196, 1
          %v3205 = vsel %vm2275, %v3204, %v3203
          %v3206 = vsel %vm2278, %v3197, %v3205
          %v3207 = vrot.slane %v3198, 7
          %v3208 = vsel %vm2281, %v3207, %v3206
          %v3209 = vrot.slane %v3199, 6
          %v3210 = vsel %vm2284, %v3209, %v3208
          %v3211 = vrot.slane %v3200, 5
          %v3212 = vsel %vm2287, %v3211, %v3210
          %v3213 = vrot.slane %v3201, 4
          %v3214 = vsel %vm2290, %v3213, %v3212
          %v3215 = vrot.slane %v3202, 3
          %v3216 = vsel %vm2293, %v3215, %v3214
          %v3217 = vpack.c.b16 %v3216, %v3216
          %v3219 = vsel %vm2383, %v3130, 0
          %v3222 = vsel %vm2383, %v3217, 0
          %3224 = vmatprep.subr.bf16.mxu0 0
          %3225 = vmatpush1.bf16.xpose.msra.mxu0 0
          %3226 = vmatprep.subr.bf16.mxu0 0
          %3227 = vmatpush1.bf16.xpose.msra.mxu0 0
          %3228 = vmatprep.subr.bf16.mxu0 0
          %3229 = vmatpush1.bf16.xpose.msra.mxu0 0
          %3230 = vmatprep.subr.bf16.mxu0 0
          %3231 = vmatpush1.bf16.xpose.msra.mxu0 0
          %3232 = vmatprep.subr.bf16.mxu0 0
          %3233 = vmatpush1.bf16.xpose.msra.mxu0 0
          %3234 = vmatprep.subr.bf16.mxu0 0
          %3235 = vmatpush1.bf16.xpose.msra.mxu0 0
          %3236 = vmatprep.subr.bf16.mxu0 0
          %3237 = vmatpush1.bf16.xpose.msra.mxu0 0
          %3238 = vmatprep.subr.bf16.mxu0 0
          %3239 = vmatpush1.bf16.xpose.msra.mxu0 %v3222
          %3240 = vmatprep.subr.bf16.mxu0 0
          %3241 = vmatpush2.bf16.xpose.msra.mxu0 0
          %3242 = vmatprep.subr.bf16.mxu0 0
          %3243 = vmatpush2.bf16.xpose.msra.mxu0 0
          %3244 = vmatprep.subr.bf16.mxu0 0
          %3245 = vmatpush2.bf16.xpose.msra.mxu0 0
          %3246 = vmatprep.subr.bf16.mxu0 0
          %3247 = vmatpush2.bf16.xpose.msra.mxu0 0
          %3248 = vmatprep.subr.bf16.mxu0 0
          %3249 = vmatpush2.bf16.xpose.msra.mxu0 0
          %3250 = vmatprep.subr.bf16.mxu0 0
          %3251 = vmatpush2.bf16.xpose.msra.mxu0 0
          %3252 = vmatprep.subr.bf16.mxu0 0
          %3253 = vmatpush2.bf16.xpose.msra.mxu0 0
          %3254 = vmatprep.subr.bf16.mxu0 0
          %3255 = vmatpush2.bf16.xpose.msra.mxu0 0
          %3256 = vmatprep.mubr.bf16.mxu0 0
          %3257 = vmatmul.mubr.bf16.gmra.mxu0 %v3219
          %v3258 = vpop.f32.mrf.mxu0
          %v3259 = vadd.f32 0.0, %v3258
          %v3260 = vpop.f32.mrf.mxu0
          %v3261 = vpop.f32.mrf.mxu0
          %v3262 = vpop.f32.mrf.mxu0
          %3263 = vdwg.mxu0
          %v3264 = vsel %vm2434, %v3259, -inf
          %s3265 = scalar_lea.vmem [#allocation2], 16
          %v3266 = vld [vmem:[%s3265] sm:$0xff]
          %v3267 = vsel %vm2383, %v3264, -inf
          %3268 = vmax.xlane.f32.xlu0 %v3267
          %v3269 = vpop.xlane.xlu0 %3268
          %v3270 = vmax.f32 %v3266, %v3269
          %v3271 = vsub.f32 %v3266, %v3270
          %v3272 = vmul.f32 %v3271, 1.442695
          %v3273 = vpow.pop %v3272
          %3275 = vset.pattern.permute.xlu0 0
          %3276 = vperm.xlu0 %3275, %v3270
          %v3277 = vpop.permute.xlu0 %3276
          %v3279 = vsub.f32 %v3264, %v3277
          %v3280 = vmul.f32 %v3279, 1.442695
          %v3281 = vpow.pop %v3280
          %s3282 = scalar_lea.vmem [#allocation3], 16
          %v3283 = vld [vmem:[%s3282] sm:$0xff]
          %v3284 = vmul.f32 %v3273, %v3283
          %v3285 = vsel %vm2383, %v3281, 0.0
          %3286 = vadd.xlane.f32.xlu0 %v3285
          %v3287 = vpop.xlane.xlu0 %3286
          %v3288 = vadd.f32 %v3284, %v3287
          %3289 = vst.msk [vmem:[%s3282] sm:$0xff] %vm2458, %v3288
          %s3290 = scalar_lea.vmem [#allocation4], 16
          %v3291 = vld [vmem:[%s3290] sm:$0xff]
          %3293 = vset.pattern.permute.xlu0 0
          %3294 = vperm.xlu0 %3293, %v3273
          %v3295 = vpop.permute.xlu0 %3294
          %v3297 = vmul.f32 %v3295, %v3291
          %v3298 = vpack.c.bf16 %v3281, %v3281
          %v3308 = vunpack.c.l.s4 1983009808
          %v3309 = vunpack.c.0.s8 %v3308
          %v3310 = vlaneseq
          %v3311 = vshrl.u32 %v3310, 7
          %v3312 = vsub.s32 %v3309, %v3311
          %v3313 = vrot.slane %v3036, %v3312
          %v3315 = vunpack.c.l.s4 1983009808
          %v3316 = vunpack.c.0.s8 %v3315
          %v3317 = vlaneseq
          %v3318 = vshrl.u32 %v3317, 7
          %v3319 = vsub.s32 %v3316, %v3318
          %v3320 = vrot.slane %v3037, %v3319
          %v3322 = vunpack.c.l.s4 1983009808
          %v3323 = vunpack.c.0.s8 %v3322
          %v3324 = vlaneseq
          %v3325 = vshrl.u32 %v3324, 7
          %v3326 = vsub.s32 %v3323, %v3325
          %v3327 = vrot.slane %v3038, %v3326
          %v3329 = vunpack.c.l.s4 1983009808
          %v3330 = vunpack.c.0.s8 %v3329
          %v3331 = vlaneseq
          %v3332 = vshrl.u32 %v3331, 7
          %v3333 = vsub.s32 %v3330, %v3332
          %v3334 = vrot.slane %v3039, %v3333
          %v3336 = vunpack.c.l.s4 1983009808
          %v3337 = vunpack.c.0.s8 %v3336
          %v3338 = vlaneseq
          %v3339 = vshrl.u32 %v3338, 7
          %v3340 = vsub.s32 %v3337, %v3339
          %v3341 = vrot.slane %v3040, %v3340
          %v3343 = vunpack.c.l.s4 1983009808
          %v3344 = vunpack.c.0.s8 %v3343
          %v3345 = vlaneseq
          %v3346 = vshrl.u32 %v3345, 7
          %v3347 = vsub.s32 %v3344, %v3346
          %v3348 = vrot.slane %v3041, %v3347
          %v3350 = vunpack.c.l.s4 1983009808
          %v3351 = vunpack.c.0.s8 %v3350
          %v3352 = vlaneseq
          %v3353 = vshrl.u32 %v3352, 7
          %v3354 = vsub.s32 %v3351, %v3353
          %v3355 = vrot.slane %v3042, %v3354
          %v3357 = vunpack.c.l.s4 1983009808
          %v3358 = vunpack.c.0.s8 %v3357
          %v3359 = vlaneseq
          %v3360 = vshrl.u32 %v3359, 7
          %v3361 = vsub.s32 %v3358, %v3360
          %v3362 = vrot.slane %v3043, %v3361
          %v3363 = vunpack.c.l.b16 %v3313
          %v3364 = vunpack.c.l.b16 %v3320
          %v3365 = vunpack.c.l.b16 %v3327
          %v3366 = vunpack.c.l.b16 %v3334
          %v3367 = vunpack.c.l.b16 %v3341
          %v3368 = vunpack.c.l.b16 %v3348
          %v3369 = vunpack.c.l.b16 %v3355
          %v3370 = vunpack.c.l.b16 %v3362
          %v3371 = vrot.slane %v3363, 2
          %v3372 = vrot.slane %v3364, 1
          %v3373 = vsel %vm2275, %v3372, %v3371
          %v3374 = vsel %vm2278, %v3365, %v3373
          %v3375 = vrot.slane %v3366, 7
          %v3376 = vsel %vm2281, %v3375, %v3374
          %v3377 = vrot.slane %v3367, 6
          %v3378 = vsel %vm2284, %v3377, %v3376
          %v3379 = vrot.slane %v3368, 5
          %v3380 = vsel %vm2287, %v3379, %v3378
          %v3381 = vrot.slane %v3369, 4
          %v3382 = vsel %vm2290, %v3381, %v3380
          %v3383 = vrot.slane %v3370, 3
          %v3384 = vsel %vm2293, %v3383, %v3382
          %v3385 = vpack.c.b16 %v3384, %v3384
          %v3387 = vsel %vm2383, %v3298, 0
          %v3390 = vsel %vm2558, %v3385, 0
          %3392 = vmatprep.subr.bf16.mxu0 0
          %3393 = vmatpush1.bf16.msra.mxu0 0
          %3394 = vmatprep.subr.bf16.mxu0 0
          %3395 = vmatpush1.bf16.msra.mxu0 0
          %3396 = vmatprep.subr.bf16.mxu0 0
          %3397 = vmatpush1.bf16.msra.mxu0 0
          %3398 = vmatprep.subr.bf16.mxu0 0
          %3399 = vmatpush1.bf16.msra.mxu0 0
          %3400 = vmatprep.subr.bf16.mxu0 0
          %3401 = vmatpush1.bf16.msra.mxu0 0
          %3402 = vmatprep.subr.bf16.mxu0 0
          %3403 = vmatpush1.bf16.msra.mxu0 0
          %3404 = vmatprep.subr.bf16.mxu0 0
          %3405 = vmatpush1.bf16.msra.mxu0 0
          %3406 = vmatprep.subr.bf16.mxu0 0
          %3407 = vmatpush1.bf16.msra.mxu0 %v3390
          %3408 = vmatprep.subr.bf16.mxu0 0
          %3409 = vmatpush2.bf16.msra.mxu0 0
          %3410 = vmatprep.subr.bf16.mxu0 0
          %3411 = vmatpush2.bf16.msra.mxu0 0
          %3412 = vmatprep.subr.bf16.mxu0 0
          %3413 = vmatpush2.bf16.msra.mxu0 0
          %3414 = vmatprep.subr.bf16.mxu0 0
          %3415 = vmatpush2.bf16.msra.mxu0 0
          %3416 = vmatprep.subr.bf16.mxu0 0
          %3417 = vmatpush2.bf16.msra.mxu0 0
          %3418 = vmatprep.subr.bf16.mxu0 0
          %3419 = vmatpush2.bf16.msra.mxu0 0
          %3420 = vmatprep.subr.bf16.mxu0 0
          %3421 = vmatpush2.bf16.msra.mxu0 0
          %3422 = vmatprep.subr.bf16.mxu0 0
          %3423 = vmatpush2.bf16.msra.mxu0 0
          %3424 = vmatprep.mubr.bf16.mxu0 0
          %3425 = vmatmul.mubr.bf16.gmra.mxu0 %v3387
          %v3426 = vpop.f32.mrf.mxu0
          %v3427 = vadd.f32 0.0, %v3426
          %v3428 = vpop.f32.mrf.mxu0
          %v3429 = vpop.f32.mrf.mxu0
          %v3430 = vpop.f32.mrf.mxu0
          %3431 = vdwg.mxu0
          %v3432 = vadd.f32 %v3297, %v3427
          %3433 = vst.msk [vmem:[%s3290] sm:$0xff] %vm2383, %v3432
          %3434 = vst.msk [vmem:[%s3265] sm:$0xff] %vm2458, %v3270
          %v3435 = vld [vmem:[%s429] sm:$0x2]
          %v3436 = vld [vmem:[%s429 + $0x2] sm:$0x2]
          %v3437 = vld [vmem:[%s429 + $0x4] sm:$0x2]
          %v3438 = vld [vmem:[%s429 + $0x6] sm:$0x2]
          %v3439 = vld [vmem:[%s429 + $0x8] sm:$0x2]
          %v3440 = vld [vmem:[%s429 + $0xa] sm:$0x2]
          %v3441 = vld [vmem:[%s429 + $0xc] sm:$0x2]
          %v3442 = vld [vmem:[%s429 + $0xe] sm:$0x2]
          %v3443 = vld [vmem:[%s436] sm:$0x2]
          %v3444 = vld [vmem:[%s436 + $0x2] sm:$0x2]
          %v3445 = vld [vmem:[%s436 + $0x4] sm:$0x2]
          %v3446 = vld [vmem:[%s436 + $0x6] sm:$0x2]
          %v3447 = vld [vmem:[%s436 + $0x8] sm:$0x2]
          %v3448 = vld [vmem:[%s436 + $0xa] sm:$0x2]
          %v3449 = vld [vmem:[%s436 + $0xc] sm:$0x2]
          %v3450 = vld [vmem:[%s436 + $0xe] sm:$0x2]
          %v3451 = vld [vmem:[%s443] sm:$0x2]
          %v3452 = vld [vmem:[%s443 + $0x2] sm:$0x2]
          %v3453 = vld [vmem:[%s443 + $0x4] sm:$0x2]
          %v3454 = vld [vmem:[%s443 + $0x6] sm:$0x2]
          %v3455 = vld [vmem:[%s443 + $0x8] sm:$0x2]
          %v3456 = vld [vmem:[%s443 + $0xa] sm:$0x2]
          %v3457 = vld [vmem:[%s443 + $0xc] sm:$0x2]
          %v3458 = vld [vmem:[%s443 + $0xe] sm:$0x2]
          %v3468 = vunpack.c.l.s4 1983009808
          %v3469 = vunpack.c.0.s8 %v3468
          %v3470 = vlaneseq
          %v3471 = vshrl.u32 %v3470, 7
          %v3472 = vsub.s32 %v3469, %v3471
          %v3473 = vrot.slane %v3435, %v3472
          %v3475 = vunpack.c.l.s4 1983009808
          %v3476 = vunpack.c.0.s8 %v3475
          %v3477 = vlaneseq
          %v3478 = vshrl.u32 %v3477, 7
          %v3479 = vsub.s32 %v3476, %v3478
          %v3480 = vrot.slane %v3436, %v3479
          %v3482 = vunpack.c.l.s4 1983009808
          %v3483 = vunpack.c.0.s8 %v3482
          %v3484 = vlaneseq
          %v3485 = vshrl.u32 %v3484, 7
          %v3486 = vsub.s32 %v3483, %v3485
          %v3487 = vrot.slane %v3437, %v3486
          %v3489 = vunpack.c.l.s4 1983009808
          %v3490 = vunpack.c.0.s8 %v3489
          %v3491 = vlaneseq
          %v3492 = vshrl.u32 %v3491, 7
          %v3493 = vsub.s32 %v3490, %v3492
          %v3494 = vrot.slane %v3438, %v3493
          %v3496 = vunpack.c.l.s4 1983009808
          %v3497 = vunpack.c.0.s8 %v3496
          %v3498 = vlaneseq
          %v3499 = vshrl.u32 %v3498, 7
          %v3500 = vsub.s32 %v3497, %v3499
          %v3501 = vrot.slane %v3439, %v3500
          %v3503 = vunpack.c.l.s4 1983009808
          %v3504 = vunpack.c.0.s8 %v3503
          %v3505 = vlaneseq
          %v3506 = vshrl.u32 %v3505, 7
          %v3507 = vsub.s32 %v3504, %v3506
          %v3508 = vrot.slane %v3440, %v3507
          %v3510 = vunpack.c.l.s4 1983009808
          %v3511 = vunpack.c.0.s8 %v3510
          %v3512 = vlaneseq
          %v3513 = vshrl.u32 %v3512, 7
          %v3514 = vsub.s32 %v3511, %v3513
          %v3515 = vrot.slane %v3441, %v3514
          %v3517 = vunpack.c.l.s4 1983009808
          %v3518 = vunpack.c.0.s8 %v3517
          %v3519 = vlaneseq
          %v3520 = vshrl.u32 %v3519, 7
          %v3521 = vsub.s32 %v3518, %v3520
          %v3522 = vrot.slane %v3442, %v3521
          %v3523 = vunpack.c.l.b16 %v3473
          %v3524 = vunpack.c.l.b16 %v3480
          %v3525 = vunpack.c.l.b16 %v3487
          %v3526 = vunpack.c.l.b16 %v3494
          %v3527 = vunpack.c.l.b16 %v3501
          %v3528 = vunpack.c.l.b16 %v3508
          %v3529 = vunpack.c.l.b16 %v3515
          %v3530 = vunpack.c.l.b16 %v3522
          %v3531 = vrot.slane %v3523, 3
          %v3532 = vrot.slane %v3524, 2
          %v3533 = vsel %vm2275, %v3532, %v3531
          %v3534 = vrot.slane %v3525, 1
          %v3535 = vsel %vm2278, %v3534, %v3533
          %v3536 = vsel %vm2281, %v3526, %v3535
          %v3537 = vrot.slane %v3527, 7
          %v3538 = vsel %vm2284, %v3537, %v3536
          %v3539 = vrot.slane %v3528, 6
          %v3540 = vsel %vm2287, %v3539, %v3538
          %v3541 = vrot.slane %v3529, 5
          %v3542 = vsel %vm2290, %v3541, %v3540
          %v3543 = vrot.slane %v3530, 4
          %v3544 = vsel %vm2293, %v3543, %v3542
          %v3545 = vpack.c.b16 %v3544, %v3544
          %v3555 = vunpack.c.l.s4 1983009808
          %v3556 = vunpack.c.0.s8 %v3555
          %v3557 = vlaneseq
          %v3558 = vshrl.u32 %v3557, 7
          %v3559 = vsub.s32 %v3556, %v3558
          %v3560 = vrot.slane %v3443, %v3559
          %v3562 = vunpack.c.l.s4 1983009808
          %v3563 = vunpack.c.0.s8 %v3562
          %v3564 = vlaneseq
          %v3565 = vshrl.u32 %v3564, 7
          %v3566 = vsub.s32 %v3563, %v3565
          %v3567 = vrot.slane %v3444, %v3566
          %v3569 = vunpack.c.l.s4 1983009808
          %v3570 = vunpack.c.0.s8 %v3569
          %v3571 = vlaneseq
          %v3572 = vshrl.u32 %v3571, 7
          %v3573 = vsub.s32 %v3570, %v3572
          %v3574 = vrot.slane %v3445, %v3573
          %v3576 = vunpack.c.l.s4 1983009808
          %v3577 = vunpack.c.0.s8 %v3576
          %v3578 = vlaneseq
          %v3579 = vshrl.u32 %v3578, 7
          %v3580 = vsub.s32 %v3577, %v3579
          %v3581 = vrot.slane %v3446, %v3580
          %v3583 = vunpack.c.l.s4 1983009808
          %v3584 = vunpack.c.0.s8 %v3583
          %v3585 = vlaneseq
          %v3586 = vshrl.u32 %v3585, 7
          %v3587 = vsub.s32 %v3584, %v3586
          %v3588 = vrot.slane %v3447, %v3587
          %v3590 = vunpack.c.l.s4 1983009808
          %v3591 = vunpack.c.0.s8 %v3590
          %v3592 = vlaneseq
          %v3593 = vshrl.u32 %v3592, 7
          %v3594 = vsub.s32 %v3591, %v3593
          %v3595 = vrot.slane %v3448, %v3594
          %v3597 = vunpack.c.l.s4 1983009808
          %v3598 = vunpack.c.0.s8 %v3597
          %v3599 = vlaneseq
          %v3600 = vshrl.u32 %v3599, 7
          %v3601 = vsub.s32 %v3598, %v3600
          %v3602 = vrot.slane %v3449, %v3601
          %v3604 = vunpack.c.l.s4 1983009808
          %v3605 = vunpack.c.0.s8 %v3604
          %v3606 = vlaneseq
          %v3607 = vshrl.u32 %v3606, 7
          %v3608 = vsub.s32 %v3605, %v3607
          %v3609 = vrot.slane %v3450, %v3608
          %v3610 = vunpack.c.l.b16 %v3560
          %v3611 = vunpack.c.l.b16 %v3567
          %v3612 = vunpack.c.l.b16 %v3574
          %v3613 = vunpack.c.l.b16 %v3581
          %v3614 = vunpack.c.l.b16 %v3588
          %v3615 = vunpack.c.l.b16 %v3595
          %v3616 = vunpack.c.l.b16 %v3602
          %v3617 = vunpack.c.l.b16 %v3609
          %v3618 = vrot.slane %v3610, 3
          %v3619 = vrot.slane %v3611, 2
          %v3620 = vsel %vm2275, %v3619, %v3618
          %v3621 = vrot.slane %v3612, 1
          %v3622 = vsel %vm2278, %v3621, %v3620
          %v3623 = vsel %vm2281, %v3613, %v3622
          %v3624 = vrot.slane %v3614, 7
          %v3625 = vsel %vm2284, %v3624, %v3623
          %v3626 = vrot.slane %v3615, 6
          %v3627 = vsel %vm2287, %v3626, %v3625
          %v3628 = vrot.slane %v3616, 5
          %v3629 = vsel %vm2290, %v3628, %v3627
          %v3630 = vrot.slane %v3617, 4
          %v3631 = vsel %vm2293, %v3630, %v3629
          %v3632 = vpack.c.b16 %v3631, %v3631
          %v3634 = vsel %vm2383, %v3545, 0
          %v3637 = vsel %vm2383, %v3632, 0
          %3639 = vmatprep.subr.bf16.mxu0 0
          %3640 = vmatpush1.bf16.xpose.msra.mxu0 0
          %3641 = vmatprep.subr.bf16.mxu0 0
          %3642 = vmatpush1.bf16.xpose.msra.mxu0 0
          %3643 = vmatprep.subr.bf16.mxu0 0
          %3644 = vmatpush1.bf16.xpose.msra.mxu0 0
          %3645 = vmatprep.subr.bf16.mxu0 0
          %3646 = vmatpush1.bf16.xpose.msra.mxu0 0
          %3647 = vmatprep.subr.bf16.mxu0 0
          %3648 = vmatpush1.bf16.xpose.msra.mxu0 0
          %3649 = vmatprep.subr.bf16.mxu0 0
          %3650 = vmatpush1.bf16.xpose.msra.mxu0 0
          %3651 = vmatprep.subr.bf16.mxu0 0
          %3652 = vmatpush1.bf16.xpose.msra.mxu0 0
          %3653 = vmatprep.subr.bf16.mxu0 0
          %3654 = vmatpush1.bf16.xpose.msra.mxu0 %v3637
          %3655 = vmatprep.subr.bf16.mxu0 0
          %3656 = vmatpush2.bf16.xpose.msra.mxu0 0
          %3657 = vmatprep.subr.bf16.mxu0 0
          %3658 = vmatpush2.bf16.xpose.msra.mxu0 0
          %3659 = vmatprep.subr.bf16.mxu0 0
          %3660 = vmatpush2.bf16.xpose.msra.mxu0 0
          %3661 = vmatprep.subr.bf16.mxu0 0
          %3662 = vmatpush2.bf16.xpose.msra.mxu0 0
          %3663 = vmatprep.subr.bf16.mxu0 0
          %3664 = vmatpush2.bf16.xpose.msra.mxu0 0
          %3665 = vmatprep.subr.bf16.mxu0 0
          %3666 = vmatpush2.bf16.xpose.msra.mxu0 0
          %3667 = vmatprep.subr.bf16.mxu0 0
          %3668 = vmatpush2.bf16.xpose.msra.mxu0 0
          %3669 = vmatprep.subr.bf16.mxu0 0
          %3670 = vmatpush2.bf16.xpose.msra.mxu0 0
          %3671 = vmatprep.mubr.bf16.mxu0 0
          %3672 = vmatmul.mubr.bf16.gmra.mxu0 %v3634
          %v3673 = vpop.f32.mrf.mxu0
          %v3674 = vadd.f32 0.0, %v3673
          %v3675 = vpop.f32.mrf.mxu0
          %v3676 = vpop.f32.mrf.mxu0
          %v3677 = vpop.f32.mrf.mxu0
          %3678 = vdwg.mxu0
          %v3679 = vsel %vm2434, %v3674, -inf
          %s3680 = scalar_lea.vmem [#allocation2], 24
          %v3681 = vld [vmem:[%s3680] sm:$0xff]
          %v3682 = vsel %vm2383, %v3679, -inf
          %3683 = vmax.xlane.f32.xlu0 %v3682
          %v3684 = vpop.xlane.xlu0 %3683
          %v3685 = vmax.f32 %v3681, %v3684
          %v3686 = vsub.f32 %v3681, %v3685
          %v3687 = vmul.f32 %v3686, 1.442695
          %v3688 = vpow.pop %v3687
          %3690 = vset.pattern.permute.xlu0 0
          %3691 = vperm.xlu0 %3690, %v3685
          %v3692 = vpop.permute.xlu0 %3691
          %v3694 = vsub.f32 %v3679, %v3692
          %v3695 = vmul.f32 %v3694, 1.442695
          %v3696 = vpow.pop %v3695
          %s3697 = scalar_lea.vmem [#allocation3], 24
          %v3698 = vld [vmem:[%s3697] sm:$0xff]
          %v3699 = vmul.f32 %v3688, %v3698
          %v3700 = vsel %vm2383, %v3696, 0.0
          %3701 = vadd.xlane.f32.xlu0 %v3700
          %v3702 = vpop.xlane.xlu0 %3701
          %v3703 = vadd.f32 %v3699, %v3702
          %3704 = vst.msk [vmem:[%s3697] sm:$0xff] %vm2458, %v3703
          %s3705 = scalar_lea.vmem [#allocation4], 24
          %v3706 = vld [vmem:[%s3705] sm:$0xff]
          %3708 = vset.pattern.permute.xlu0 0
          %3709 = vperm.xlu0 %3708, %v3688
          %v3710 = vpop.permute.xlu0 %3709
          %v3712 = vmul.f32 %v3710, %v3706
          %v3713 = vpack.c.bf16 %v3696, %v3696
          %v3723 = vunpack.c.l.s4 1983009808
          %v3724 = vunpack.c.0.s8 %v3723
          %v3725 = vlaneseq
          %v3726 = vshrl.u32 %v3725, 7
          %v3727 = vsub.s32 %v3724, %v3726
          %v3728 = vrot.slane %v3451, %v3727
          %v3730 = vunpack.c.l.s4 1983009808
          %v3731 = vunpack.c.0.s8 %v3730
          %v3732 = vlaneseq
          %v3733 = vshrl.u32 %v3732, 7
          %v3734 = vsub.s32 %v3731, %v3733
          %v3735 = vrot.slane %v3452, %v3734
          %v3737 = vunpack.c.l.s4 1983009808
          %v3738 = vunpack.c.0.s8 %v3737
          %v3739 = vlaneseq
          %v3740 = vshrl.u32 %v3739, 7
          %v3741 = vsub.s32 %v3738, %v3740
          %v3742 = vrot.slane %v3453, %v3741
          %v3744 = vunpack.c.l.s4 1983009808
          %v3745 = vunpack.c.0.s8 %v3744
          %v3746 = vlaneseq
          %v3747 = vshrl.u32 %v3746, 7
          %v3748 = vsub.s32 %v3745, %v3747
          %v3749 = vrot.slane %v3454, %v3748
          %v3751 = vunpack.c.l.s4 1983009808
          %v3752 = vunpack.c.0.s8 %v3751
          %v3753 = vlaneseq
          %v3754 = vshrl.u32 %v3753, 7
          %v3755 = vsub.s32 %v3752, %v3754
          %v3756 = vrot.slane %v3455, %v3755
          %v3758 = vunpack.c.l.s4 1983009808
          %v3759 = vunpack.c.0.s8 %v3758
          %v3760 = vlaneseq
          %v3761 = vshrl.u32 %v3760, 7
          %v3762 = vsub.s32 %v3759, %v3761
          %v3763 = vrot.slane %v3456, %v3762
          %v3765 = vunpack.c.l.s4 1983009808
          %v3766 = vunpack.c.0.s8 %v3765
          %v3767 = vlaneseq
          %v3768 = vshrl.u32 %v3767, 7
          %v3769 = vsub.s32 %v3766, %v3768
          %v3770 = vrot.slane %v3457, %v3769
          %v3772 = vunpack.c.l.s4 1983009808
          %v3773 = vunpack.c.0.s8 %v3772
          %v3774 = vlaneseq
          %v3775 = vshrl.u32 %v3774, 7
          %v3776 = vsub.s32 %v3773, %v3775
          %v3777 = vrot.slane %v3458, %v3776
          %v3778 = vunpack.c.l.b16 %v3728
          %v3779 = vunpack.c.l.b16 %v3735
          %v3780 = vunpack.c.l.b16 %v3742
          %v3781 = vunpack.c.l.b16 %v3749
          %v3782 = vunpack.c.l.b16 %v3756
          %v3783 = vunpack.c.l.b16 %v3763
          %v3784 = vunpack.c.l.b16 %v3770
          %v3785 = vunpack.c.l.b16 %v3777
          %v3786 = vrot.slane %v3778, 3
          %v3787 = vrot.slane %v3779, 2
          %v3788 = vsel %vm2275, %v3787, %v3786
          %v3789 = vrot.slane %v3780, 1
          %v3790 = vsel %vm2278, %v3789, %v3788
          %v3791 = vsel %vm2281, %v3781, %v3790
          %v3792 = vrot.slane %v3782, 7
          %v3793 = vsel %vm2284, %v3792, %v3791
          %v3794 = vrot.slane %v3783, 6
          %v3795 = vsel %vm2287, %v3794, %v3793
          %v3796 = vrot.slane %v3784, 5
          %v3797 = vsel %vm2290, %v3796, %v3795
          %v3798 = vrot.slane %v3785, 4
          %v3799 = vsel %vm2293, %v3798, %v3797
          %v3800 = vpack.c.b16 %v3799, %v3799
          %v3802 = vsel %vm2383, %v3713, 0
          %v3805 = vsel %vm2558, %v3800, 0
          %3807 = vmatprep.subr.bf16.mxu0 0
          %3808 = vmatpush1.bf16.msra.mxu0 0
          %3809 = vmatprep.subr.bf16.mxu0 0
          %3810 = vmatpush1.bf16.msra.mxu0 0
          %3811 = vmatprep.subr.bf16.mxu0 0
          %3812 = vmatpush1.bf16.msra.mxu0 0
          %3813 = vmatprep.subr.bf16.mxu0 0
          %3814 = vmatpush1.bf16.msra.mxu0 0
          %3815 = vmatprep.subr.bf16.mxu0 0
          %3816 = vmatpush1.bf16.msra.mxu0 0
          %3817 = vmatprep.subr.bf16.mxu0 0
          %3818 = vmatpush1.bf16.msra.mxu0 0
          %3819 = vmatprep.subr.bf16.mxu0 0
          %3820 = vmatpush1.bf16.msra.mxu0 0
          %3821 = vmatprep.subr.bf16.mxu0 0
          %3822 = vmatpush1.bf16.msra.mxu0 %v3805
          %3823 = vmatprep.subr.bf16.mxu0 0
          %3824 = vmatpush2.bf16.msra.mxu0 0
          %3825 = vmatprep.subr.bf16.mxu0 0
          %3826 = vmatpush2.bf16.msra.mxu0 0
          %3827 = vmatprep.subr.bf16.mxu0 0
          %3828 = vmatpush2.bf16.msra.mxu0 0
          %3829 = vmatprep.subr.bf16.mxu0 0
          %3830 = vmatpush2.bf16.msra.mxu0 0
          %3831 = vmatprep.subr.bf16.mxu0 0
          %3832 = vmatpush2.bf16.msra.mxu0 0
          %3833 = vmatprep.subr.bf16.mxu0 0
          %3834 = vmatpush2.bf16.msra.mxu0 0
          %3835 = vmatprep.subr.bf16.mxu0 0
          %3836 = vmatpush2.bf16.msra.mxu0 0
          %3837 = vmatprep.subr.bf16.mxu0 0
          %3838 = vmatpush2.bf16.msra.mxu0 0
          %3839 = vmatprep.mubr.bf16.mxu0 0
          %3840 = vmatmul.mubr.bf16.gmra.mxu0 %v3802
          %v3841 = vpop.f32.mrf.mxu0
          %v3842 = vadd.f32 0.0, %v3841
          %v3843 = vpop.f32.mrf.mxu0
          %v3844 = vpop.f32.mrf.mxu0
          %v3845 = vpop.f32.mrf.mxu0
          %3846 = vdwg.mxu0
          %v3847 = vadd.f32 %v3712, %v3842
          %3848 = vst.msk [vmem:[%s3705] sm:$0xff] %vm2383, %v3847
          %3849 = vst.msk [vmem:[%s3680] sm:$0xff] %vm2458, %v3685
          %v3850 = vld [vmem:[#allocation3] sm:$0xff]
          %v3851 = vld [vmem:[#allocation3 + $0x8] sm:$0xff]
          %v3852 = vld [vmem:[#allocation3 + $0x10] sm:$0xff]
          %v3853 = vld [vmem:[#allocation3 + $0x18] sm:$0xff]
          %v3854 = vrcp.pop %v3850
          %v3855 = vrcp.pop %v3851
          %v3856 = vrcp.pop %v3852
          %v3857 = vrcp.pop %v3853
          %v3858 = vld [vmem:[#allocation4] sm:$0xff]
          %v3859 = vld [vmem:[#allocation4 + $0x8] sm:$0xff]
          %v3860 = vld [vmem:[#allocation4 + $0x10] sm:$0xff]
          %v3861 = vld [vmem:[#allocation4 + $0x18] sm:$0xff]
          %3863 = vset.pattern.permute.xlu0 0
          %3864 = vperm.xlu0 %3863, %v3854
          %v3865 = vpop.permute.xlu0 %3864
          %3868 = vset.pattern.permute.xlu0 0
          %3869 = vperm.xlu0 %3868, %v3855
          %v3870 = vpop.permute.xlu0 %3869
          %3873 = vset.pattern.permute.xlu0 0
          %3874 = vperm.xlu0 %3873, %v3856
          %v3875 = vpop.permute.xlu0 %3874
          %3878 = vset.pattern.permute.xlu0 0
          %3879 = vperm.xlu0 %3878, %v3857
          %v3880 = vpop.permute.xlu0 %3879
          %v3882 = vmul.f32 %v3858, %v3865
          %v3883 = vmul.f32 %v3859, %v3870
          %v3884 = vmul.f32 %v3860, %v3875
          %v3885 = vmul.f32 %v3861, %v3880
          %v3886 = vpack.c.bf16 %v3882, %v3882
          %vm3887 = vcmask 60416
          %3888 = vst.msk [vmem:[%s487] sm:$0xf] %vm3887, %v3886
          %v3889 = vpack.c.bf16 %v3883, %v3883
          %v3891 = vunpack.c.l.b16 %v3889
          %v3892 = vpack.c.b16 %v3891, %v3891
          %3893 = vrot.lane.b32.xlu0 %v3892, 8
          %v3894 = vpop.permute.xlu0 %3893
          %vm3896 = vcmask 126016
          %3897 = vst.msk [vmem:[%s487] sm:$0xf] %vm3896, %v3894
          %v3898 = vpack.c.bf16 %v3884, %v3884
          %v3900 = vunpack.c.l.b16 %v3898
          %v3901 = vpack.c.b16 %v3900, %v3900
          %3902 = vrot.lane.b32.xlu0 %v3901, 16
          %v3903 = vpop.permute.xlu0 %3902
          %vm3905 = vcmask 191616
          %3906 = vst.msk [vmem:[%s487] sm:$0xf] %vm3905, %v3903
          %v3907 = vpack.c.bf16 %v3885, %v3885
          %v3909 = vunpack.c.l.b16 %v3907
          %v3910 = vpack.c.b16 %v3909, %v3909
          %3911 = vrot.lane.b32.xlu0 %v3910, 24
          %v3912 = vpop.permute.xlu0 %3911
          %vm3914 = vcmask 257216
          %3915 = vst.msk [vmem:[%s487] sm:$0xf] %vm3914, %v3912
        $region167: #{self_attention_pallas.4} parent=142 // pred_fallthru
          _
        %p3916 = scmp.lt.s32.totalorder %s19, 1
        %s3917 = scalar_select %p3916, %s19, 1
        %p3918 = scmp.lt.s32.totalorder %s20, 0
        %s3919 = scalar_select %p3918, %s20, 0
        %s3920 = sadd.s32 %s3919, %s3917
        %s3921 = smul.addr %s3920, 4
        %s3922 = scalar_lea.vmem %s3, %s3921
        // Predicated region
        $region168: #{self_attention_pallas.4} parent=142 // pred_check
          %p3923 = pneg %p145
        $region169: #{self_attention_pallas.4} parent=142 // pred_check_branch
          %3925 = sbr.rel (%p3923) target = $region171
        $region170: #{self_attention_pallas.4} parent=142 // pred_region
          _
        $region171: #{self_attention_pallas.4} parent=142 // pred_fallthru
          _
      $region143: #{self_attention_pallas.4} parent=5 // pred_fallthru
        _
      %p3926 = scmp.le.s32.totalorder 2, %s9
      // Predicated region
      $region172: #{self_attention_pallas.4} parent=5 // pred_check
        %p3927 = pneg %p3926
      $region173: #{self_attention_pallas.4} parent=5 // pred_check_branch
        %3929 = sbr.rel (%p3927) target = $region175
      $region174: #{self_attention_pallas.4} parent=5 // pred_region
        %s3930 = ssub.s32 %s9, 2
        // Predicated region
        $region176: #{self_attention_pallas.4} parent=174 // pred_check
          %p3931 = pneg %p151
        $region177: #{self_attention_pallas.4} parent=174 // pred_check_branch
          %3933 = sbr.rel (%p3931) target = $region179
        $region178: #{self_attention_pallas.4} parent=174 // pred_region
          %p3934 = scmp.lt.s32.totalorder %s22, 1
          %s3935 = scalar_select %p3934, %s22, 1
          %p3936 = scmp.lt.s32.totalorder %s23, 0
          %s3937 = scalar_select %p3936, %s23, 0
          %s3938 = sadd.s32 %s3937, %s3935
          %s3939 = smul.addr %s3938, 4
          %s3940 = scalar_lea.vmem %s3, %s3939
        $region179: #{self_attention_pallas.4} parent=174 // pred_fallthru
          _
      $region175: #{self_attention_pallas.4} parent=5 // pred_fallthru
        _
    $region6: #{self_attention_pallas.4} parent=1 // loop_footer
      %s13 = sadd.s32 1, %s9
    $region7: #{self_attention_pallas.4} parent=1 // loop_footer_branch
      %8 = sbr.rel target = $region3
    $region8: #{self_attention_pallas.4} parent=1 // loop_exit
      _

</llo_original>
